<compile_context>
chip_gen: v7x
topology: tpu7x:2x2x1
jax: 0.10.0
libtpu: 0.0.40
codegen_flags: <defaults>
</compile_context>

<pallas_src>
import jax
import jax.numpy as jnp
from jax import lax
from jax.experimental import pallas as pl
from jax.experimental.pallas import tpu as pltpu


def _round_up(x, m):
    return ((x + m - 1) // m) * m


def _vmem_limit(resident_bytes):
    # 2x headroom for Mosaic internal scratch / double-buffering; floor at
    # 16 MiB, cap below v7x's 64 MiB physical VMEM.
    return int(min(max(2 * resident_bytes, 16 * 1024 * 1024), 60 * 1024 * 1024))


# ----------------------------------------------------------------------------
# Kernel 1: hoisted input projection + serial LSTM recurrence
# ----------------------------------------------------------------------------
def lstm_recurrence_kernel(x_ref, w_ih_ref, w_hh_ref, b_ref, hs_ref,
                           gx_scr, h_scr, c_scr):
    # x_ref:    [T*Bp, E]    bf16, time-major flattened LSTM input
    # w_ih_ref: [E, 4*Hp]    bf16, each gate padded to its own 128-lane block
    # w_hh_ref: [Hp, 4*Hp]   bf16 (rows padded too)
    # b_ref:    [1, 4*Hp]    f32, bias_ih + bias_hh, gate-padded
    # hs_ref:   [T, Bp, Hp]  bf16 output: per-step hidden states (fc operand)
    # gx_scr:   [T*Bp, 4*Hp] f32 hoisted input-side pre-activations
    # h_scr, c_scr: [Bp, Hp] f32 recurrent state
    Bp, Hp = h_scr.shape
    T = hs_ref.shape[0]

    # ---- Phase 1: hoisted input projection + bias (one big MXU matmul). ----
    gx_scr[...] = (jnp.dot(x_ref[...], w_ih_ref[...],
                           preferred_element_type=jnp.float32)
                   + b_ref[...])

    h_scr[...] = jnp.zeros_like(h_scr)
    c_scr[...] = jnp.zeros_like(c_scr)

    # ---- Phase 2: serial recurrence: only h @ W_hh + gate elementwise. ----
    # T is small & static -> fully unrolled, static (sublane-aligned) slices.
    for t in range(T):
        r0 = t * Bp
        gates = gx_scr[r0:r0 + Bp, :] + jnp.dot(
            h_scr[...].astype(w_hh_ref.dtype), w_hh_ref[...],
            preferred_element_type=jnp.float32)            # [Bp, 4*Hp] f32

        # PyTorch LSTM gate order: input, forget, cell(g), output.
        i_g = jax.nn.sigmoid(gates[:, 0 * Hp:1 * Hp])
        f_g = jax.nn.sigmoid(gates[:, 1 * Hp:2 * Hp])
        g_g = jnp.tanh(gates[:, 2 * Hp:3 * Hp])
        o_g = jax.nn.sigmoid(gates[:, 3 * Hp:4 * Hp])

        c_new = f_g * c_scr[...] + i_g * g_g
        h_new = o_g * jnp.tanh(c_new)

        h_scr[...] = h_new
        c_scr[...] = c_new
        hs_ref[t] = h_new.astype(hs_ref.dtype)             # [Bp, Hp] bf16


# ----------------------------------------------------------------------------
# Kernel 2: fc projection, tiled over (V tiles, T), batch-major output blocks
# ----------------------------------------------------------------------------
def fc_kernel(hs_ref, w_fc_ref, b_fc_ref, out_ref):
    # hs_ref:   [1, Bp, Hp] bf16   (hidden states of time-step t)
    # w_fc_ref: [Hp, TN]    bf16   (V-tile j of fc weight)
    # b_fc_ref: [1, TN]     f32
    # out_ref:  [Bp, TN]    f32    (lands at columns t*Vp + j*TN of [Bp, T*Vp])
    out_ref[...] = (jnp.dot(hs_ref[0], w_fc_ref[...],
                            preferred_element_type=jnp.float32)
                    + b_fc_ref[...])


# ----------------------------------------------------------------------------
# Wrapper (plain-JAX glue + two pallas_calls)
# ----------------------------------------------------------------------------
def decoder_rnn_forward(features, captions, params, *, matmul_dtype=jnp.bfloat16):
    """features: [B, E] f32, captions: [B, Tc] int32 -> logits [B, Tc, V] f32."""
    emb_table = params["embedding"]          # [V, E]
    w_ih = params["w_ih"]                    # [4H, E]
    w_hh = params["w_hh"]                    # [4H, H]
    b_ih = params["b_ih"]                    # [4H]
    b_hh = params["b_hh"]                    # [4H]
    w_fc = params["w_fc"]                    # [V, H]
    b_fc = params["b_fc"]                    # [V]

    E = emb_table.shape[1]
    H = w_hh.shape[1]
    V = w_fc.shape[0]
    Hp = _round_up(H, 128)                   # per-gate 128-lane padding
    Vp = _round_up(V, 128)                   # lane-dense output tiles

    # captions[:, :-1] -> embed -> prepend image features along time axis.
    cap = captions[:, :-1]
    emb = jnp.take(emb_table, cap, axis=0)                     # [B, Tc-1, E]
    x = jnp.concatenate([features[:, None, :], emb], axis=1)   # [B, T, E]
    B, T, _ = x.shape
    Bp = _round_up(B, 8)                     # sublane-aligned per-step slabs

    # Time-major, batch padded to Bp, folded into one [T*Bp, E] bf16 operand.
    x_p = jnp.pad(x.astype(jnp.float32), ((0, Bp - B), (0, 0), (0, 0)))
    x_flat = jnp.transpose(x_p, (1, 0, 2)).reshape(T * Bp, E).astype(matmul_dtype)

    # Pad each gate block (i,f,g,o) to Hp lanes with exact zeros (see header).
    def pad_gate_cols(w_t):      # [rows, 4H] -> [rows, 4*Hp]
        r = w_t.shape[0]
        return jnp.pad(w_t.reshape(r, 4, H),
                       ((0, 0), (0, 0), (0, Hp - H))).reshape(r, 4 * Hp)

    w_ih_p = pad_gate_cols(w_ih.T.astype(jnp.float32)).astype(matmul_dtype)
    w_hh_p = jnp.pad(pad_gate_cols(w_hh.T.astype(jnp.float32)),
                     ((0, Hp - H), (0, 0))).astype(matmul_dtype)     # [Hp, 4Hp]
    b_p = jnp.pad((b_ih + b_hh).astype(jnp.float32).reshape(4, H),
                  ((0, 0), (0, Hp - H))).reshape(1, 4 * Hp)          # [1, 4Hp] f32
    w_fc_p = jnp.pad(w_fc.T.astype(jnp.float32),
                     ((0, Hp - H), (0, Vp - V))).astype(matmul_dtype)  # [Hp, Vp]
    b_fc_p = jnp.pad(b_fc.astype(jnp.float32), (0, Vp - V)).reshape(1, Vp)

    mm_bytes = jnp.dtype(matmul_dtype).itemsize

    # -------- Kernel 1: serial LSTM recurrence (single TC, no grid). --------
    k1_resident = (x_flat.size * mm_bytes
                   + w_ih_p.size * mm_bytes + w_hh_p.size * mm_bytes
                   + b_p.size * 4
                   + T * Bp * Hp * mm_bytes        # hs output
                   + T * Bp * 4 * Hp * 4           # gx scratch (f32 pre-acts)
                   + 2 * Bp * Hp * 4)              # h / c state
    hs = pl.pallas_call(
        lstm_recurrence_kernel,
        out_shape=jax.ShapeDtypeStruct((T, Bp, Hp), matmul_dtype),
        in_specs=[pl.BlockSpec(memory_space=pltpu.MemorySpace.VMEM)] * 4,
        out_specs=pl.BlockSpec(memory_space=pltpu.MemorySpace.VMEM),
        scratch_shapes=[pltpu.VMEM((T * Bp, 4 * Hp), jnp.float32),  # gx slab
                        pltpu.VMEM((Bp, Hp), jnp.float32),          # h state
                        pltpu.VMEM((Bp, Hp), jnp.float32)],         # c state
        compiler_params=pltpu.CompilerParams(
            vmem_limit_bytes=_vmem_limit(k1_resident)),
    )(x_flat, w_ih_p, w_hh_p, b_p)

    # -------- Kernel 2: fc projection, grid over (V tiles, T). --------
    TN = next(t for t in (512, 256, 128) if Vp % t == 0)
    nV = Vp // TN
    k2_resident = 2 * (Bp * Hp * mm_bytes          # hs tile (double-buffered)
                       + Hp * TN * mm_bytes        # w_fc tile
                       + TN * 4                    # b_fc tile
                       + Bp * TN * 4)              # out tile
    out_flat = pl.pallas_call(
        fc_kernel,
        out_shape=jax.ShapeDtypeStruct((Bp, T * Vp), jnp.float32),
        grid_spec=pltpu.PrefetchScalarGridSpec(
            num_scalar_prefetch=0,
            grid=(nV, T),        # t innermost -> w_fc tile stays resident over T
            in_specs=[pl.BlockSpec((1, Bp, Hp), lambda j, t: (t, 0, 0)),
                      pl.BlockSpec((Hp, TN), lambda j, t: (0, j)),
                      pl.BlockSpec((1, TN), lambda j, t: (0, j))],
            # Block (t, j) lands at columns [t*Vp + j*TN, ...) of the
            # batch-major [Bp, T*Vp] slab -> wrapper reshape is free.
            out_specs=pl.BlockSpec((Bp, TN), lambda j, t: (0, t * nV + j))),
        compiler_params=pltpu.CompilerParams(
            dimension_semantics=("parallel", "parallel"),
            vmem_limit_bytes=_vmem_limit(k2_resident)),
    )(hs, w_fc_p, b_fc_p)

    # [Bp, T*Vp] -> [B, T, V]: pure reshape + slice (no transpose, no copy of
    # the logits slab beyond what XLA needs for the slice).
    return out_flat.reshape(Bp, T, Vp)[:B, :, :V]


# ----------------------------------------------------------------------------
# Pure-JAX reference (f32 everywhere, for correctness check)
# ----------------------------------------------------------------------------
def decoder_rnn_reference(features, captions, params):
    emb_table = params["embedding"]
    w_ih, w_hh = params["w_ih"], params["w_hh"]
    b_ih, b_hh = params["b_ih"], params["b_hh"]
    w_fc, b_fc = params["w_fc"], params["b_fc"]

    cap = captions[:, :-1]
    emb = jnp.take(emb_table, cap, axis=0)
    x = jnp.concatenate([features[:, None, :], emb], axis=1)   # [B, T, E]
    B, T, E = x.shape
    H = w_hh.shape[1]

    def cell(carry, x_t):
        h, c = carry
        gates = x_t @ w_ih.T + b_ih + h @ w_hh.T + b_hh
        i_g = jax.nn.sigmoid(gates[:, 0 * H:1 * H])
        f_g = jax.nn.sigmoid(gates[:, 1 * H:2 * H])
        g_g = jnp.tanh(gates[:, 2 * H:3 * H])
        o_g = jax.nn.sigmoid(gates[:, 3 * H:4 * H])
        c_new = f_g * c + i_g * g_g
        h_new = o_g * jnp.tanh(c_new)
        return (h_new, c_new), h_new

    h0 = jnp.zeros((B, H), jnp.float32)
    c0 = jnp.zeros((B, H), jnp.float32)
    _, hs = lax.scan(cell, (h0, c0), jnp.transpose(x, (1, 0, 2)))  # [T, B, H]
    hs = jnp.transpose(hs, (1, 0, 2))                              # [B, T, H]
    return hs @ w_fc.T + b_fc


# ----------------------------------------------------------------------------
# Main
# ----------------------------------------------------------------------------
if __name__ == "__main__":
    # Small, module-consistent shapes.
    batch = 2
    embed_size = 32
    hidden_size = 32
    vocab_size = 64
    caption_len = 9          # forward drops last token -> seq len T = 9

    key = jax.random.PRNGKey(0)
    ks = jax.random.split(key, 9)
    bound = 1.0 / jnp.sqrt(hidden_size)

    params = {
        "embedding": jax.random.normal(ks[0], (vocab_size, embed_size), jnp.float32),
        "w_ih": jax.random.uniform(ks[1], (4 * hidden_size, embed_size),
                                   jnp.float32, -bound, bound),
        "w_hh": jax.random.uniform(ks[2], (4 * hidden_size, hidden_size),
                                   jnp.float32, -bound, bound),
        "b_ih": jax.random.uniform(ks[3], (4 * hidden_size,),
                                   jnp.float32, -bound, bound),
        "b_hh": jax.random.uniform(ks[4], (4 * hidden_size,),
                                   jnp.float32, -bound, bound),
        "w_fc": jax.random.uniform(ks[5], (vocab_size, hidden_size),
                                   jnp.float32, -bound, bound),
        "b_fc": jax.random.uniform(ks[6], (vocab_size,),
                                   jnp.float32, -bound, bound),
    }

    features = jax.random.normal(ks[7], (batch, embed_size), jnp.float32)
    captions = jax.random.randint(ks[8], (batch, caption_len), 0, vocab_size,
                                  dtype=jnp.int32)

    out = decoder_rnn_forward(features, captions, params)
    out = jax.block_until_ready(out)

    ref = jax.block_until_ready(decoder_rnn_reference(features, captions, params))
    assert out.shape == (batch, caption_len, vocab_size)
    # bf16 MXU operands (f32 accumulation / gate math) -> loosened tolerance
    # vs. the all-f32 reference.
    assert jnp.allclose(out, ref, atol=5e-2, rtol=5e-2), (
        float(jnp.max(jnp.abs(out - ref))))

    print("KERNEL_OK")
</pallas_src>

<mosaic_0001>
module attributes {stable_mosaic.version = 11 : i64} {
  func.func @lstm_recurrence_kernel(%arg0: memref<72x32xbf16, #tpu.memory_space<vmem>>, %arg1: memref<32x512xbf16, #tpu.memory_space<vmem>>, %arg2: memref<128x512xbf16, #tpu.memory_space<vmem>>, %arg3: memref<1x512xf32, #tpu.memory_space<vmem>>, %arg4: memref<9x8x128xbf16, #tpu.memory_space<vmem>>, %arg5: memref<72x512xf32, #tpu.memory_space<vmem>>, %arg6: memref<8x128xf32, #tpu.memory_space<vmem>>, %arg7: memref<8x128xf32, #tpu.memory_space<vmem>>) attributes {dimension_semantics = [], scalar_prefetch = 0 : i64, scratch_operands = 3 : i64, tpu.core_type = #tpu.core_type<tc>} {
    %c0 = arith.constant 0 : index
    %c0_0 = arith.constant 0 : index
    %0 = vector.load %arg0[%c0, %c0_0] : memref<72x32xbf16, #tpu.memory_space<vmem>>, vector<72x32xbf16>
    %c0_1 = arith.constant 0 : index
    %c0_2 = arith.constant 0 : index
    %1 = vector.load %arg1[%c0_1, %c0_2] : memref<32x512xbf16, #tpu.memory_space<vmem>>, vector<32x512xbf16>
    %cst = arith.constant dense<0.000000e+00> : vector<72x512xf32>
    %2 = tpu.matmul %0, %1, %cst {dimension_numbers = #tpu.dot_dimension_numbers<[1], [0], [0], [1], [0, 0, 1, 1], [], []>} : vector<72x32xbf16>, vector<32x512xbf16>, vector<72x512xf32> -> vector<72x512xf32>
    %c0_3 = arith.constant 0 : index
    %c0_4 = arith.constant 0 : index
    %3 = vector.load %arg3[%c0_3, %c0_4] : memref<1x512xf32, #tpu.memory_space<vmem>>, vector<1x512xf32>
    %4 = vector.broadcast %3 : vector<1x512xf32> to vector<72x512xf32>
    %5 = arith.addf %2, %4 : vector<72x512xf32>
    %c0_5 = arith.constant 0 : index
    %c0_6 = arith.constant 0 : index
    %6 = vector.load %arg5[%c0_5, %c0_6] : memref<72x512xf32, #tpu.memory_space<vmem>>, vector<72x512xf32>
    tpu.vector_store %arg5[%c0_5, %c0_6], %5 {strides = array<i32>} : memref<72x512xf32, #tpu.memory_space<vmem>>, vector<72x512xf32>,
    %cst_7 = arith.constant 0.000000e+00 : f32
    %7 = vector.broadcast %cst_7 : f32 to vector<8x128xf32>
    %c0_8 = arith.constant 0 : index
    %c0_9 = arith.constant 0 : index
    %8 = vector.load %arg6[%c0_8, %c0_9] : memref<8x128xf32, #tpu.memory_space<vmem>>, vector<8x128xf32>
    tpu.vector_store %arg6[%c0_8, %c0_9], %7 {strides = array<i32>} : memref<8x128xf32, #tpu.memory_space<vmem>>, vector<8x128xf32>,
    %cst_10 = arith.constant 0.000000e+00 : f32
    %9 = vector.broadcast %cst_10 : f32 to vector<8x128xf32>
    %c0_11 = arith.constant 0 : index
    %c0_12 = arith.constant 0 : index
    %10 = vector.load %arg7[%c0_11, %c0_12] : memref<8x128xf32, #tpu.memory_space<vmem>>, vector<8x128xf32>
    tpu.vector_store %arg7[%c0_11, %c0_12], %9 {strides = array<i32>} : memref<8x128xf32, #tpu.memory_space<vmem>>, vector<8x128xf32>,
    %c0_13 = arith.constant 0 : index
    %c0_14 = arith.constant 0 : index
    %11 = vector.load %arg5[%c0_13, %c0_14] : memref<72x512xf32, #tpu.memory_space<vmem>>, vector<8x512xf32>
    %c0_15 = arith.constant 0 : index
    %c0_16 = arith.constant 0 : index
    %12 = vector.load %arg6[%c0_15, %c0_16] : memref<8x128xf32, #tpu.memory_space<vmem>>, vector<8x128xf32>
    %13 = arith.truncf %12 : vector<8x128xf32> to vector<8x128xbf16>
    %c0_17 = arith.constant 0 : index
    %c0_18 = arith.constant 0 : index
    %14 = vector.load %arg2[%c0_17, %c0_18] : memref<128x512xbf16, #tpu.memory_space<vmem>>, vector<128x512xbf16>
    %cst_19 = arith.constant dense<0.000000e+00> : vector<8x512xf32>
    %15 = tpu.matmul %13, %14, %cst_19 {dimension_numbers = #tpu.dot_dimension_numbers<[1], [0], [0], [1], [0, 0, 1, 1], [], []>} : vector<8x128xbf16>, vector<128x512xbf16>, vector<8x512xf32> -> vector<8x512xf32>
    %16 = arith.addf %11, %15 : vector<8x512xf32>
    %17 = vector.extract_strided_slice %16 {offsets = [0, 0], sizes = [8, 128], strides = [1, 1]} : vector<8x512xf32> to vector<8x128xf32>
    %18 = arith.negf %17 : vector<8x128xf32>
    %19 = math.exp %18 : vector<8x128xf32>
    %cst_20 = arith.constant 1.000000e+00 : f32
    %20 = vector.broadcast %cst_20 : f32 to vector<8x128xf32>
    %21 = arith.addf %20, %19 : vector<8x128xf32>
    %22 = arith.divf %20, %21 : vector<8x128xf32>
    %23 = vector.extract_strided_slice %16 {offsets = [0, 128], sizes = [8, 128], strides = [1, 1]} : vector<8x512xf32> to vector<8x128xf32>
    %24 = arith.negf %23 : vector<8x128xf32>
    %25 = math.exp %24 : vector<8x128xf32>
    %cst_21 = arith.constant 1.000000e+00 : f32
    %26 = vector.broadcast %cst_21 : f32 to vector<8x128xf32>
    %27 = arith.addf %26, %25 : vector<8x128xf32>
    %28 = arith.divf %26, %27 : vector<8x128xf32>
    %29 = vector.extract_strided_slice %16 {offsets = [0, 256], sizes = [8, 128], strides = [1, 1]} : vector<8x512xf32> to vector<8x128xf32>
    %30 = math.tanh %29 : vector<8x128xf32>
    %31 = vector.extract_strided_slice %16 {offsets = [0, 384], sizes = [8, 128], strides = [1, 1]} : vector<8x512xf32> to vector<8x128xf32>
    %32 = arith.negf %31 : vector<8x128xf32>
    %33 = math.exp %32 : vector<8x128xf32>
    %cst_22 = arith.constant 1.000000e+00 : f32
    %34 = vector.broadcast %cst_22 : f32 to vector<8x128xf32>
    %35 = arith.addf %34, %33 : vector<8x128xf32>
    %36 = arith.divf %34, %35 : vector<8x128xf32>
    %c0_23 = arith.constant 0 : index
    %c0_24 = arith.constant 0 : index
    %37 = vector.load %arg7[%c0_23, %c0_24] : memref<8x128xf32, #tpu.memory_space<vmem>>, vector<8x128xf32>
    %38 = arith.mulf %28, %37 : vector<8x128xf32>
    %39 = arith.mulf %22, %30 : vector<8x128xf32>
    %40 = arith.addf %38, %39 : vector<8x128xf32>
    %41 = math.tanh %40 : vector<8x128xf32>
    %42 = arith.mulf %36, %41 : vector<8x128xf32>
    %c0_25 = arith.constant 0 : index
    %c0_26 = arith.constant 0 : index
    %43 = vector.load %arg6[%c0_25, %c0_26] : memref<8x128xf32, #tpu.memory_space<vmem>>, vector<8x128xf32>
    tpu.vector_store %arg6[%c0_25, %c0_26], %42 {strides = array<i32>} : memref<8x128xf32, #tpu.memory_space<vmem>>, vector<8x128xf32>,
    %c0_27 = arith.constant 0 : index
    %c0_28 = arith.constant 0 : index
    %44 = vector.load %arg7[%c0_27, %c0_28] : memref<8x128xf32, #tpu.memory_space<vmem>>, vector<8x128xf32>
    tpu.vector_store %arg7[%c0_27, %c0_28], %40 {strides = array<i32>} : memref<8x128xf32, #tpu.memory_space<vmem>>, vector<8x128xf32>,
    %45 = arith.truncf %42 : vector<8x128xf32> to vector<8x128xbf16>
    %c0_29 = arith.constant 0 : index
    %c0_30 = arith.constant 0 : index
    %c0_31 = arith.constant 0 : index
    %46 = vector.load %arg4[%c0_29, %c0_30, %c0_31] : memref<9x8x128xbf16, #tpu.memory_space<vmem>>, vector<1x8x128xbf16>
    %47 = vector.shape_cast %46 : vector<1x8x128xbf16> to vector<8x128xbf16>
    %48 = vector.shape_cast %45 : vector<8x128xbf16> to vector<1x8x128xbf16>
    tpu.vector_store %arg4[%c0_29, %c0_30, %c0_31], %48 {strides = array<i32>} : memref<9x8x128xbf16, #tpu.memory_space<vmem>>, vector<1x8x128xbf16>,
    %c8 = arith.constant 8 : index
    %c0_32 = arith.constant 0 : index
    %49 = vector.load %arg5[%c8, %c0_32] : memref<72x512xf32, #tpu.memory_space<vmem>>, vector<8x512xf32>
    %c0_33 = arith.constant 0 : index
    %c0_34 = arith.constant 0 : index
    %50 = vector.load %arg6[%c0_33, %c0_34] : memref<8x128xf32, #tpu.memory_space<vmem>>, vector<8x128xf32>
    %51 = arith.truncf %50 : vector<8x128xf32> to vector<8x128xbf16>
    %c0_35 = arith.constant 0 : index
    %c0_36 = arith.constant 0 : index
    %52 = vector.load %arg2[%c0_35, %c0_36] : memref<128x512xbf16, #tpu.memory_space<vmem>>, vector<128x512xbf16>
    %cst_37 = arith.constant dense<0.000000e+00> : vector<8x512xf32>
    %53 = tpu.matmul %51, %52, %cst_37 {dimension_numbers = #tpu.dot_dimension_numbers<[1], [0], [0], [1], [0, 0, 1, 1], [], []>} : vector<8x128xbf16>, vector<128x512xbf16>, vector<8x512xf32> -> vector<8x512xf32>
    %54 = arith.addf %49, %53 : vector<8x512xf32>
    %55 = vector.extract_strided_slice %54 {offsets = [0, 0], sizes = [8, 128], strides = [1, 1]} : vector<8x512xf32> to vector<8x128xf32>
    %56 = arith.negf %55 : vector<8x128xf32>
    %57 = math.exp %56 : vector<8x128xf32>
    %cst_38 = arith.constant 1.000000e+00 : f32
    %58 = vector.broadcast %cst_38 : f32 to vector<8x128xf32>
    %59 = arith.addf %58, %57 : vector<8x128xf32>
    %60 = arith.divf %58, %59 : vector<8x128xf32>
    %61 = vector.extract_strided_slice %54 {offsets = [0, 128], sizes = [8, 128], strides = [1, 1]} : vector<8x512xf32> to vector<8x128xf32>
    %62 = arith.negf %61 : vector<8x128xf32>
    %63 = math.exp %62 : vector<8x128xf32>
    %cst_39 = arith.constant 1.000000e+00 : f32
    %64 = vector.broadcast %cst_39 : f32 to vector<8x128xf32>
    %65 = arith.addf %64, %63 : vector<8x128xf32>
    %66 = arith.divf %64, %65 : vector<8x128xf32>
    %67 = vector.extract_strided_slice %54 {offsets = [0, 256], sizes = [8, 128], strides = [1, 1]} : vector<8x512xf32> to vector<8x128xf32>
    %68 = math.tanh %67 : vector<8x128xf32>
    %69 = vector.extract_strided_slice %54 {offsets = [0, 384], sizes = [8, 128], strides = [1, 1]} : vector<8x512xf32> to vector<8x128xf32>
    %70 = arith.negf %69 : vector<8x128xf32>
    %71 = math.exp %70 : vector<8x128xf32>
    %cst_40 = arith.constant 1.000000e+00 : f32
    %72 = vector.broadcast %cst_40 : f32 to vector<8x128xf32>
    %73 = arith.addf %72, %71 : vector<8x128xf32>
    %74 = arith.divf %72, %73 : vector<8x128xf32>
    %c0_41 = arith.constant 0 : index
    %c0_42 = arith.constant 0 : index
    %75 = vector.load %arg7[%c0_41, %c0_42] : memref<8x128xf32, #tpu.memory_space<vmem>>, vector<8x128xf32>
    %76 = arith.mulf %66, %75 : vector<8x128xf32>
    %77 = arith.mulf %60, %68 : vector<8x128xf32>
    %78 = arith.addf %76, %77 : vector<8x128xf32>
    %79 = math.tanh %78 : vector<8x128xf32>
    %80 = arith.mulf %74, %79 : vector<8x128xf32>
    %c0_43 = arith.constant 0 : index
    %c0_44 = arith.constant 0 : index
    %81 = vector.load %arg6[%c0_43, %c0_44] : memref<8x128xf32, #tpu.memory_space<vmem>>, vector<8x128xf32>
    tpu.vector_store %arg6[%c0_43, %c0_44], %80 {strides = array<i32>} : memref<8x128xf32, #tpu.memory_space<vmem>>, vector<8x128xf32>,
    %c0_45 = arith.constant 0 : index
    %c0_46 = arith.constant 0 : index
    %82 = vector.load %arg7[%c0_45, %c0_46] : memref<8x128xf32, #tpu.memory_space<vmem>>, vector<8x128xf32>
    tpu.vector_store %arg7[%c0_45, %c0_46], %78 {strides = array<i32>} : memref<8x128xf32, #tpu.memory_space<vmem>>, vector<8x128xf32>,
    %83 = arith.truncf %80 : vector<8x128xf32> to vector<8x128xbf16>
    %c1 = arith.constant 1 : index
    %c0_47 = arith.constant 0 : index
    %c0_48 = arith.constant 0 : index
    %84 = vector.load %arg4[%c1, %c0_47, %c0_48] : memref<9x8x128xbf16, #tpu.memory_space<vmem>>, vector<1x8x128xbf16>
    %85 = vector.shape_cast %84 : vector<1x8x128xbf16> to vector<8x128xbf16>
    %86 = vector.shape_cast %83 : vector<8x128xbf16> to vector<1x8x128xbf16>
    tpu.vector_store %arg4[%c1, %c0_47, %c0_48], %86 {strides = array<i32>} : memref<9x8x128xbf16, #tpu.memory_space<vmem>>, vector<1x8x128xbf16>,
    %c16 = arith.constant 16 : index
    %c0_49 = arith.constant 0 : index
    %87 = vector.load %arg5[%c16, %c0_49] : memref<72x512xf32, #tpu.memory_space<vmem>>, vector<8x512xf32>
    %c0_50 = arith.constant 0 : index
    %c0_51 = arith.constant 0 : index
    %88 = vector.load %arg6[%c0_50, %c0_51] : memref<8x128xf32, #tpu.memory_space<vmem>>, vector<8x128xf32>
    %89 = arith.truncf %88 : vector<8x128xf32> to vector<8x128xbf16>
    %c0_52 = arith.constant 0 : index
    %c0_53 = arith.constant 0 : index
    %90 = vector.load %arg2[%c0_52, %c0_53] : memref<128x512xbf16, #tpu.memory_space<vmem>>, vector<128x512xbf16>
    %cst_54 = arith.constant dense<0.000000e+00> : vector<8x512xf32>
    %91 = tpu.matmul %89, %90, %cst_54 {dimension_numbers = #tpu.dot_dimension_numbers<[1], [0], [0], [1], [0, 0, 1, 1], [], []>} : vector<8x128xbf16>, vector<128x512xbf16>, vector<8x512xf32> -> vector<8x512xf32>
    %92 = arith.addf %87, %91 : vector<8x512xf32>
    %93 = vector.extract_strided_slice %92 {offsets = [0, 0], sizes = [8, 128], strides = [1, 1]} : vector<8x512xf32> to vector<8x128xf32>
    %94 = arith.negf %93 : vector<8x128xf32>
    %95 = math.exp %94 : vector<8x128xf32>
    %cst_55 = arith.constant 1.000000e+00 : f32
    %96 = vector.broadcast %cst_55 : f32 to vector<8x128xf32>
    %97 = arith.addf %96, %95 : vector<8x128xf32>
    %98 = arith.divf %96, %97 : vector<8x128xf32>
    %99 = vector.extract_strided_slice %92 {offsets = [0, 128], sizes = [8, 128], strides = [1, 1]} : vector<8x512xf32> to vector<8x128xf32>
    %100 = arith.negf %99 : vector<8x128xf32>
    %101 = math.exp %100 : vector<8x128xf32>
    %cst_56 = arith.constant 1.000000e+00 : f32
    %102 = vector.broadcast %cst_56 : f32 to vector<8x128xf32>
    %103 = arith.addf %102, %101 : vector<8x128xf32>
    %104 = arith.divf %102, %103 : vector<8x128xf32>
    %105 = vector.extract_strided_slice %92 {offsets = [0, 256], sizes = [8, 128], strides = [1, 1]} : vector<8x512xf32> to vector<8x128xf32>
    %106 = math.tanh %105 : vector<8x128xf32>
    %107 = vector.extract_strided_slice %92 {offsets = [0, 384], sizes = [8, 128], strides = [1, 1]} : vector<8x512xf32> to vector<8x128xf32>
    %108 = arith.negf %107 : vector<8x128xf32>
    %109 = math.exp %108 : vector<8x128xf32>
    %cst_57 = arith.constant 1.000000e+00 : f32
    %110 = vector.broadcast %cst_57 : f32 to vector<8x128xf32>
    %111 = arith.addf %110, %109 : vector<8x128xf32>
    %112 = arith.divf %110, %111 : vector<8x128xf32>
    %c0_58 = arith.constant 0 : index
    %c0_59 = arith.constant 0 : index
    %113 = vector.load %arg7[%c0_58, %c0_59] : memref<8x128xf32, #tpu.memory_space<vmem>>, vector<8x128xf32>
    %114 = arith.mulf %104, %113 : vector<8x128xf32>
    %115 = arith.mulf %98, %106 : vector<8x128xf32>
    %116 = arith.addf %114, %115 : vector<8x128xf32>
    %117 = math.tanh %116 : vector<8x128xf32>
    %118 = arith.mulf %112, %117 : vector<8x128xf32>
    %c0_60 = arith.constant 0 : index
    %c0_61 = arith.constant 0 : index
    %119 = vector.load %arg6[%c0_60, %c0_61] : memref<8x128xf32, #tpu.memory_space<vmem>>, vector<8x128xf32>
    tpu.vector_store %arg6[%c0_60, %c0_61], %118 {strides = array<i32>} : memref<8x128xf32, #tpu.memory_space<vmem>>, vector<8x128xf32>,
    %c0_62 = arith.constant 0 : index
    %c0_63 = arith.constant 0 : index
    %120 = vector.load %arg7[%c0_62, %c0_63] : memref<8x128xf32, #tpu.memory_space<vmem>>, vector<8x128xf32>
    tpu.vector_store %arg7[%c0_62, %c0_63], %116 {strides = array<i32>} : memref<8x128xf32, #tpu.memory_space<vmem>>, vector<8x128xf32>,
    %121 = arith.truncf %118 : vector<8x128xf32> to vector<8x128xbf16>
    %c2 = arith.constant 2 : index
    %c0_64 = arith.constant 0 : index
    %c0_65 = arith.constant 0 : index
    %122 = vector.load %arg4[%c2, %c0_64, %c0_65] : memref<9x8x128xbf16, #tpu.memory_space<vmem>>, vector<1x8x128xbf16>
    %123 = vector.shape_cast %122 : vector<1x8x128xbf16> to vector<8x128xbf16>
    %124 = vector.shape_cast %121 : vector<8x128xbf16> to vector<1x8x128xbf16>
    tpu.vector_store %arg4[%c2, %c0_64, %c0_65], %124 {strides = array<i32>} : memref<9x8x128xbf16, #tpu.memory_space<vmem>>, vector<1x8x128xbf16>,
    %c24 = arith.constant 24 : index
    %c0_66 = arith.constant 0 : index
    %125 = vector.load %arg5[%c24, %c0_66] : memref<72x512xf32, #tpu.memory_space<vmem>>, vector<8x512xf32>
    %c0_67 = arith.constant 0 : index
    %c0_68 = arith.constant 0 : index
    %126 = vector.load %arg6[%c0_67, %c0_68] : memref<8x128xf32, #tpu.memory_space<vmem>>, vector<8x128xf32>
    %127 = arith.truncf %126 : vector<8x128xf32> to vector<8x128xbf16>
    %c0_69 = arith.constant 0 : index
    %c0_70 = arith.constant 0 : index
    %128 = vector.load %arg2[%c0_69, %c0_70] : memref<128x512xbf16, #tpu.memory_space<vmem>>, vector<128x512xbf16>
    %cst_71 = arith.constant dense<0.000000e+00> : vector<8x512xf32>
    %129 = tpu.matmul %127, %128, %cst_71 {dimension_numbers = #tpu.dot_dimension_numbers<[1], [0], [0], [1], [0, 0, 1, 1], [], []>} : vector<8x128xbf16>, vector<128x512xbf16>, vector<8x512xf32> -> vector<8x512xf32>
    %130 = arith.addf %125, %129 : vector<8x512xf32>
    %131 = vector.extract_strided_slice %130 {offsets = [0, 0], sizes = [8, 128], strides = [1, 1]} : vector<8x512xf32> to vector<8x128xf32>
    %132 = arith.negf %131 : vector<8x128xf32>
    %133 = math.exp %132 : vector<8x128xf32>
    %cst_72 = arith.constant 1.000000e+00 : f32
    %134 = vector.broadcast %cst_72 : f32 to vector<8x128xf32>
    %135 = arith.addf %134, %133 : vector<8x128xf32>
    %136 = arith.divf %134, %135 : vector<8x128xf32>
    %137 = vector.extract_strided_slice %130 {offsets = [0, 128], sizes = [8, 128], strides = [1, 1]} : vector<8x512xf32> to vector<8x128xf32>
    %138 = arith.negf %137 : vector<8x128xf32>
    %139 = math.exp %138 : vector<8x128xf32>
    %cst_73 = arith.constant 1.000000e+00 : f32
    %140 = vector.broadcast %cst_73 : f32 to vector<8x128xf32>
    %141 = arith.addf %140, %139 : vector<8x128xf32>
    %142 = arith.divf %140, %141 : vector<8x128xf32>
    %143 = vector.extract_strided_slice %130 {offsets = [0, 256], sizes = [8, 128], strides = [1, 1]} : vector<8x512xf32> to vector<8x128xf32>
    %144 = math.tanh %143 : vector<8x128xf32>
    %145 = vector.extract_strided_slice %130 {offsets = [0, 384], sizes = [8, 128], strides = [1, 1]} : vector<8x512xf32> to vector<8x128xf32>
    %146 = arith.negf %145 : vector<8x128xf32>
    %147 = math.exp %146 : vector<8x128xf32>
    %cst_74 = arith.constant 1.000000e+00 : f32
    %148 = vector.broadcast %cst_74 : f32 to vector<8x128xf32>
    %149 = arith.addf %148, %147 : vector<8x128xf32>
    %150 = arith.divf %148, %149 : vector<8x128xf32>
    %c0_75 = arith.constant 0 : index
    %c0_76 = arith.constant 0 : index
    %151 = vector.load %arg7[%c0_75, %c0_76] : memref<8x128xf32, #tpu.memory_space<vmem>>, vector<8x128xf32>
    %152 = arith.mulf %142, %151 : vector<8x128xf32>
    %153 = arith.mulf %136, %144 : vector<8x128xf32>
    %154 = arith.addf %152, %153 : vector<8x128xf32>
    %155 = math.tanh %154 : vector<8x128xf32>
    %156 = arith.mulf %150, %155 : vector<8x128xf32>
    %c0_77 = arith.constant 0 : index
    %c0_78 = arith.constant 0 : index
    %157 = vector.load %arg6[%c0_77, %c0_78] : memref<8x128xf32, #tpu.memory_space<vmem>>, vector<8x128xf32>
    tpu.vector_store %arg6[%c0_77, %c0_78], %156 {strides = array<i32>} : memref<8x128xf32, #tpu.memory_space<vmem>>, vector<8x128xf32>,
    %c0_79 = arith.constant 0 : index
    %c0_80 = arith.constant 0 : index
    %158 = vector.load %arg7[%c0_79, %c0_80] : memref<8x128xf32, #tpu.memory_space<vmem>>, vector<8x128xf32>
    tpu.vector_store %arg7[%c0_79, %c0_80], %154 {strides = array<i32>} : memref<8x128xf32, #tpu.memory_space<vmem>>, vector<8x128xf32>,
    %159 = arith.truncf %156 : vector<8x128xf32> to vector<8x128xbf16>
    %c3 = arith.constant 3 : index
    %c0_81 = arith.constant 0 : index
    %c0_82 = arith.constant 0 : index
    %160 = vector.load %arg4[%c3, %c0_81, %c0_82] : memref<9x8x128xbf16, #tpu.memory_space<vmem>>, vector<1x8x128xbf16>
    %161 = vector.shape_cast %160 : vector<1x8x128xbf16> to vector<8x128xbf16>
    %162 = vector.shape_cast %159 : vector<8x128xbf16> to vector<1x8x128xbf16>
    tpu.vector_store %arg4[%c3, %c0_81, %c0_82], %162 {strides = array<i32>} : memref<9x8x128xbf16, #tpu.memory_space<vmem>>, vector<1x8x128xbf16>,
    %c32 = arith.constant 32 : index
    %c0_83 = arith.constant 0 : index
    %163 = vector.load %arg5[%c32, %c0_83] : memref<72x512xf32, #tpu.memory_space<vmem>>, vector<8x512xf32>
    %c0_84 = arith.constant 0 : index
    %c0_85 = arith.constant 0 : index
    %164 = vector.load %arg6[%c0_84, %c0_85] : memref<8x128xf32, #tpu.memory_space<vmem>>, vector<8x128xf32>
    %165 = arith.truncf %164 : vector<8x128xf32> to vector<8x128xbf16>
    %c0_86 = arith.constant 0 : index
    %c0_87 = arith.constant 0 : index
    %166 = vector.load %arg2[%c0_86, %c0_87] : memref<128x512xbf16, #tpu.memory_space<vmem>>, vector<128x512xbf16>
    %cst_88 = arith.constant dense<0.000000e+00> : vector<8x512xf32>
    %167 = tpu.matmul %165, %166, %cst_88 {dimension_numbers = #tpu.dot_dimension_numbers<[1], [0], [0], [1], [0, 0, 1, 1], [], []>} : vector<8x128xbf16>, vector<128x512xbf16>, vector<8x512xf32> -> vector<8x512xf32>
    %168 = arith.addf %163, %167 : vector<8x512xf32>
    %169 = vector.extract_strided_slice %168 {offsets = [0, 0], sizes = [8, 128], strides = [1, 1]} : vector<8x512xf32> to vector<8x128xf32>
    %170 = arith.negf %169 : vector<8x128xf32>
    %171 = math.exp %170 : vector<8x128xf32>
    %cst_89 = arith.constant 1.000000e+00 : f32
    %172 = vector.broadcast %cst_89 : f32 to vector<8x128xf32>
    %173 = arith.addf %172, %171 : vector<8x128xf32>
    %174 = arith.divf %172, %173 : vector<8x128xf32>
    %175 = vector.extract_strided_slice %168 {offsets = [0, 128], sizes = [8, 128], strides = [1, 1]} : vector<8x512xf32> to vector<8x128xf32>
    %176 = arith.negf %175 : vector<8x128xf32>
    %177 = math.exp %176 : vector<8x128xf32>
    %cst_90 = arith.constant 1.000000e+00 : f32
    %178 = vector.broadcast %cst_90 : f32 to vector<8x128xf32>
    %179 = arith.addf %178, %177 : vector<8x128xf32>
    %180 = arith.divf %178, %179 : vector<8x128xf32>
    %181 = vector.extract_strided_slice %168 {offsets = [0, 256], sizes = [8, 128], strides = [1, 1]} : vector<8x512xf32> to vector<8x128xf32>
    %182 = math.tanh %181 : vector<8x128xf32>
    %183 = vector.extract_strided_slice %168 {offsets = [0, 384], sizes = [8, 128], strides = [1, 1]} : vector<8x512xf32> to vector<8x128xf32>
    %184 = arith.negf %183 : vector<8x128xf32>
    %185 = math.exp %184 : vector<8x128xf32>
    %cst_91 = arith.constant 1.000000e+00 : f32
    %186 = vector.broadcast %cst_91 : f32 to vector<8x128xf32>
    %187 = arith.addf %186, %185 : vector<8x128xf32>
    %188 = arith.divf %186, %187 : vector<8x128xf32>
    %c0_92 = arith.constant 0 : index
    %c0_93 = arith.constant 0 : index
    %189 = vector.load %arg7[%c0_92, %c0_93] : memref<8x128xf32, #tpu.memory_space<vmem>>, vector<8x128xf32>
    %190 = arith.mulf %180, %189 : vector<8x128xf32>
    %191 = arith.mulf %174, %182 : vector<8x128xf32>
    %192 = arith.addf %190, %191 : vector<8x128xf32>
    %193 = math.tanh %192 : vector<8x128xf32>
    %194 = arith.mulf %188, %193 : vector<8x128xf32>
    %c0_94 = arith.constant 0 : index
    %c0_95 = arith.constant 0 : index
    %195 = vector.load %arg6[%c0_94, %c0_95] : memref<8x128xf32, #tpu.memory_space<vmem>>, vector<8x128xf32>
    tpu.vector_store %arg6[%c0_94, %c0_95], %194 {strides = array<i32>} : memref<8x128xf32, #tpu.memory_space<vmem>>, vector<8x128xf32>,
    %c0_96 = arith.constant 0 : index
    %c0_97 = arith.constant 0 : index
    %196 = vector.load %arg7[%c0_96, %c0_97] : memref<8x128xf32, #tpu.memory_space<vmem>>, vector<8x128xf32>
    tpu.vector_store %arg7[%c0_96, %c0_97], %192 {strides = array<i32>} : memref<8x128xf32, #tpu.memory_space<vmem>>, vector<8x128xf32>,
    %197 = arith.truncf %194 : vector<8x128xf32> to vector<8x128xbf16>
    %c4 = arith.constant 4 : index
    %c0_98 = arith.constant 0 : index
    %c0_99 = arith.constant 0 : index
    %198 = vector.load %arg4[%c4, %c0_98, %c0_99] : memref<9x8x128xbf16, #tpu.memory_space<vmem>>, vector<1x8x128xbf16>
    %199 = vector.shape_cast %198 : vector<1x8x128xbf16> to vector<8x128xbf16>
    %200 = vector.shape_cast %197 : vector<8x128xbf16> to vector<1x8x128xbf16>
    tpu.vector_store %arg4[%c4, %c0_98, %c0_99], %200 {strides = array<i32>} : memref<9x8x128xbf16, #tpu.memory_space<vmem>>, vector<1x8x128xbf16>,
    %c40 = arith.constant 40 : index
    %c0_100 = arith.constant 0 : index
    %201 = vector.load %arg5[%c40, %c0_100] : memref<72x512xf32, #tpu.memory_space<vmem>>, vector<8x512xf32>
    %c0_101 = arith.constant 0 : index
    %c0_102 = arith.constant 0 : index
    %202 = vector.load %arg6[%c0_101, %c0_102] : memref<8x128xf32, #tpu.memory_space<vmem>>, vector<8x128xf32>
    %203 = arith.truncf %202 : vector<8x128xf32> to vector<8x128xbf16>
    %c0_103 = arith.constant 0 : index
    %c0_104 = arith.constant 0 : index
    %204 = vector.load %arg2[%c0_103, %c0_104] : memref<128x512xbf16, #tpu.memory_space<vmem>>, vector<128x512xbf16>
    %cst_105 = arith.constant dense<0.000000e+00> : vector<8x512xf32>
    %205 = tpu.matmul %203, %204, %cst_105 {dimension_numbers = #tpu.dot_dimension_numbers<[1], [0], [0], [1], [0, 0, 1, 1], [], []>} : vector<8x128xbf16>, vector<128x512xbf16>, vector<8x512xf32> -> vector<8x512xf32>
    %206 = arith.addf %201, %205 : vector<8x512xf32>
    %207 = vector.extract_strided_slice %206 {offsets = [0, 0], sizes = [8, 128], strides = [1, 1]} : vector<8x512xf32> to vector<8x128xf32>
    %208 = arith.negf %207 : vector<8x128xf32>
    %209 = math.exp %208 : vector<8x128xf32>
    %cst_106 = arith.constant 1.000000e+00 : f32
    %210 = vector.broadcast %cst_106 : f32 to vector<8x128xf32>
    %211 = arith.addf %210, %209 : vector<8x128xf32>
    %212 = arith.divf %210, %211 : vector<8x128xf32>
    %213 = vector.extract_strided_slice %206 {offsets = [0, 128], sizes = [8, 128], strides = [1, 1]} : vector<8x512xf32> to vector<8x128xf32>
    %214 = arith.negf %213 : vector<8x128xf32>
    %215 = math.exp %214 : vector<8x128xf32>
    %cst_107 = arith.constant 1.000000e+00 : f32
    %216 = vector.broadcast %cst_107 : f32 to vector<8x128xf32>
    %217 = arith.addf %216, %215 : vector<8x128xf32>
    %218 = arith.divf %216, %217 : vector<8x128xf32>
    %219 = vector.extract_strided_slice %206 {offsets = [0, 256], sizes = [8, 128], strides = [1, 1]} : vector<8x512xf32> to vector<8x128xf32>
    %220 = math.tanh %219 : vector<8x128xf32>
    %221 = vector.extract_strided_slice %206 {offsets = [0, 384], sizes = [8, 128], strides = [1, 1]} : vector<8x512xf32> to vector<8x128xf32>
    %222 = arith.negf %221 : vector<8x128xf32>
    %223 = math.exp %222 : vector<8x128xf32>
    %cst_108 = arith.constant 1.000000e+00 : f32
    %224 = vector.broadcast %cst_108 : f32 to vector<8x128xf32>
    %225 = arith.addf %224, %223 : vector<8x128xf32>
    %226 = arith.divf %224, %225 : vector<8x128xf32>
    %c0_109 = arith.constant 0 : index
    %c0_110 = arith.constant 0 : index
    %227 = vector.load %arg7[%c0_109, %c0_110] : memref<8x128xf32, #tpu.memory_space<vmem>>, vector<8x128xf32>
    %228 = arith.mulf %218, %227 : vector<8x128xf32>
    %229 = arith.mulf %212, %220 : vector<8x128xf32>
    %230 = arith.addf %228, %229 : vector<8x128xf32>
    %231 = math.tanh %230 : vector<8x128xf32>
    %232 = arith.mulf %226, %231 : vector<8x128xf32>
    %c0_111 = arith.constant 0 : index
    %c0_112 = arith.constant 0 : index
    %233 = vector.load %arg6[%c0_111, %c0_112] : memref<8x128xf32, #tpu.memory_space<vmem>>, vector<8x128xf32>
    tpu.vector_store %arg6[%c0_111, %c0_112], %232 {strides = array<i32>} : memref<8x128xf32, #tpu.memory_space<vmem>>, vector<8x128xf32>,
    %c0_113 = arith.constant 0 : index
    %c0_114 = arith.constant 0 : index
    %234 = vector.load %arg7[%c0_113, %c0_114] : memref<8x128xf32, #tpu.memory_space<vmem>>, vector<8x128xf32>
    tpu.vector_store %arg7[%c0_113, %c0_114], %230 {strides = array<i32>} : memref<8x128xf32, #tpu.memory_space<vmem>>, vector<8x128xf32>,
    %235 = arith.truncf %232 : vector<8x128xf32> to vector<8x128xbf16>
    %c5 = arith.constant 5 : index
    %c0_115 = arith.constant 0 : index
    %c0_116 = arith.constant 0 : index
    %236 = vector.load %arg4[%c5, %c0_115, %c0_116] : memref<9x8x128xbf16, #tpu.memory_space<vmem>>, vector<1x8x128xbf16>
    %237 = vector.shape_cast %236 : vector<1x8x128xbf16> to vector<8x128xbf16>
    %238 = vector.shape_cast %235 : vector<8x128xbf16> to vector<1x8x128xbf16>
    tpu.vector_store %arg4[%c5, %c0_115, %c0_116], %238 {strides = array<i32>} : memref<9x8x128xbf16, #tpu.memory_space<vmem>>, vector<1x8x128xbf16>,
    %c48 = arith.constant 48 : index
    %c0_117 = arith.constant 0 : index
    %239 = vector.load %arg5[%c48, %c0_117] : memref<72x512xf32, #tpu.memory_space<vmem>>, vector<8x512xf32>
    %c0_118 = arith.constant 0 : index
    %c0_119 = arith.constant 0 : index
    %240 = vector.load %arg6[%c0_118, %c0_119] : memref<8x128xf32, #tpu.memory_space<vmem>>, vector<8x128xf32>
    %241 = arith.truncf %240 : vector<8x128xf32> to vector<8x128xbf16>
    %c0_120 = arith.constant 0 : index
    %c0_121 = arith.constant 0 : index
    %242 = vector.load %arg2[%c0_120, %c0_121] : memref<128x512xbf16, #tpu.memory_space<vmem>>, vector<128x512xbf16>
    %cst_122 = arith.constant dense<0.000000e+00> : vector<8x512xf32>
    %243 = tpu.matmul %241, %242, %cst_122 {dimension_numbers = #tpu.dot_dimension_numbers<[1], [0], [0], [1], [0, 0, 1, 1], [], []>} : vector<8x128xbf16>, vector<128x512xbf16>, vector<8x512xf32> -> vector<8x512xf32>
    %244 = arith.addf %239, %243 : vector<8x512xf32>
    %245 = vector.extract_strided_slice %244 {offsets = [0, 0], sizes = [8, 128], strides = [1, 1]} : vector<8x512xf32> to vector<8x128xf32>
    %246 = arith.negf %245 : vector<8x128xf32>
    %247 = math.exp %246 : vector<8x128xf32>
    %cst_123 = arith.constant 1.000000e+00 : f32
    %248 = vector.broadcast %cst_123 : f32 to vector<8x128xf32>
    %249 = arith.addf %248, %247 : vector<8x128xf32>
    %250 = arith.divf %248, %249 : vector<8x128xf32>
    %251 = vector.extract_strided_slice %244 {offsets = [0, 128], sizes = [8, 128], strides = [1, 1]} : vector<8x512xf32> to vector<8x128xf32>
    %252 = arith.negf %251 : vector<8x128xf32>
    %253 = math.exp %252 : vector<8x128xf32>
    %cst_124 = arith.constant 1.000000e+00 : f32
    %254 = vector.broadcast %cst_124 : f32 to vector<8x128xf32>
    %255 = arith.addf %254, %253 : vector<8x128xf32>
    %256 = arith.divf %254, %255 : vector<8x128xf32>
    %257 = vector.extract_strided_slice %244 {offsets = [0, 256], sizes = [8, 128], strides = [1, 1]} : vector<8x512xf32> to vector<8x128xf32>
    %258 = math.tanh %257 : vector<8x128xf32>
    %259 = vector.extract_strided_slice %244 {offsets = [0, 384], sizes = [8, 128], strides = [1, 1]} : vector<8x512xf32> to vector<8x128xf32>
    %260 = arith.negf %259 : vector<8x128xf32>
    %261 = math.exp %260 : vector<8x128xf32>
    %cst_125 = arith.constant 1.000000e+00 : f32
    %262 = vector.broadcast %cst_125 : f32 to vector<8x128xf32>
    %263 = arith.addf %262, %261 : vector<8x128xf32>
    %264 = arith.divf %262, %263 : vector<8x128xf32>
    %c0_126 = arith.constant 0 : index
    %c0_127 = arith.constant 0 : index
    %265 = vector.load %arg7[%c0_126, %c0_127] : memref<8x128xf32, #tpu.memory_space<vmem>>, vector<8x128xf32>
    %266 = arith.mulf %256, %265 : vector<8x128xf32>
    %267 = arith.mulf %250, %258 : vector<8x128xf32>
    %268 = arith.addf %266, %267 : vector<8x128xf32>
    %269 = math.tanh %268 : vector<8x128xf32>
    %270 = arith.mulf %264, %269 : vector<8x128xf32>
    %c0_128 = arith.constant 0 : index
    %c0_129 = arith.constant 0 : index
    %271 = vector.load %arg6[%c0_128, %c0_129] : memref<8x128xf32, #tpu.memory_space<vmem>>, vector<8x128xf32>
    tpu.vector_store %arg6[%c0_128, %c0_129], %270 {strides = array<i32>} : memref<8x128xf32, #tpu.memory_space<vmem>>, vector<8x128xf32>,
    %c0_130 = arith.constant 0 : index
    %c0_131 = arith.constant 0 : index
    %272 = vector.load %arg7[%c0_130, %c0_131] : memref<8x128xf32, #tpu.memory_space<vmem>>, vector<8x128xf32>
    tpu.vector_store %arg7[%c0_130, %c0_131], %268 {strides = array<i32>} : memref<8x128xf32, #tpu.memory_space<vmem>>, vector<8x128xf32>,
    %273 = arith.truncf %270 : vector<8x128xf32> to vector<8x128xbf16>
    %c6 = arith.constant 6 : index
    %c0_132 = arith.constant 0 : index
    %c0_133 = arith.constant 0 : index
    %274 = vector.load %arg4[%c6, %c0_132, %c0_133] : memref<9x8x128xbf16, #tpu.memory_space<vmem>>, vector<1x8x128xbf16>
    %275 = vector.shape_cast %274 : vector<1x8x128xbf16> to vector<8x128xbf16>
    %276 = vector.shape_cast %273 : vector<8x128xbf16> to vector<1x8x128xbf16>
    tpu.vector_store %arg4[%c6, %c0_132, %c0_133], %276 {strides = array<i32>} : memref<9x8x128xbf16, #tpu.memory_space<vmem>>, vector<1x8x128xbf16>,
    %c56 = arith.constant 56 : index
    %c0_134 = arith.constant 0 : index
    %277 = vector.load %arg5[%c56, %c0_134] : memref<72x512xf32, #tpu.memory_space<vmem>>, vector<8x512xf32>
    %c0_135 = arith.constant 0 : index
    %c0_136 = arith.constant 0 : index
    %278 = vector.load %arg6[%c0_135, %c0_136] : memref<8x128xf32, #tpu.memory_space<vmem>>, vector<8x128xf32>
    %279 = arith.truncf %278 : vector<8x128xf32> to vector<8x128xbf16>
    %c0_137 = arith.constant 0 : index
    %c0_138 = arith.constant 0 : index
    %280 = vector.load %arg2[%c0_137, %c0_138] : memref<128x512xbf16, #tpu.memory_space<vmem>>, vector<128x512xbf16>
    %cst_139 = arith.constant dense<0.000000e+00> : vector<8x512xf32>
    %281 = tpu.matmul %279, %280, %cst_139 {dimension_numbers = #tpu.dot_dimension_numbers<[1], [0], [0], [1], [0, 0, 1, 1], [], []>} : vector<8x128xbf16>, vector<128x512xbf16>, vector<8x512xf32> -> vector<8x512xf32>
    %282 = arith.addf %277, %281 : vector<8x512xf32>
    %283 = vector.extract_strided_slice %282 {offsets = [0, 0], sizes = [8, 128], strides = [1, 1]} : vector<8x512xf32> to vector<8x128xf32>
    %284 = arith.negf %283 : vector<8x128xf32>
    %285 = math.exp %284 : vector<8x128xf32>
    %cst_140 = arith.constant 1.000000e+00 : f32
    %286 = vector.broadcast %cst_140 : f32 to vector<8x128xf32>
    %287 = arith.addf %286, %285 : vector<8x128xf32>
    %288 = arith.divf %286, %287 : vector<8x128xf32>
    %289 = vector.extract_strided_slice %282 {offsets = [0, 128], sizes = [8, 128], strides = [1, 1]} : vector<8x512xf32> to vector<8x128xf32>
    %290 = arith.negf %289 : vector<8x128xf32>
    %291 = math.exp %290 : vector<8x128xf32>
    %cst_141 = arith.constant 1.000000e+00 : f32
    %292 = vector.broadcast %cst_141 : f32 to vector<8x128xf32>
    %293 = arith.addf %292, %291 : vector<8x128xf32>
    %294 = arith.divf %292, %293 : vector<8x128xf32>
    %295 = vector.extract_strided_slice %282 {offsets = [0, 256], sizes = [8, 128], strides = [1, 1]} : vector<8x512xf32> to vector<8x128xf32>
    %296 = math.tanh %295 : vector<8x128xf32>
    %297 = vector.extract_strided_slice %282 {offsets = [0, 384], sizes = [8, 128], strides = [1, 1]} : vector<8x512xf32> to vector<8x128xf32>
    %298 = arith.negf %297 : vector<8x128xf32>
    %299 = math.exp %298 : vector<8x128xf32>
    %cst_142 = arith.constant 1.000000e+00 : f32
    %300 = vector.broadcast %cst_142 : f32 to vector<8x128xf32>
    %301 = arith.addf %300, %299 : vector<8x128xf32>
    %302 = arith.divf %300, %301 : vector<8x128xf32>
    %c0_143 = arith.constant 0 : index
    %c0_144 = arith.constant 0 : index
    %303 = vector.load %arg7[%c0_143, %c0_144] : memref<8x128xf32, #tpu.memory_space<vmem>>, vector<8x128xf32>
    %304 = arith.mulf %294, %303 : vector<8x128xf32>
    %305 = arith.mulf %288, %296 : vector<8x128xf32>
    %306 = arith.addf %304, %305 : vector<8x128xf32>
    %307 = math.tanh %306 : vector<8x128xf32>
    %308 = arith.mulf %302, %307 : vector<8x128xf32>
    %c0_145 = arith.constant 0 : index
    %c0_146 = arith.constant 0 : index
    %309 = vector.load %arg6[%c0_145, %c0_146] : memref<8x128xf32, #tpu.memory_space<vmem>>, vector<8x128xf32>
    tpu.vector_store %arg6[%c0_145, %c0_146], %308 {strides = array<i32>} : memref<8x128xf32, #tpu.memory_space<vmem>>, vector<8x128xf32>,
    %c0_147 = arith.constant 0 : index
    %c0_148 = arith.constant 0 : index
    %310 = vector.load %arg7[%c0_147, %c0_148] : memref<8x128xf32, #tpu.memory_space<vmem>>, vector<8x128xf32>
    tpu.vector_store %arg7[%c0_147, %c0_148], %306 {strides = array<i32>} : memref<8x128xf32, #tpu.memory_space<vmem>>, vector<8x128xf32>,
    %311 = arith.truncf %308 : vector<8x128xf32> to vector<8x128xbf16>
    %c7 = arith.constant 7 : index
    %c0_149 = arith.constant 0 : index
    %c0_150 = arith.constant 0 : index
    %312 = vector.load %arg4[%c7, %c0_149, %c0_150] : memref<9x8x128xbf16, #tpu.memory_space<vmem>>, vector<1x8x128xbf16>
    %313 = vector.shape_cast %312 : vector<1x8x128xbf16> to vector<8x128xbf16>
    %314 = vector.shape_cast %311 : vector<8x128xbf16> to vector<1x8x128xbf16>
    tpu.vector_store %arg4[%c7, %c0_149, %c0_150], %314 {strides = array<i32>} : memref<9x8x128xbf16, #tpu.memory_space<vmem>>, vector<1x8x128xbf16>,
    %c64 = arith.constant 64 : index
    %c0_151 = arith.constant 0 : index
    %315 = vector.load %arg5[%c64, %c0_151] : memref<72x512xf32, #tpu.memory_space<vmem>>, vector<8x512xf32>
    %c0_152 = arith.constant 0 : index
    %c0_153 = arith.constant 0 : index
    %316 = vector.load %arg6[%c0_152, %c0_153] : memref<8x128xf32, #tpu.memory_space<vmem>>, vector<8x128xf32>
    %317 = arith.truncf %316 : vector<8x128xf32> to vector<8x128xbf16>
    %c0_154 = arith.constant 0 : index
    %c0_155 = arith.constant 0 : index
    %318 = vector.load %arg2[%c0_154, %c0_155] : memref<128x512xbf16, #tpu.memory_space<vmem>>, vector<128x512xbf16>
    %cst_156 = arith.constant dense<0.000000e+00> : vector<8x512xf32>
    %319 = tpu.matmul %317, %318, %cst_156 {dimension_numbers = #tpu.dot_dimension_numbers<[1], [0], [0], [1], [0, 0, 1, 1], [], []>} : vector<8x128xbf16>, vector<128x512xbf16>, vector<8x512xf32> -> vector<8x512xf32>
    %320 = arith.addf %315, %319 : vector<8x512xf32>
    %321 = vector.extract_strided_slice %320 {offsets = [0, 0], sizes = [8, 128], strides = [1, 1]} : vector<8x512xf32> to vector<8x128xf32>
    %322 = arith.negf %321 : vector<8x128xf32>
    %323 = math.exp %322 : vector<8x128xf32>
    %cst_157 = arith.constant 1.000000e+00 : f32
    %324 = vector.broadcast %cst_157 : f32 to vector<8x128xf32>
    %325 = arith.addf %324, %323 : vector<8x128xf32>
    %326 = arith.divf %324, %325 : vector<8x128xf32>
    %327 = vector.extract_strided_slice %320 {offsets = [0, 128], sizes = [8, 128], strides = [1, 1]} : vector<8x512xf32> to vector<8x128xf32>
    %328 = arith.negf %327 : vector<8x128xf32>
    %329 = math.exp %328 : vector<8x128xf32>
    %cst_158 = arith.constant 1.000000e+00 : f32
    %330 = vector.broadcast %cst_158 : f32 to vector<8x128xf32>
    %331 = arith.addf %330, %329 : vector<8x128xf32>
    %332 = arith.divf %330, %331 : vector<8x128xf32>
    %333 = vector.extract_strided_slice %320 {offsets = [0, 256], sizes = [8, 128], strides = [1, 1]} : vector<8x512xf32> to vector<8x128xf32>
    %334 = math.tanh %333 : vector<8x128xf32>
    %335 = vector.extract_strided_slice %320 {offsets = [0, 384], sizes = [8, 128], strides = [1, 1]} : vector<8x512xf32> to vector<8x128xf32>
    %336 = arith.negf %335 : vector<8x128xf32>
    %337 = math.exp %336 : vector<8x128xf32>
    %cst_159 = arith.constant 1.000000e+00 : f32
    %338 = vector.broadcast %cst_159 : f32 to vector<8x128xf32>
    %339 = arith.addf %338, %337 : vector<8x128xf32>
    %340 = arith.divf %338, %339 : vector<8x128xf32>
    %c0_160 = arith.constant 0 : index
    %c0_161 = arith.constant 0 : index
    %341 = vector.load %arg7[%c0_160, %c0_161] : memref<8x128xf32, #tpu.memory_space<vmem>>, vector<8x128xf32>
    %342 = arith.mulf %332, %341 : vector<8x128xf32>
    %343 = arith.mulf %326, %334 : vector<8x128xf32>
    %344 = arith.addf %342, %343 : vector<8x128xf32>
    %345 = math.tanh %344 : vector<8x128xf32>
    %346 = arith.mulf %340, %345 : vector<8x128xf32>
    %c0_162 = arith.constant 0 : index
    %c0_163 = arith.constant 0 : index
    %347 = vector.load %arg6[%c0_162, %c0_163] : memref<8x128xf32, #tpu.memory_space<vmem>>, vector<8x128xf32>
    tpu.vector_store %arg6[%c0_162, %c0_163], %346 {strides = array<i32>} : memref<8x128xf32, #tpu.memory_space<vmem>>, vector<8x128xf32>,
    %c0_164 = arith.constant 0 : index
    %c0_165 = arith.constant 0 : index
    %348 = vector.load %arg7[%c0_164, %c0_165] : memref<8x128xf32, #tpu.memory_space<vmem>>, vector<8x128xf32>
    tpu.vector_store %arg7[%c0_164, %c0_165], %344 {strides = array<i32>} : memref<8x128xf32, #tpu.memory_space<vmem>>, vector<8x128xf32>,
    %349 = arith.truncf %346 : vector<8x128xf32> to vector<8x128xbf16>
    %c8_166 = arith.constant 8 : index
    %c0_167 = arith.constant 0 : index
    %c0_168 = arith.constant 0 : index
    %350 = vector.load %arg4[%c8_166, %c0_167, %c0_168] : memref<9x8x128xbf16, #tpu.memory_space<vmem>>, vector<1x8x128xbf16>
    %351 = vector.shape_cast %350 : vector<1x8x128xbf16> to vector<8x128xbf16>
    %352 = vector.shape_cast %349 : vector<8x128xbf16> to vector<1x8x128xbf16>
    tpu.vector_store %arg4[%c8_166, %c0_167, %c0_168], %352 {strides = array<i32>} : memref<9x8x128xbf16, #tpu.memory_space<vmem>>, vector<1x8x128xbf16>,
    return
  }
}

</mosaic_0001>

<llo_original>
// kernel: tpu_custom_call.1
$region0: #{tpu_custom_call.1}
  #allocation0 [shape = 'u32[]', space=smem, size = 0x4, offset = 0x4, fixed_abs, tag = 'smem constant byte address 0x4 - core index']
  #allocation1 [shape = 'u32[144,128]{1,0:T(1,128)}', space=vmem, size = 0x12000, scoped, tag = 'internal scratch']
  #allocation2 [shape = 'f32[72,512]{1,0:T(8,128)}', space=vmem, size = 0x24000, scoped, tag = 'scratch operand']
  #allocation3 [shape = 'f32[8,128]{1,0:T(8,128)}', space=vmem, size = 0x1000, scoped, tag = 'scratch operand']
  #allocation4 [shape = 'f32[8,128]{1,0:T(8,128)}', space=vmem, size = 0x1000, scoped, tag = 'scratch operand']
  %s0 = inlined_call_operand.vmem [shape: bf16[72,32], index: 0, kind: input, shape index: {}]
  %s1 = inlined_call_operand.hbm [shape: bf16[32,512], index: 1, kind: input, shape index: {}]
  %s2 = inlined_call_operand.hbm [shape: bf16[128,512], index: 2, kind: input, shape index: {}]
  %s3 = inlined_call_operand.vmem [shape: f32[1,512], index: 3, kind: input, shape index: {}]
  %s4 = inlined_call_operand.hbm [shape: bf16[9,8,128], index: 4, kind: output, shape index: {}]
  %s5 = sld [smem:[#allocation0]]
  $region34: #{tpu_custom_call.1} parent=0
    _
  %s7 = ssub.s32 1, %s5
  %s8 = scalar_select 0, %s7, %s5
  $region1: #{tpu_custom_call.1} parent=0
    #allocation5 [shape = 'u8[32768]{0}', space=vmem, size = 0x8000, scoped, tag = 'input window, operand 1, single buffered']
    #allocation6 [shape = 's32[1]{0}', space=sflag, size = 0x4, scoped, tag = 'scoped memory for tpu_custom_call.1']
    #allocation7 [shape = 's32[1]{0}', space=sflag, size = 0x4, scoped, tag = 'scoped memory for tpu_custom_call.1']
    #allocation8 [shape = 'u8[131072]{0}', space=vmem, size = 0x20000, scoped, tag = 'input window, operand 2, single buffered']
    #allocation9 [shape = 's32[1]{0}', space=sflag, size = 0x4, scoped, tag = 'scoped memory for tpu_custom_call.1']
    #allocation10 [shape = 'u8[18432]{0}', space=vmem, size = 0x4800, scoped, tag = 'output window, operand 0, single buffered']
    %9 = vsyncpa [#allocation6], 0
    %10 = vsyncpa [#allocation9], 0
    %11 = vsyncpa [#allocation7], 0
    // Predicated region
    $region2: #{tpu_custom_call.1} parent=1 // pred_check
      _
    $region3: #{tpu_custom_call.1} parent=1 // pred_check_branch
      %13 = sbr.rel (0) target = $region5
    $region4: #{tpu_custom_call.1} parent=1 // pred_region
      _
    $region5: #{tpu_custom_call.1} parent=1 // pred_fallthru
      _
    // Predicated region
    $region6: #{tpu_custom_call.1} parent=1 // pred_check
      _
    $region7: #{tpu_custom_call.1} parent=1 // pred_check_branch
      %15 = sbr.rel (0) target = $region9
    $region8: #{tpu_custom_call.1} parent=1 // pred_region
      %s17 = ssub.s32 1024, 1024
      %18 = vsyncadd [#allocation6], %s17
      %s19 = sshll.u32 [#allocation5], 4
      %s20 = int_to_ptr.vmem [resolvable:$true] %s19
      %25 = dma.hbm_to_vmem [thread:$0]  %s1, 1024, %s20, [#allocation6], 256, 256, 16
    $region9: #{tpu_custom_call.1} parent=1 // pred_fallthru
      _
    // Predicated region
    $region10: #{tpu_custom_call.1} parent=1 // pred_check
      _
    $region11: #{tpu_custom_call.1} parent=1 // pred_check_branch
      %27 = sbr.rel (0) target = $region13
    $region12: #{tpu_custom_call.1} parent=1 // pred_region
      %s29 = ssub.s32 4096, 4096
      %30 = vsyncadd [#allocation9], %s29
      %s31 = sshll.u32 [#allocation8], 4
      %s32 = int_to_ptr.vmem [resolvable:$true] %s31
      %37 = dma.hbm_to_vmem [thread:$0]  %s2, 4096, %s32, [#allocation9], 256, 256, 16
    $region13: #{tpu_custom_call.1} parent=1 // pred_fallthru
      _
    // Predicated region
    $region14: #{tpu_custom_call.1} parent=1 // pred_check
      _
    $region15: #{tpu_custom_call.1} parent=1 // pred_check_branch
      %39 = sbr.rel (0) target = $region17
    $region16: #{tpu_custom_call.1} parent=1 // pred_region
      _
    $region17: #{tpu_custom_call.1} parent=1 // pred_fallthru
      _
    // Predicated region
    $region18: #{tpu_custom_call.1} parent=1 // pred_check
      _
    $region19: #{tpu_custom_call.1} parent=1 // pred_check_branch
      %41 = sbr.rel (0) target = $region21
    $region20: #{tpu_custom_call.1} parent=1 // pred_region
      %42 = dma.done [#allocation6], 1024
    $region21: #{tpu_custom_call.1} parent=1 // pred_fallthru
      _
    // Predicated region
    $region22: #{tpu_custom_call.1} parent=1 // pred_check
      _
    $region23: #{tpu_custom_call.1} parent=1 // pred_check_branch
      %44 = sbr.rel (0) target = $region25
    $region24: #{tpu_custom_call.1} parent=1 // pred_region
      %45 = dma.done [#allocation9], 4096
    $region25: #{tpu_custom_call.1} parent=1 // pred_fallthru
      _
    %v47 = vld [vmem:[%s0] sm:$0xf]
    %v48 = vld [vmem:[%s0 + $0x4] sm:$0xf]
    %v49 = vld [vmem:[%s0 + $0x8] sm:$0xf]
    %v50 = vld [vmem:[%s0 + $0xc] sm:$0xf]
    %v51 = vld [vmem:[%s0 + $0x10] sm:$0xf]
    %v52 = vld [vmem:[%s0 + $0x14] sm:$0xf]
    %v53 = vld [vmem:[%s0 + $0x18] sm:$0xf]
    %v54 = vld [vmem:[%s0 + $0x1c] sm:$0xf]
    %v55 = vld [vmem:[%s0 + $0x20] sm:$0xf]
    %v56 = vld [vmem:[#allocation5] sm:$0xff]
    %v57 = vld [vmem:[#allocation5 + $0x8] sm:$0xff]
    %v58 = vld [vmem:[#allocation5 + $0x10] sm:$0xff]
    %v59 = vld [vmem:[#allocation5 + $0x18] sm:$0xff]
    %v60 = vld [vmem:[#allocation5 + $0x20] sm:$0xff]
    %v61 = vld [vmem:[#allocation5 + $0x28] sm:$0xff]
    %v62 = vld [vmem:[#allocation5 + $0x30] sm:$0xff]
    %v63 = vld [vmem:[#allocation5 + $0x38] sm:$0xff]
    %v64 = vld [vmem:[%s3] sm:$0xf]
    %v66 = vlaneseq
    %v67 = vshrl.u32 %v66, 7
    %v68 = vsub.s32 0, %v67
    %v69 = vrot.slane %v64, %v68
    %v70 = vlaneseq
    %v71 = vshrl.u32 %v70, 7
    %v72 = vsub.s32 1, %v71
    %v73 = vrot.slane %v64, %v72
    %v74 = vlaneseq
    %v75 = vshrl.u32 %v74, 7
    %v76 = vsub.s32 2, %v75
    %v77 = vrot.slane %v64, %v76
    %v78 = vlaneseq
    %v79 = vshrl.u32 %v78, 7
    %v80 = vsub.s32 3, %v79
    %v81 = vrot.slane %v64, %v80
    %v95 = vunpack.c.l.b16 %v47
    %v96 = vunpack.c.l.b16 %v48
    %v97 = vunpack.c.l.b16 %v49
    %v98 = vunpack.c.l.b16 %v50
    %v99 = vunpack.c.l.b16 %v51
    %v100 = vunpack.c.l.b16 %v52
    %v101 = vunpack.c.l.b16 %v53
    %v102 = vunpack.c.l.b16 %v54
    %v103 = vunpack.c.l.b16 %v55
    %v104 = vpack.c.b16 %v96, %v95
    %v105 = vpack.c.b16 %v98, %v97
    %v106 = vpack.c.b16 %v100, %v99
    %v107 = vpack.c.b16 %v102, %v101
    %v108 = vpack.c.b16 %v103, %v103
    %v117 = vunpack.c.l.b16 %v56
    %v118 = vunpack.c.h.b16 %v56
    %v119 = vunpack.c.l.b16 %v57
    %v120 = vunpack.c.h.b16 %v57
    %v121 = vunpack.c.l.b16 %v58
    %v122 = vunpack.c.h.b16 %v58
    %v123 = vunpack.c.l.b16 %v59
    %v124 = vunpack.c.h.b16 %v59
    %v125 = vunpack.c.l.b16 %v60
    %v126 = vunpack.c.h.b16 %v60
    %v127 = vunpack.c.l.b16 %v61
    %v128 = vunpack.c.h.b16 %v61
    %v129 = vunpack.c.l.b16 %v62
    %v130 = vunpack.c.h.b16 %v62
    %v131 = vunpack.c.l.b16 %v63
    %v132 = vunpack.c.h.b16 %v63
    %v133 = vpack.c.b16 %v121, %v117
    %v134 = vpack.c.b16 %v122, %v118
    %v135 = vpack.c.b16 %v123, %v119
    %v136 = vpack.c.b16 %v124, %v120
    %v137 = vpack.c.b16 %v129, %v125
    %v138 = vpack.c.b16 %v130, %v126
    %v139 = vpack.c.b16 %v131, %v127
    %v140 = vpack.c.b16 %v132, %v128
    %vm149 = vcmask 261120
    %v151 = vsel %vm149, %v104, 0
    %v154 = vsel %vm149, %v105, 0
    %v157 = vsel %vm149, %v106, 0
    %v160 = vsel %vm149, %v107, 0
    %v163 = vsel %vm149, %v108, 0
    %165 = vmatprep.subr.bf16.mxu0 %v134
    %166 = vmatpush1.bf16.msra.mxu0 %v133
    %167 = vmatprep.subr.bf16.mxu0 %v138
    %168 = vmatpush1.bf16.msra.mxu0 %v137
    %169 = vmatprep.subr.bf16.mxu0 0
    %170 = vmatpush1.bf16.msra.mxu0 0
    %171 = vmatprep.subr.bf16.mxu0 0
    %172 = vmatpush1.bf16.msra.mxu0 0
    %173 = vmatprep.subr.bf16.mxu0 0
    %174 = vmatpush1.bf16.msra.mxu0 0
    %175 = vmatprep.subr.bf16.mxu0 0
    %176 = vmatpush1.bf16.msra.mxu0 0
    %177 = vmatprep.subr.bf16.mxu0 0
    %178 = vmatpush1.bf16.msra.mxu0 0
    %179 = vmatprep.subr.bf16.mxu0 0
    %180 = vmatpush1.bf16.msra.mxu0 0
    %181 = vmatprep.subr.bf16.mxu0 0
    %182 = vmatpush1.bf16.msra.mxu0 0
    %183 = vmatprep.subr.bf16.mxu0 0
    %184 = vmatpush1.bf16.msra.mxu0 0
    %185 = vmatprep.subr.bf16.mxu0 0
    %186 = vmatpush1.bf16.msra.mxu0 0
    %187 = vmatprep.subr.bf16.mxu0 0
    %188 = vmatpush1.bf16.msra.mxu0 0
    %189 = vmatprep.subr.bf16.mxu0 0
    %190 = vmatpush1.bf16.msra.mxu0 0
    %191 = vmatprep.subr.bf16.mxu0 0
    %192 = vmatpush1.bf16.msra.mxu0 0
    %193 = vmatprep.subr.bf16.mxu0 0
    %194 = vmatpush1.bf16.msra.mxu0 0
    %195 = vmatprep.subr.bf16.mxu0 0
    %196 = vmatpush1.bf16.msra.mxu0 0
    %197 = vmatprep.mubr.bf16.mxu0 0
    %198 = vmatmul.mubr.bf16.gmra.mrb[0].mxu0 %v151
    %v199 = vpop.f32.mrb[0].mxu0
    %v200 = vadd.f32 %v69, %v199
    %v201 = vpop.f32.mrb[0].mxu0
    %v202 = vadd.f32 %v73, %v201
    %v203 = vpop.f32.mrb[0].mxu0
    %v204 = vadd.f32 %v69, %v203
    %v205 = vpop.f32.mrb[0].mxu0
    %v206 = vadd.f32 %v73, %v205
    %207 = vmatprep.mubr.bf16.mxu0 0
    %208 = vmatmul.mubr.bf16.gmra.mrb[0].mxu0 %v154
    %v209 = vpop.f32.mrb[0].mxu0
    %v210 = vadd.f32 %v69, %v209
    %v211 = vpop.f32.mrb[0].mxu0
    %v212 = vadd.f32 %v73, %v211
    %v213 = vpop.f32.mrb[0].mxu0
    %v214 = vadd.f32 %v69, %v213
    %v215 = vpop.f32.mrb[0].mxu0
    %v216 = vadd.f32 %v73, %v215
    %217 = vmatprep.mubr.bf16.mxu0 0
    %218 = vmatmul.mubr.bf16.gmra.mrb[0].mxu0 %v157
    %v219 = vpop.f32.mrb[0].mxu0
    %v220 = vadd.f32 %v69, %v219
    %v221 = vpop.f32.mrb[0].mxu0
    %v222 = vadd.f32 %v73, %v221
    %v223 = vpop.f32.mrb[0].mxu0
    %v224 = vadd.f32 %v69, %v223
    %v225 = vpop.f32.mrb[0].mxu0
    %v226 = vadd.f32 %v73, %v225
    %227 = vmatprep.mubr.bf16.mxu0 0
    %228 = vmatmul.mubr.bf16.gmra.mrb[0].mxu0 %v160
    %v229 = vpop.f32.mrb[0].mxu0
    %v230 = vadd.f32 %v69, %v229
    %v231 = vpop.f32.mrb[0].mxu0
    %v232 = vadd.f32 %v73, %v231
    %v233 = vpop.f32.mrb[0].mxu0
    %v234 = vadd.f32 %v69, %v233
    %v235 = vpop.f32.mrb[0].mxu0
    %v236 = vadd.f32 %v73, %v235
    %237 = vmatprep.mubr.bf16.mxu0 0
    %238 = vmatmul.mubr.bf16.gmra.mrb[0].mxu0 %v163
    %v239 = vpop.f32.mrb[0].mxu0
    %v240 = vadd.f32 %v69, %v239
    %v241 = vpop.f32.mrb[0].mxu0
    %v242 = vadd.f32 %v73, %v241
    %v243 = vpop.f32.mrb[0].mxu0
    %v244 = vpop.f32.mrb[0].mxu0
    %245 = vdwg.mxu0
    %246 = vmatprep.subr.bf16.mxu0 %v136
    %247 = vmatpush1.bf16.msra.mxu0 %v135
    %248 = vmatprep.subr.bf16.mxu0 %v140
    %249 = vmatpush1.bf16.msra.mxu0 %v139
    %250 = vmatprep.subr.bf16.mxu0 0
    %251 = vmatpush1.bf16.msra.mxu0 0
    %252 = vmatprep.subr.bf16.mxu0 0
    %253 = vmatpush1.bf16.msra.mxu0 0
    %254 = vmatprep.subr.bf16.mxu0 0
    %255 = vmatpush1.bf16.msra.mxu0 0
    %256 = vmatprep.subr.bf16.mxu0 0
    %257 = vmatpush1.bf16.msra.mxu0 0
    %258 = vmatprep.subr.bf16.mxu0 0
    %259 = vmatpush1.bf16.msra.mxu0 0
    %260 = vmatprep.subr.bf16.mxu0 0
    %261 = vmatpush1.bf16.msra.mxu0 0
    %262 = vmatprep.subr.bf16.mxu0 0
    %263 = vmatpush1.bf16.msra.mxu0 0
    %264 = vmatprep.subr.bf16.mxu0 0
    %265 = vmatpush1.bf16.msra.mxu0 0
    %266 = vmatprep.subr.bf16.mxu0 0
    %267 = vmatpush1.bf16.msra.mxu0 0
    %268 = vmatprep.subr.bf16.mxu0 0
    %269 = vmatpush1.bf16.msra.mxu0 0
    %270 = vmatprep.subr.bf16.mxu0 0
    %271 = vmatpush1.bf16.msra.mxu0 0
    %272 = vmatprep.subr.bf16.mxu0 0
    %273 = vmatpush1.bf16.msra.mxu0 0
    %274 = vmatprep.subr.bf16.mxu0 0
    %275 = vmatpush1.bf16.msra.mxu0 0
    %276 = vmatprep.subr.bf16.mxu0 0
    %277 = vmatpush1.bf16.msra.mxu0 0
    %278 = vmatprep.mubr.bf16.mxu0 0
    %279 = vmatmul.mubr.bf16.gmra.mrb[0].mxu0 %v151
    %v280 = vpop.f32.mrb[0].mxu0
    %v281 = vadd.f32 %v77, %v280
    %v282 = vpop.f32.mrb[0].mxu0
    %v283 = vadd.f32 %v81, %v282
    %v284 = vpop.f32.mrb[0].mxu0
    %v285 = vadd.f32 %v77, %v284
    %v286 = vpop.f32.mrb[0].mxu0
    %v287 = vadd.f32 %v81, %v286
    %288 = vmatprep.mubr.bf16.mxu0 0
    %289 = vmatmul.mubr.bf16.gmra.mrb[0].mxu0 %v154
    %v290 = vpop.f32.mrb[0].mxu0
    %v291 = vadd.f32 %v77, %v290
    %v292 = vpop.f32.mrb[0].mxu0
    %v293 = vadd.f32 %v81, %v292
    %v294 = vpop.f32.mrb[0].mxu0
    %v295 = vadd.f32 %v77, %v294
    %v296 = vpop.f32.mrb[0].mxu0
    %v297 = vadd.f32 %v81, %v296
    %298 = vmatprep.mubr.bf16.mxu0 0
    %299 = vmatmul.mubr.bf16.gmra.mrb[0].mxu0 %v157
    %v300 = vpop.f32.mrb[0].mxu0
    %v301 = vadd.f32 %v77, %v300
    %v302 = vpop.f32.mrb[0].mxu0
    %v303 = vadd.f32 %v81, %v302
    %v304 = vpop.f32.mrb[0].mxu0
    %v305 = vadd.f32 %v77, %v304
    %v306 = vpop.f32.mrb[0].mxu0
    %v307 = vadd.f32 %v81, %v306
    %308 = vmatprep.mubr.bf16.mxu0 0
    %309 = vmatmul.mubr.bf16.gmra.mrb[0].mxu0 %v160
    %v310 = vpop.f32.mrb[0].mxu0
    %v311 = vadd.f32 %v77, %v310
    %v312 = vpop.f32.mrb[0].mxu0
    %v313 = vadd.f32 %v81, %v312
    %v314 = vpop.f32.mrb[0].mxu0
    %v315 = vadd.f32 %v77, %v314
    %v316 = vpop.f32.mrb[0].mxu0
    %v317 = vadd.f32 %v81, %v316
    %318 = vmatprep.mubr.bf16.mxu0 0
    %319 = vmatmul.mubr.bf16.gmra.mrb[0].mxu0 %v163
    %v320 = vpop.f32.mrb[0].mxu0
    %v321 = vadd.f32 %v77, %v320
    %v322 = vpop.f32.mrb[0].mxu0
    %v323 = vadd.f32 %v81, %v322
    %v324 = vpop.f32.mrb[0].mxu0
    %v325 = vpop.f32.mrb[0].mxu0
    %326 = vdwg.mxu0
    %327 = vst [vmem:[#allocation2] sm:$0xff] %v200
    %328 = vst [vmem:[#allocation2 + $0x8] sm:$0xff] %v202
    %329 = vst [vmem:[#allocation2 + $0x10] sm:$0xff] %v281
    %330 = vst [vmem:[#allocation2 + $0x18] sm:$0xff] %v283
    %331 = vst [vmem:[#allocation2 + $0x20] sm:$0xff] %v204
    %332 = vst [vmem:[#allocation2 + $0x28] sm:$0xff] %v206
    %333 = vst [vmem:[#allocation2 + $0x30] sm:$0xff] %v285
    %334 = vst [vmem:[#allocation2 + $0x38] sm:$0xff] %v287
    %335 = vst [vmem:[#allocation2 + $0x40] sm:$0xff] %v210
    %336 = vst [vmem:[#allocation2 + $0x48] sm:$0xff] %v212
    %337 = vst [vmem:[#allocation2 + $0x50] sm:$0xff] %v291
    %338 = vst [vmem:[#allocation2 + $0x58] sm:$0xff] %v293
    %339 = vst [vmem:[#allocation2 + $0x60] sm:$0xff] %v214
    %340 = vst [vmem:[#allocation2 + $0x68] sm:$0xff] %v216
    %341 = vst [vmem:[#allocation2 + $0x70] sm:$0xff] %v295
    %342 = vst [vmem:[#allocation2 + $0x78] sm:$0xff] %v297
    %343 = vst [vmem:[#allocation2 + $0x80] sm:$0xff] %v220
    %344 = vst [vmem:[#allocation2 + $0x88] sm:$0xff] %v222
    %345 = vst [vmem:[#allocation2 + $0x90] sm:$0xff] %v301
    %346 = vst [vmem:[#allocation2 + $0x98] sm:$0xff] %v303
    %347 = vst [vmem:[#allocation2 + $0xa0] sm:$0xff] %v224
    %348 = vst [vmem:[#allocation2 + $0xa8] sm:$0xff] %v226
    %349 = vst [vmem:[#allocation2 + $0xb0] sm:$0xff] %v305
    %350 = vst [vmem:[#allocation2 + $0xb8] sm:$0xff] %v307
    %351 = vst [vmem:[#allocation2 + $0xc0] sm:$0xff] %v230
    %352 = vst [vmem:[#allocation2 + $0xc8] sm:$0xff] %v232
    %353 = vst [vmem:[#allocation2 + $0xd0] sm:$0xff] %v311
    %354 = vst [vmem:[#allocation2 + $0xd8] sm:$0xff] %v313
    %355 = vst [vmem:[#allocation2 + $0xe0] sm:$0xff] %v234
    %356 = vst [vmem:[#allocation2 + $0xe8] sm:$0xff] %v236
    %357 = vst [vmem:[#allocation2 + $0xf0] sm:$0xff] %v315
    %358 = vst [vmem:[#allocation2 + $0xf8] sm:$0xff] %v317
    %359 = vst [vmem:[#allocation2 + $0x100] sm:$0xff] %v240
    %360 = vst [vmem:[#allocation2 + $0x108] sm:$0xff] %v242
    %361 = vst [vmem:[#allocation2 + $0x110] sm:$0xff] %v321
    %362 = vst [vmem:[#allocation2 + $0x118] sm:$0xff] %v323
    %363 = vst [vmem:[#allocation3] sm:$0xff] 0.0
    %364 = vst [vmem:[#allocation4] sm:$0xff] 0.0
    %v365 = vld [vmem:[#allocation2] sm:$0xff]
    %v366 = vld [vmem:[#allocation2 + $0x8] sm:$0xff]
    %v367 = vld [vmem:[#allocation2 + $0x10] sm:$0xff]
    %v368 = vld [vmem:[#allocation2 + $0x18] sm:$0xff]
    %v369 = vld [vmem:[#allocation3] sm:$0xff]
    %v370 = vpack.c.bf16 %v369, %v369
    %v371 = vld [vmem:[#allocation8] sm:$0xff]
    %v372 = vld [vmem:[#allocation8 + $0x8] sm:$0xff]
    %v373 = vld [vmem:[#allocation8 + $0x10] sm:$0xff]
    %v374 = vld [vmem:[#allocation8 + $0x18] sm:$0xff]
    %v375 = vld [vmem:[#allocation8 + $0x20] sm:$0xff]
    %v376 = vld [vmem:[#allocation8 + $0x28] sm:$0xff]
    %v377 = vld [vmem:[#allocation8 + $0x30] sm:$0xff]
    %v378 = vld [vmem:[#allocation8 + $0x38] sm:$0xff]
    %v379 = vld [vmem:[#allocation8 + $0x40] sm:$0xff]
    %v380 = vld [vmem:[#allocation8 + $0x48] sm:$0xff]
    %v381 = vld [vmem:[#allocation8 + $0x50] sm:$0xff]
    %v382 = vld [vmem:[#allocation8 + $0x58] sm:$0xff]
    %v383 = vld [vmem:[#allocation8 + $0x60] sm:$0xff]
    %v384 = vld [vmem:[#allocation8 + $0x68] sm:$0xff]
    %v385 = vld [vmem:[#allocation8 + $0x70] sm:$0xff]
    %v386 = vld [vmem:[#allocation8 + $0x78] sm:$0xff]
    %v387 = vld [vmem:[#allocation8 + $0x80] sm:$0xff]
    %v388 = vld [vmem:[#allocation8 + $0x88] sm:$0xff]
    %v389 = vld [vmem:[#allocation8 + $0x90] sm:$0xff]
    %v390 = vld [vmem:[#allocation8 + $0x98] sm:$0xff]
    %v391 = vld [vmem:[#allocation8 + $0xa0] sm:$0xff]
    %v392 = vld [vmem:[#allocation8 + $0xa8] sm:$0xff]
    %v393 = vld [vmem:[#allocation8 + $0xb0] sm:$0xff]
    %v394 = vld [vmem:[#allocation8 + $0xb8] sm:$0xff]
    %v395 = vld [vmem:[#allocation8 + $0xc0] sm:$0xff]
    %v396 = vld [vmem:[#allocation8 + $0xc8] sm:$0xff]
    %v397 = vld [vmem:[#allocation8 + $0xd0] sm:$0xff]
    %v398 = vld [vmem:[#allocation8 + $0xd8] sm:$0xff]
    %v399 = vld [vmem:[#allocation8 + $0xe0] sm:$0xff]
    %v400 = vld [vmem:[#allocation8 + $0xe8] sm:$0xff]
    %v401 = vld [vmem:[#allocation8 + $0xf0] sm:$0xff]
    %v402 = vld [vmem:[#allocation8 + $0xf8] sm:$0xff]
    %v435 = vunpack.c.l.b16 %v371
    %v436 = vunpack.c.h.b16 %v371
    %v437 = vunpack.c.l.b16 %v372
    %v438 = vunpack.c.h.b16 %v372
    %v439 = vunpack.c.l.b16 %v373
    %v440 = vunpack.c.h.b16 %v373
    %v441 = vunpack.c.l.b16 %v374
    %v442 = vunpack.c.h.b16 %v374
    %v443 = vunpack.c.l.b16 %v375
    %v444 = vunpack.c.h.b16 %v375
    %v445 = vunpack.c.l.b16 %v376
    %v446 = vunpack.c.h.b16 %v376
    %v447 = vunpack.c.l.b16 %v377
    %v448 = vunpack.c.h.b16 %v377
    %v449 = vunpack.c.l.b16 %v378
    %v450 = vunpack.c.h.b16 %v378
    %v451 = vunpack.c.l.b16 %v379
    %v452 = vunpack.c.h.b16 %v379
    %v453 = vunpack.c.l.b16 %v380
    %v454 = vunpack.c.h.b16 %v380
    %v455 = vunpack.c.l.b16 %v381
    %v456 = vunpack.c.h.b16 %v381
    %v457 = vunpack.c.l.b16 %v382
    %v458 = vunpack.c.h.b16 %v382
    %v459 = vunpack.c.l.b16 %v383
    %v460 = vunpack.c.h.b16 %v383
    %v461 = vunpack.c.l.b16 %v384
    %v462 = vunpack.c.h.b16 %v384
    %v463 = vunpack.c.l.b16 %v385
    %v464 = vunpack.c.h.b16 %v385
    %v465 = vunpack.c.l.b16 %v386
    %v466 = vunpack.c.h.b16 %v386
    %v467 = vunpack.c.l.b16 %v387
    %v468 = vunpack.c.h.b16 %v387
    %v469 = vunpack.c.l.b16 %v388
    %v470 = vunpack.c.h.b16 %v388
    %v471 = vunpack.c.l.b16 %v389
    %v472 = vunpack.c.h.b16 %v389
    %v473 = vunpack.c.l.b16 %v390
    %v474 = vunpack.c.h.b16 %v390
    %v475 = vunpack.c.l.b16 %v391
    %v476 = vunpack.c.h.b16 %v391
    %v477 = vunpack.c.l.b16 %v392
    %v478 = vunpack.c.h.b16 %v392
    %v479 = vunpack.c.l.b16 %v393
    %v480 = vunpack.c.h.b16 %v393
    %v481 = vunpack.c.l.b16 %v394
    %v482 = vunpack.c.h.b16 %v394
    %v483 = vunpack.c.l.b16 %v395
    %v484 = vunpack.c.h.b16 %v395
    %v485 = vunpack.c.l.b16 %v396
    %v486 = vunpack.c.h.b16 %v396
    %v487 = vunpack.c.l.b16 %v397
    %v488 = vunpack.c.h.b16 %v397
    %v489 = vunpack.c.l.b16 %v398
    %v490 = vunpack.c.h.b16 %v398
    %v491 = vunpack.c.l.b16 %v399
    %v492 = vunpack.c.h.b16 %v399
    %v493 = vunpack.c.l.b16 %v400
    %v494 = vunpack.c.h.b16 %v400
    %v495 = vunpack.c.l.b16 %v401
    %v496 = vunpack.c.h.b16 %v401
    %v497 = vunpack.c.l.b16 %v402
    %v498 = vunpack.c.h.b16 %v402
    %v499 = vpack.c.b16 %v439, %v435
    %v500 = vpack.c.b16 %v440, %v436
    %v501 = vpack.c.b16 %v441, %v437
    %v502 = vpack.c.b16 %v442, %v438
    %v503 = vpack.c.b16 %v447, %v443
    %v504 = vpack.c.b16 %v448, %v444
    %v505 = vpack.c.b16 %v449, %v445
    %v506 = vpack.c.b16 %v450, %v446
    %v507 = vpack.c.b16 %v455, %v451
    %v508 = vpack.c.b16 %v456, %v452
    %v509 = vpack.c.b16 %v457, %v453
    %v510 = vpack.c.b16 %v458, %v454
    %v511 = vpack.c.b16 %v463, %v459
    %v512 = vpack.c.b16 %v464, %v460
    %v513 = vpack.c.b16 %v465, %v461
    %v514 = vpack.c.b16 %v466, %v462
    %v515 = vpack.c.b16 %v471, %v467
    %v516 = vpack.c.b16 %v472, %v468
    %v517 = vpack.c.b16 %v473, %v469
    %v518 = vpack.c.b16 %v474, %v470
    %v519 = vpack.c.b16 %v479, %v475
    %v520 = vpack.c.b16 %v480, %v476
    %v521 = vpack.c.b16 %v481, %v477
    %v522 = vpack.c.b16 %v482, %v478
    %v523 = vpack.c.b16 %v487, %v483
    %v524 = vpack.c.b16 %v488, %v484
    %v525 = vpack.c.b16 %v489, %v485
    %v526 = vpack.c.b16 %v490, %v486
    %v527 = vpack.c.b16 %v495, %v491
    %v528 = vpack.c.b16 %v496, %v492
    %v529 = vpack.c.b16 %v497, %v493
    %v530 = vpack.c.b16 %v498, %v494
    %563 = vmatprep.subr.bf16.mxu0 %v500
    %564 = vmatpush1.bf16.msra.mxu0 %v499
    %565 = vmatprep.subr.bf16.mxu0 %v504
    %566 = vmatpush1.bf16.msra.mxu0 %v503
    %567 = vmatprep.subr.bf16.mxu0 %v508
    %568 = vmatpush1.bf16.msra.mxu0 %v507
    %569 = vmatprep.subr.bf16.mxu0 %v512
    %570 = vmatpush1.bf16.msra.mxu0 %v511
    %571 = vmatprep.subr.bf16.mxu0 %v516
    %572 = vmatpush1.bf16.msra.mxu0 %v515
    %573 = vmatprep.subr.bf16.mxu0 %v520
    %574 = vmatpush1.bf16.msra.mxu0 %v519
    %575 = vmatprep.subr.bf16.mxu0 %v524
    %576 = vmatpush1.bf16.msra.mxu0 %v523
    %577 = vmatprep.subr.bf16.mxu0 %v528
    %578 = vmatpush1.bf16.msra.mxu0 %v527
    %579 = vmatprep.subr.bf16.mxu0 0
    %580 = vmatpush1.bf16.msra.mxu0 0
    %581 = vmatprep.subr.bf16.mxu0 0
    %582 = vmatpush1.bf16.msra.mxu0 0
    %583 = vmatprep.subr.bf16.mxu0 0
    %584 = vmatpush1.bf16.msra.mxu0 0
    %585 = vmatprep.subr.bf16.mxu0 0
    %586 = vmatpush1.bf16.msra.mxu0 0
    %587 = vmatprep.subr.bf16.mxu0 0
    %588 = vmatpush1.bf16.msra.mxu0 0
    %589 = vmatprep.subr.bf16.mxu0 0
    %590 = vmatpush1.bf16.msra.mxu0 0
    %591 = vmatprep.subr.bf16.mxu0 0
    %592 = vmatpush1.bf16.msra.mxu0 0
    %593 = vmatprep.subr.bf16.mxu0 0
    %594 = vmatpush1.bf16.msra.mxu0 0
    %595 = vmatprep.mubr.bf16.mxu0 0
    %596 = vmatmul.mubr.bf16.gmra.mrb[0].mxu0 %v370
    %v597 = vpop.f32.mrb[0].mxu0
    %v598 = vadd.f32 0.0, %v597
    %v599 = vpop.f32.mrb[0].mxu0
    %v600 = vadd.f32 0.0, %v599
    %v601 = vpop.f32.mrb[0].mxu0
    %v602 = vpop.f32.mrb[0].mxu0
    %603 = vdwg.mxu0
    %604 = vmatprep.subr.bf16.mxu0 %v502
    %605 = vmatpush1.bf16.msra.mxu0 %v501
    %606 = vmatprep.subr.bf16.mxu0 %v506
    %607 = vmatpush1.bf16.msra.mxu0 %v505
    %608 = vmatprep.subr.bf16.mxu0 %v510
    %609 = vmatpush1.bf16.msra.mxu0 %v509
    %610 = vmatprep.subr.bf16.mxu0 %v514
    %611 = vmatpush1.bf16.msra.mxu0 %v513
    %612 = vmatprep.subr.bf16.mxu0 %v518
    %613 = vmatpush1.bf16.msra.mxu0 %v517
    %614 = vmatprep.subr.bf16.mxu0 %v522
    %615 = vmatpush1.bf16.msra.mxu0 %v521
    %616 = vmatprep.subr.bf16.mxu0 %v526
    %617 = vmatpush1.bf16.msra.mxu0 %v525
    %618 = vmatprep.subr.bf16.mxu0 %v530
    %619 = vmatpush1.bf16.msra.mxu0 %v529
    %620 = vmatprep.subr.bf16.mxu0 0
    %621 = vmatpush1.bf16.msra.mxu0 0
    %622 = vmatprep.subr.bf16.mxu0 0
    %623 = vmatpush1.bf16.msra.mxu0 0
    %624 = vmatprep.subr.bf16.mxu0 0
    %625 = vmatpush1.bf16.msra.mxu0 0
    %626 = vmatprep.subr.bf16.mxu0 0
    %627 = vmatpush1.bf16.msra.mxu0 0
    %628 = vmatprep.subr.bf16.mxu0 0
    %629 = vmatpush1.bf16.msra.mxu0 0
    %630 = vmatprep.subr.bf16.mxu0 0
    %631 = vmatpush1.bf16.msra.mxu0 0
    %632 = vmatprep.subr.bf16.mxu0 0
    %633 = vmatpush1.bf16.msra.mxu0 0
    %634 = vmatprep.subr.bf16.mxu0 0
    %635 = vmatpush1.bf16.msra.mxu0 0
    %636 = vmatprep.mubr.bf16.mxu0 0
    %637 = vmatmul.mubr.bf16.gmra.mrb[0].mxu0 %v370
    %v638 = vpop.f32.mrb[0].mxu0
    %v639 = vadd.f32 0.0, %v638
    %v640 = vpop.f32.mrb[0].mxu0
    %v641 = vadd.f32 0.0, %v640
    %v642 = vpop.f32.mrb[0].mxu0
    %v643 = vpop.f32.mrb[0].mxu0
    %644 = vdwg.mxu0
    %v645 = vadd.f32 %v365, %v598
    %v646 = vadd.f32 %v366, %v600
    %v647 = vadd.f32 %v367, %v639
    %v648 = vadd.f32 %v368, %v641
    %v649 = vxor.u32 %v645, 2147483648
    %v650 = vmul.f32 %v649, 1.442695
    %v651 = vpow.pop %v650
    %v652 = vadd.f32 %v651, 1.0
    %v653 = vrcp.pop %v652
    %v654 = vmul.f32 1.0, %v653
    %v655 = vxor.u32 %v646, 2147483648
    %v656 = vmul.f32 %v655, 1.442695
    %v657 = vpow.pop %v656
    %v658 = vadd.f32 %v657, 1.0
    %v659 = vrcp.pop %v658
    %v660 = vmul.f32 1.0, %v659
    %v661 = vtanh.pop %v647
    %v662 = vxor.u32 %v648, 2147483648
    %v663 = vmul.f32 %v662, 1.442695
    %v664 = vpow.pop %v663
    %v665 = vadd.f32 %v664, 1.0
    %v666 = vrcp.pop %v665
    %v667 = vmul.f32 1.0, %v666
    %v668 = vld [vmem:[#allocation4] sm:$0xff]
    %v669 = vmul.f32 %v660, %v668
    %v670 = vmul.f32 %v654, %v661
    %v671 = vadd.f32 %v669, %v670
    %v672 = vtanh.pop %v671
    %v673 = vmul.f32 %v667, %v672
    %674 = vst [vmem:[#allocation3] sm:$0xff] %v673
    %675 = vst [vmem:[#allocation4] sm:$0xff] %v671
    %v676 = vpack.c.bf16 %v673, %v673
    %677 = vst [vmem:[#allocation10] sm:$0xf] %v676
    %v678 = vld [vmem:[#allocation2 + $0x20] sm:$0xff]
    %v679 = vld [vmem:[#allocation2 + $0x28] sm:$0xff]
    %v680 = vld [vmem:[#allocation2 + $0x30] sm:$0xff]
    %v681 = vld [vmem:[#allocation2 + $0x38] sm:$0xff]
    %v682 = vld [vmem:[#allocation3] sm:$0xff]
    %v683 = vpack.c.bf16 %v682, %v682
    %v684 = vld [vmem:[#allocation8] sm:$0xff]
    %v685 = vld [vmem:[#allocation8 + $0x8] sm:$0xff]
    %v686 = vld [vmem:[#allocation8 + $0x10] sm:$0xff]
    %v687 = vld [vmem:[#allocation8 + $0x18] sm:$0xff]
    %v688 = vld [vmem:[#allocation8 + $0x20] sm:$0xff]
    %v689 = vld [vmem:[#allocation8 + $0x28] sm:$0xff]
    %v690 = vld [vmem:[#allocation8 + $0x30] sm:$0xff]
    %v691 = vld [vmem:[#allocation8 + $0x38] sm:$0xff]
    %v692 = vld [vmem:[#allocation8 + $0x40] sm:$0xff]
    %v693 = vld [vmem:[#allocation8 + $0x48] sm:$0xff]
    %v694 = vld [vmem:[#allocation8 + $0x50] sm:$0xff]
    %v695 = vld [vmem:[#allocation8 + $0x58] sm:$0xff]
    %v696 = vld [vmem:[#allocation8 + $0x60] sm:$0xff]
    %v697 = vld [vmem:[#allocation8 + $0x68] sm:$0xff]
    %v698 = vld [vmem:[#allocation8 + $0x70] sm:$0xff]
    %v699 = vld [vmem:[#allocation8 + $0x78] sm:$0xff]
    %v700 = vld [vmem:[#allocation8 + $0x80] sm:$0xff]
    %v701 = vld [vmem:[#allocation8 + $0x88] sm:$0xff]
    %v702 = vld [vmem:[#allocation8 + $0x90] sm:$0xff]
    %v703 = vld [vmem:[#allocation8 + $0x98] sm:$0xff]
    %v704 = vld [vmem:[#allocation8 + $0xa0] sm:$0xff]
    %v705 = vld [vmem:[#allocation8 + $0xa8] sm:$0xff]
    %v706 = vld [vmem:[#allocation8 + $0xb0] sm:$0xff]
    %v707 = vld [vmem:[#allocation8 + $0xb8] sm:$0xff]
    %v708 = vld [vmem:[#allocation8 + $0xc0] sm:$0xff]
    %v709 = vld [vmem:[#allocation8 + $0xc8] sm:$0xff]
    %v710 = vld [vmem:[#allocation8 + $0xd0] sm:$0xff]
    %v711 = vld [vmem:[#allocation8 + $0xd8] sm:$0xff]
    %v712 = vld [vmem:[#allocation8 + $0xe0] sm:$0xff]
    %v713 = vld [vmem:[#allocation8 + $0xe8] sm:$0xff]
    %v714 = vld [vmem:[#allocation8 + $0xf0] sm:$0xff]
    %v715 = vld [vmem:[#allocation8 + $0xf8] sm:$0xff]
    %v748 = vunpack.c.l.b16 %v684
    %v749 = vunpack.c.h.b16 %v684
    %v750 = vunpack.c.l.b16 %v685
    %v751 = vunpack.c.h.b16 %v685
    %v752 = vunpack.c.l.b16 %v686
    %v753 = vunpack.c.h.b16 %v686
    %v754 = vunpack.c.l.b16 %v687
    %v755 = vunpack.c.h.b16 %v687
    %v756 = vunpack.c.l.b16 %v688
    %v757 = vunpack.c.h.b16 %v688
    %v758 = vunpack.c.l.b16 %v689
    %v759 = vunpack.c.h.b16 %v689
    %v760 = vunpack.c.l.b16 %v690
    %v761 = vunpack.c.h.b16 %v690
    %v762 = vunpack.c.l.b16 %v691
    %v763 = vunpack.c.h.b16 %v691
    %v764 = vunpack.c.l.b16 %v692
    %v765 = vunpack.c.h.b16 %v692
    %v766 = vunpack.c.l.b16 %v693
    %v767 = vunpack.c.h.b16 %v693
    %v768 = vunpack.c.l.b16 %v694
    %v769 = vunpack.c.h.b16 %v694
    %v770 = vunpack.c.l.b16 %v695
    %v771 = vunpack.c.h.b16 %v695
    %v772 = vunpack.c.l.b16 %v696
    %v773 = vunpack.c.h.b16 %v696
    %v774 = vunpack.c.l.b16 %v697
    %v775 = vunpack.c.h.b16 %v697
    %v776 = vunpack.c.l.b16 %v698
    %v777 = vunpack.c.h.b16 %v698
    %v778 = vunpack.c.l.b16 %v699
    %v779 = vunpack.c.h.b16 %v699
    %v780 = vunpack.c.l.b16 %v700
    %v781 = vunpack.c.h.b16 %v700
    %v782 = vunpack.c.l.b16 %v701
    %v783 = vunpack.c.h.b16 %v701
    %v784 = vunpack.c.l.b16 %v702
    %v785 = vunpack.c.h.b16 %v702
    %v786 = vunpack.c.l.b16 %v703
    %v787 = vunpack.c.h.b16 %v703
    %v788 = vunpack.c.l.b16 %v704
    %v789 = vunpack.c.h.b16 %v704
    %v790 = vunpack.c.l.b16 %v705
    %v791 = vunpack.c.h.b16 %v705
    %v792 = vunpack.c.l.b16 %v706
    %v793 = vunpack.c.h.b16 %v706
    %v794 = vunpack.c.l.b16 %v707
    %v795 = vunpack.c.h.b16 %v707
    %v796 = vunpack.c.l.b16 %v708
    %v797 = vunpack.c.h.b16 %v708
    %v798 = vunpack.c.l.b16 %v709
    %v799 = vunpack.c.h.b16 %v709
    %v800 = vunpack.c.l.b16 %v710
    %v801 = vunpack.c.h.b16 %v710
    %v802 = vunpack.c.l.b16 %v711
    %v803 = vunpack.c.h.b16 %v711
    %v804 = vunpack.c.l.b16 %v712
    %v805 = vunpack.c.h.b16 %v712
    %v806 = vunpack.c.l.b16 %v713
    %v807 = vunpack.c.h.b16 %v713
    %v808 = vunpack.c.l.b16 %v714
    %v809 = vunpack.c.h.b16 %v714
    %v810 = vunpack.c.l.b16 %v715
    %v811 = vunpack.c.h.b16 %v715
    %v812 = vpack.c.b16 %v752, %v748
    %v813 = vpack.c.b16 %v753, %v749
    %v814 = vpack.c.b16 %v754, %v750
    %v815 = vpack.c.b16 %v755, %v751
    %v816 = vpack.c.b16 %v760, %v756
    %v817 = vpack.c.b16 %v761, %v757
    %v818 = vpack.c.b16 %v762, %v758
    %v819 = vpack.c.b16 %v763, %v759
    %v820 = vpack.c.b16 %v768, %v764
    %v821 = vpack.c.b16 %v769, %v765
    %v822 = vpack.c.b16 %v770, %v766
    %v823 = vpack.c.b16 %v771, %v767
    %v824 = vpack.c.b16 %v776, %v772
    %v825 = vpack.c.b16 %v777, %v773
    %v826 = vpack.c.b16 %v778, %v774
    %v827 = vpack.c.b16 %v779, %v775
    %v828 = vpack.c.b16 %v784, %v780
    %v829 = vpack.c.b16 %v785, %v781
    %v830 = vpack.c.b16 %v786, %v782
    %v831 = vpack.c.b16 %v787, %v783
    %v832 = vpack.c.b16 %v792, %v788
    %v833 = vpack.c.b16 %v793, %v789
    %v834 = vpack.c.b16 %v794, %v790
    %v835 = vpack.c.b16 %v795, %v791
    %v836 = vpack.c.b16 %v800, %v796
    %v837 = vpack.c.b16 %v801, %v797
    %v838 = vpack.c.b16 %v802, %v798
    %v839 = vpack.c.b16 %v803, %v799
    %v840 = vpack.c.b16 %v808, %v804
    %v841 = vpack.c.b16 %v809, %v805
    %v842 = vpack.c.b16 %v810, %v806
    %v843 = vpack.c.b16 %v811, %v807
    %876 = vmatprep.subr.bf16.mxu0 %v813
    %877 = vmatpush1.bf16.msra.mxu0 %v812
    %878 = vmatprep.subr.bf16.mxu0 %v817
    %879 = vmatpush1.bf16.msra.mxu0 %v816
    %880 = vmatprep.subr.bf16.mxu0 %v821
    %881 = vmatpush1.bf16.msra.mxu0 %v820
    %882 = vmatprep.subr.bf16.mxu0 %v825
    %883 = vmatpush1.bf16.msra.mxu0 %v824
    %884 = vmatprep.subr.bf16.mxu0 %v829
    %885 = vmatpush1.bf16.msra.mxu0 %v828
    %886 = vmatprep.subr.bf16.mxu0 %v833
    %887 = vmatpush1.bf16.msra.mxu0 %v832
    %888 = vmatprep.subr.bf16.mxu0 %v837
    %889 = vmatpush1.bf16.msra.mxu0 %v836
    %890 = vmatprep.subr.bf16.mxu0 %v841
    %891 = vmatpush1.bf16.msra.mxu0 %v840
    %892 = vmatprep.subr.bf16.mxu0 0
    %893 = vmatpush1.bf16.msra.mxu0 0
    %894 = vmatprep.subr.bf16.mxu0 0
    %895 = vmatpush1.bf16.msra.mxu0 0
    %896 = vmatprep.subr.bf16.mxu0 0
    %897 = vmatpush1.bf16.msra.mxu0 0
    %898 = vmatprep.subr.bf16.mxu0 0
    %899 = vmatpush1.bf16.msra.mxu0 0
    %900 = vmatprep.subr.bf16.mxu0 0
    %901 = vmatpush1.bf16.msra.mxu0 0
    %902 = vmatprep.subr.bf16.mxu0 0
    %903 = vmatpush1.bf16.msra.mxu0 0
    %904 = vmatprep.subr.bf16.mxu0 0
    %905 = vmatpush1.bf16.msra.mxu0 0
    %906 = vmatprep.subr.bf16.mxu0 0
    %907 = vmatpush1.bf16.msra.mxu0 0
    %908 = vmatprep.mubr.bf16.mxu0 0
    %909 = vmatmul.mubr.bf16.gmra.mrb[0].mxu0 %v683
    %v910 = vpop.f32.mrb[0].mxu0
    %v911 = vadd.f32 0.0, %v910
    %v912 = vpop.f32.mrb[0].mxu0
    %v913 = vadd.f32 0.0, %v912
    %v914 = vpop.f32.mrb[0].mxu0
    %v915 = vpop.f32.mrb[0].mxu0
    %916 = vdwg.mxu0
    %917 = vmatprep.subr.bf16.mxu0 %v815
    %918 = vmatpush1.bf16.msra.mxu0 %v814
    %919 = vmatprep.subr.bf16.mxu0 %v819
    %920 = vmatpush1.bf16.msra.mxu0 %v818
    %921 = vmatprep.subr.bf16.mxu0 %v823
    %922 = vmatpush1.bf16.msra.mxu0 %v822
    %923 = vmatprep.subr.bf16.mxu0 %v827
    %924 = vmatpush1.bf16.msra.mxu0 %v826
    %925 = vmatprep.subr.bf16.mxu0 %v831
    %926 = vmatpush1.bf16.msra.mxu0 %v830
    %927 = vmatprep.subr.bf16.mxu0 %v835
    %928 = vmatpush1.bf16.msra.mxu0 %v834
    %929 = vmatprep.subr.bf16.mxu0 %v839
    %930 = vmatpush1.bf16.msra.mxu0 %v838
    %931 = vmatprep.subr.bf16.mxu0 %v843
    %932 = vmatpush1.bf16.msra.mxu0 %v842
    %933 = vmatprep.subr.bf16.mxu0 0
    %934 = vmatpush1.bf16.msra.mxu0 0
    %935 = vmatprep.subr.bf16.mxu0 0
    %936 = vmatpush1.bf16.msra.mxu0 0
    %937 = vmatprep.subr.bf16.mxu0 0
    %938 = vmatpush1.bf16.msra.mxu0 0
    %939 = vmatprep.subr.bf16.mxu0 0
    %940 = vmatpush1.bf16.msra.mxu0 0
    %941 = vmatprep.subr.bf16.mxu0 0
    %942 = vmatpush1.bf16.msra.mxu0 0
    %943 = vmatprep.subr.bf16.mxu0 0
    %944 = vmatpush1.bf16.msra.mxu0 0
    %945 = vmatprep.subr.bf16.mxu0 0
    %946 = vmatpush1.bf16.msra.mxu0 0
    %947 = vmatprep.subr.bf16.mxu0 0
    %948 = vmatpush1.bf16.msra.mxu0 0
    %949 = vmatprep.mubr.bf16.mxu0 0
    %950 = vmatmul.mubr.bf16.gmra.mrb[0].mxu0 %v683
    %v951 = vpop.f32.mrb[0].mxu0
    %v952 = vadd.f32 0.0, %v951
    %v953 = vpop.f32.mrb[0].mxu0
    %v954 = vadd.f32 0.0, %v953
    %v955 = vpop.f32.mrb[0].mxu0
    %v956 = vpop.f32.mrb[0].mxu0
    %957 = vdwg.mxu0
    %v958 = vadd.f32 %v678, %v911
    %v959 = vadd.f32 %v679, %v913
    %v960 = vadd.f32 %v680, %v952
    %v961 = vadd.f32 %v681, %v954
    %v962 = vxor.u32 %v958, 2147483648
    %v963 = vmul.f32 %v962, 1.442695
    %v964 = vpow.pop %v963
    %v965 = vadd.f32 %v964, 1.0
    %v966 = vrcp.pop %v965
    %v967 = vmul.f32 1.0, %v966
    %v968 = vxor.u32 %v959, 2147483648
    %v969 = vmul.f32 %v968, 1.442695
    %v970 = vpow.pop %v969
    %v971 = vadd.f32 %v970, 1.0
    %v972 = vrcp.pop %v971
    %v973 = vmul.f32 1.0, %v972
    %v974 = vtanh.pop %v960
    %v975 = vxor.u32 %v961, 2147483648
    %v976 = vmul.f32 %v975, 1.442695
    %v977 = vpow.pop %v976
    %v978 = vadd.f32 %v977, 1.0
    %v979 = vrcp.pop %v978
    %v980 = vmul.f32 1.0, %v979
    %v981 = vld [vmem:[#allocation4] sm:$0xff]
    %v982 = vmul.f32 %v973, %v981
    %v983 = vmul.f32 %v967, %v974
    %v984 = vadd.f32 %v982, %v983
    %v985 = vtanh.pop %v984
    %v986 = vmul.f32 %v980, %v985
    %987 = vst [vmem:[#allocation3] sm:$0xff] %v986
    %988 = vst [vmem:[#allocation4] sm:$0xff] %v984
    %v989 = vpack.c.bf16 %v986, %v986
    %s990 = scalar_lea.vmem [#allocation10], 4
    %991 = vst [vmem:[%s990] sm:$0xf] %v989
    %v992 = vld [vmem:[#allocation2 + $0x40] sm:$0xff]
    %v993 = vld [vmem:[#allocation2 + $0x48] sm:$0xff]
    %v994 = vld [vmem:[#allocation2 + $0x50] sm:$0xff]
    %v995 = vld [vmem:[#allocation2 + $0x58] sm:$0xff]
    %v996 = vld [vmem:[#allocation3] sm:$0xff]
    %v997 = vpack.c.bf16 %v996, %v996
    %v998 = vld [vmem:[#allocation8] sm:$0xff]
    %v999 = vld [vmem:[#allocation8 + $0x8] sm:$0xff]
    %v1000 = vld [vmem:[#allocation8 + $0x10] sm:$0xff]
    %v1001 = vld [vmem:[#allocation8 + $0x18] sm:$0xff]
    %v1002 = vld [vmem:[#allocation8 + $0x20] sm:$0xff]
    %v1003 = vld [vmem:[#allocation8 + $0x28] sm:$0xff]
    %v1004 = vld [vmem:[#allocation8 + $0x30] sm:$0xff]
    %v1005 = vld [vmem:[#allocation8 + $0x38] sm:$0xff]
    %v1006 = vld [vmem:[#allocation8 + $0x40] sm:$0xff]
    %v1007 = vld [vmem:[#allocation8 + $0x48] sm:$0xff]
    %v1008 = vld [vmem:[#allocation8 + $0x50] sm:$0xff]
    %v1009 = vld [vmem:[#allocation8 + $0x58] sm:$0xff]
    %v1010 = vld [vmem:[#allocation8 + $0x60] sm:$0xff]
    %v1011 = vld [vmem:[#allocation8 + $0x68] sm:$0xff]
    %v1012 = vld [vmem:[#allocation8 + $0x70] sm:$0xff]
    %v1013 = vld [vmem:[#allocation8 + $0x78] sm:$0xff]
    %v1014 = vld [vmem:[#allocation8 + $0x80] sm:$0xff]
    %v1015 = vld [vmem:[#allocation8 + $0x88] sm:$0xff]
    %v1016 = vld [vmem:[#allocation8 + $0x90] sm:$0xff]
    %v1017 = vld [vmem:[#allocation8 + $0x98] sm:$0xff]
    %v1018 = vld [vmem:[#allocation8 + $0xa0] sm:$0xff]
    %v1019 = vld [vmem:[#allocation8 + $0xa8] sm:$0xff]
    %v1020 = vld [vmem:[#allocation8 + $0xb0] sm:$0xff]
    %v1021 = vld [vmem:[#allocation8 + $0xb8] sm:$0xff]
    %v1022 = vld [vmem:[#allocation8 + $0xc0] sm:$0xff]
    %v1023 = vld [vmem:[#allocation8 + $0xc8] sm:$0xff]
    %v1024 = vld [vmem:[#allocation8 + $0xd0] sm:$0xff]
    %v1025 = vld [vmem:[#allocation8 + $0xd8] sm:$0xff]
    %v1026 = vld [vmem:[#allocation8 + $0xe0] sm:$0xff]
    %v1027 = vld [vmem:[#allocation8 + $0xe8] sm:$0xff]
    %v1028 = vld [vmem:[#allocation8 + $0xf0] sm:$0xff]
    %v1029 = vld [vmem:[#allocation8 + $0xf8] sm:$0xff]
    %v1062 = vunpack.c.l.b16 %v998
    %v1063 = vunpack.c.h.b16 %v998
    %v1064 = vunpack.c.l.b16 %v999
    %v1065 = vunpack.c.h.b16 %v999
    %v1066 = vunpack.c.l.b16 %v1000
    %v1067 = vunpack.c.h.b16 %v1000
    %v1068 = vunpack.c.l.b16 %v1001
    %v1069 = vunpack.c.h.b16 %v1001
    %v1070 = vunpack.c.l.b16 %v1002
    %v1071 = vunpack.c.h.b16 %v1002
    %v1072 = vunpack.c.l.b16 %v1003
    %v1073 = vunpack.c.h.b16 %v1003
    %v1074 = vunpack.c.l.b16 %v1004
    %v1075 = vunpack.c.h.b16 %v1004
    %v1076 = vunpack.c.l.b16 %v1005
    %v1077 = vunpack.c.h.b16 %v1005
    %v1078 = vunpack.c.l.b16 %v1006
    %v1079 = vunpack.c.h.b16 %v1006
    %v1080 = vunpack.c.l.b16 %v1007
    %v1081 = vunpack.c.h.b16 %v1007
    %v1082 = vunpack.c.l.b16 %v1008
    %v1083 = vunpack.c.h.b16 %v1008
    %v1084 = vunpack.c.l.b16 %v1009
    %v1085 = vunpack.c.h.b16 %v1009
    %v1086 = vunpack.c.l.b16 %v1010
    %v1087 = vunpack.c.h.b16 %v1010
    %v1088 = vunpack.c.l.b16 %v1011
    %v1089 = vunpack.c.h.b16 %v1011
    %v1090 = vunpack.c.l.b16 %v1012
    %v1091 = vunpack.c.h.b16 %v1012
    %v1092 = vunpack.c.l.b16 %v1013
    %v1093 = vunpack.c.h.b16 %v1013
    %v1094 = vunpack.c.l.b16 %v1014
    %v1095 = vunpack.c.h.b16 %v1014
    %v1096 = vunpack.c.l.b16 %v1015
    %v1097 = vunpack.c.h.b16 %v1015
    %v1098 = vunpack.c.l.b16 %v1016
    %v1099 = vunpack.c.h.b16 %v1016
    %v1100 = vunpack.c.l.b16 %v1017
    %v1101 = vunpack.c.h.b16 %v1017
    %v1102 = vunpack.c.l.b16 %v1018
    %v1103 = vunpack.c.h.b16 %v1018
    %v1104 = vunpack.c.l.b16 %v1019
    %v1105 = vunpack.c.h.b16 %v1019
    %v1106 = vunpack.c.l.b16 %v1020
    %v1107 = vunpack.c.h.b16 %v1020
    %v1108 = vunpack.c.l.b16 %v1021
    %v1109 = vunpack.c.h.b16 %v1021
    %v1110 = vunpack.c.l.b16 %v1022
    %v1111 = vunpack.c.h.b16 %v1022
    %v1112 = vunpack.c.l.b16 %v1023
    %v1113 = vunpack.c.h.b16 %v1023
    %v1114 = vunpack.c.l.b16 %v1024
    %v1115 = vunpack.c.h.b16 %v1024
    %v1116 = vunpack.c.l.b16 %v1025
    %v1117 = vunpack.c.h.b16 %v1025
    %v1118 = vunpack.c.l.b16 %v1026
    %v1119 = vunpack.c.h.b16 %v1026
    %v1120 = vunpack.c.l.b16 %v1027
    %v1121 = vunpack.c.h.b16 %v1027
    %v1122 = vunpack.c.l.b16 %v1028
    %v1123 = vunpack.c.h.b16 %v1028
    %v1124 = vunpack.c.l.b16 %v1029
    %v1125 = vunpack.c.h.b16 %v1029
    %v1126 = vpack.c.b16 %v1066, %v1062
    %v1127 = vpack.c.b16 %v1067, %v1063
    %v1128 = vpack.c.b16 %v1068, %v1064
    %v1129 = vpack.c.b16 %v1069, %v1065
    %v1130 = vpack.c.b16 %v1074, %v1070
    %v1131 = vpack.c.b16 %v1075, %v1071
    %v1132 = vpack.c.b16 %v1076, %v1072
    %v1133 = vpack.c.b16 %v1077, %v1073
    %v1134 = vpack.c.b16 %v1082, %v1078
    %v1135 = vpack.c.b16 %v1083, %v1079
    %v1136 = vpack.c.b16 %v1084, %v1080
    %v1137 = vpack.c.b16 %v1085, %v1081
    %v1138 = vpack.c.b16 %v1090, %v1086
    %v1139 = vpack.c.b16 %v1091, %v1087
    %v1140 = vpack.c.b16 %v1092, %v1088
    %v1141 = vpack.c.b16 %v1093, %v1089
    %v1142 = vpack.c.b16 %v1098, %v1094
    %v1143 = vpack.c.b16 %v1099, %v1095
    %v1144 = vpack.c.b16 %v1100, %v1096
    %v1145 = vpack.c.b16 %v1101, %v1097
    %v1146 = vpack.c.b16 %v1106, %v1102
    %v1147 = vpack.c.b16 %v1107, %v1103
    %v1148 = vpack.c.b16 %v1108, %v1104
    %v1149 = vpack.c.b16 %v1109, %v1105
    %v1150 = vpack.c.b16 %v1114, %v1110
    %v1151 = vpack.c.b16 %v1115, %v1111
    %v1152 = vpack.c.b16 %v1116, %v1112
    %v1153 = vpack.c.b16 %v1117, %v1113
    %v1154 = vpack.c.b16 %v1122, %v1118
    %v1155 = vpack.c.b16 %v1123, %v1119
    %v1156 = vpack.c.b16 %v1124, %v1120
    %v1157 = vpack.c.b16 %v1125, %v1121
    %1190 = vmatprep.subr.bf16.mxu0 %v1127
    %1191 = vmatpush1.bf16.msra.mxu0 %v1126
    %1192 = vmatprep.subr.bf16.mxu0 %v1131
    %1193 = vmatpush1.bf16.msra.mxu0 %v1130
    %1194 = vmatprep.subr.bf16.mxu0 %v1135
    %1195 = vmatpush1.bf16.msra.mxu0 %v1134
    %1196 = vmatprep.subr.bf16.mxu0 %v1139
    %1197 = vmatpush1.bf16.msra.mxu0 %v1138
    %1198 = vmatprep.subr.bf16.mxu0 %v1143
    %1199 = vmatpush1.bf16.msra.mxu0 %v1142
    %1200 = vmatprep.subr.bf16.mxu0 %v1147
    %1201 = vmatpush1.bf16.msra.mxu0 %v1146
    %1202 = vmatprep.subr.bf16.mxu0 %v1151
    %1203 = vmatpush1.bf16.msra.mxu0 %v1150
    %1204 = vmatprep.subr.bf16.mxu0 %v1155
    %1205 = vmatpush1.bf16.msra.mxu0 %v1154
    %1206 = vmatprep.subr.bf16.mxu0 0
    %1207 = vmatpush1.bf16.msra.mxu0 0
    %1208 = vmatprep.subr.bf16.mxu0 0
    %1209 = vmatpush1.bf16.msra.mxu0 0
    %1210 = vmatprep.subr.bf16.mxu0 0
    %1211 = vmatpush1.bf16.msra.mxu0 0
    %1212 = vmatprep.subr.bf16.mxu0 0
    %1213 = vmatpush1.bf16.msra.mxu0 0
    %1214 = vmatprep.subr.bf16.mxu0 0
    %1215 = vmatpush1.bf16.msra.mxu0 0
    %1216 = vmatprep.subr.bf16.mxu0 0
    %1217 = vmatpush1.bf16.msra.mxu0 0
    %1218 = vmatprep.subr.bf16.mxu0 0
    %1219 = vmatpush1.bf16.msra.mxu0 0
    %1220 = vmatprep.subr.bf16.mxu0 0
    %1221 = vmatpush1.bf16.msra.mxu0 0
    %1222 = vmatprep.mubr.bf16.mxu0 0
    %1223 = vmatmul.mubr.bf16.gmra.mrb[0].mxu0 %v997
    %v1224 = vpop.f32.mrb[0].mxu0
    %v1225 = vadd.f32 0.0, %v1224
    %v1226 = vpop.f32.mrb[0].mxu0
    %v1227 = vadd.f32 0.0, %v1226
    %v1228 = vpop.f32.mrb[0].mxu0
    %v1229 = vpop.f32.mrb[0].mxu0
    %1230 = vdwg.mxu0
    %1231 = vmatprep.subr.bf16.mxu0 %v1129
    %1232 = vmatpush1.bf16.msra.mxu0 %v1128
    %1233 = vmatprep.subr.bf16.mxu0 %v1133
    %1234 = vmatpush1.bf16.msra.mxu0 %v1132
    %1235 = vmatprep.subr.bf16.mxu0 %v1137
    %1236 = vmatpush1.bf16.msra.mxu0 %v1136
    %1237 = vmatprep.subr.bf16.mxu0 %v1141
    %1238 = vmatpush1.bf16.msra.mxu0 %v1140
    %1239 = vmatprep.subr.bf16.mxu0 %v1145
    %1240 = vmatpush1.bf16.msra.mxu0 %v1144
    %1241 = vmatprep.subr.bf16.mxu0 %v1149
    %1242 = vmatpush1.bf16.msra.mxu0 %v1148
    %1243 = vmatprep.subr.bf16.mxu0 %v1153
    %1244 = vmatpush1.bf16.msra.mxu0 %v1152
    %1245 = vmatprep.subr.bf16.mxu0 %v1157
    %1246 = vmatpush1.bf16.msra.mxu0 %v1156
    %1247 = vmatprep.subr.bf16.mxu0 0
    %1248 = vmatpush1.bf16.msra.mxu0 0
    %1249 = vmatprep.subr.bf16.mxu0 0
    %1250 = vmatpush1.bf16.msra.mxu0 0
    %1251 = vmatprep.subr.bf16.mxu0 0
    %1252 = vmatpush1.bf16.msra.mxu0 0
    %1253 = vmatprep.subr.bf16.mxu0 0
    %1254 = vmatpush1.bf16.msra.mxu0 0
    %1255 = vmatprep.subr.bf16.mxu0 0
    %1256 = vmatpush1.bf16.msra.mxu0 0
    %1257 = vmatprep.subr.bf16.mxu0 0
    %1258 = vmatpush1.bf16.msra.mxu0 0
    %1259 = vmatprep.subr.bf16.mxu0 0
    %1260 = vmatpush1.bf16.msra.mxu0 0
    %1261 = vmatprep.subr.bf16.mxu0 0
    %1262 = vmatpush1.bf16.msra.mxu0 0
    %1263 = vmatprep.mubr.bf16.mxu0 0
    %1264 = vmatmul.mubr.bf16.gmra.mrb[0].mxu0 %v997
    %v1265 = vpop.f32.mrb[0].mxu0
    %v1266 = vadd.f32 0.0, %v1265
    %v1267 = vpop.f32.mrb[0].mxu0
    %v1268 = vadd.f32 0.0, %v1267
    %v1269 = vpop.f32.mrb[0].mxu0
    %v1270 = vpop.f32.mrb[0].mxu0
    %1271 = vdwg.mxu0
    %v1272 = vadd.f32 %v992, %v1225
    %v1273 = vadd.f32 %v993, %v1227
    %v1274 = vadd.f32 %v994, %v1266
    %v1275 = vadd.f32 %v995, %v1268
    %v1276 = vxor.u32 %v1272, 2147483648
    %v1277 = vmul.f32 %v1276, 1.442695
    %v1278 = vpow.pop %v1277
    %v1279 = vadd.f32 %v1278, 1.0
    %v1280 = vrcp.pop %v1279
    %v1281 = vmul.f32 1.0, %v1280
    %v1282 = vxor.u32 %v1273, 2147483648
    %v1283 = vmul.f32 %v1282, 1.442695
    %v1284 = vpow.pop %v1283
    %v1285 = vadd.f32 %v1284, 1.0
    %v1286 = vrcp.pop %v1285
    %v1287 = vmul.f32 1.0, %v1286
    %v1288 = vtanh.pop %v1274
    %v1289 = vxor.u32 %v1275, 2147483648
    %v1290 = vmul.f32 %v1289, 1.442695
    %v1291 = vpow.pop %v1290
    %v1292 = vadd.f32 %v1291, 1.0
    %v1293 = vrcp.pop %v1292
    %v1294 = vmul.f32 1.0, %v1293
    %v1295 = vld [vmem:[#allocation4] sm:$0xff]
    %v1296 = vmul.f32 %v1287, %v1295
    %v1297 = vmul.f32 %v1281, %v1288
    %v1298 = vadd.f32 %v1296, %v1297
    %v1299 = vtanh.pop %v1298
    %v1300 = vmul.f32 %v1294, %v1299
    %1301 = vst [vmem:[#allocation3] sm:$0xff] %v1300
    %1302 = vst [vmem:[#allocation4] sm:$0xff] %v1298
    %v1303 = vpack.c.bf16 %v1300, %v1300
    %s1304 = scalar_lea.vmem [#allocation10], 8
    %1305 = vst [vmem:[%s1304] sm:$0xf] %v1303
    %v1306 = vld [vmem:[#allocation2 + $0x60] sm:$0xff]
    %v1307 = vld [vmem:[#allocation2 + $0x68] sm:$0xff]
    %v1308 = vld [vmem:[#allocation2 + $0x70] sm:$0xff]
    %v1309 = vld [vmem:[#allocation2 + $0x78] sm:$0xff]
    %v1310 = vld [vmem:[#allocation3] sm:$0xff]
    %v1311 = vpack.c.bf16 %v1310, %v1310
    %v1312 = vld [vmem:[#allocation8] sm:$0xff]
    %v1313 = vld [vmem:[#allocation8 + $0x8] sm:$0xff]
    %v1314 = vld [vmem:[#allocation8 + $0x10] sm:$0xff]
    %v1315 = vld [vmem:[#allocation8 + $0x18] sm:$0xff]
    %v1316 = vld [vmem:[#allocation8 + $0x20] sm:$0xff]
    %v1317 = vld [vmem:[#allocation8 + $0x28] sm:$0xff]
    %v1318 = vld [vmem:[#allocation8 + $0x30] sm:$0xff]
    %v1319 = vld [vmem:[#allocation8 + $0x38] sm:$0xff]
    %v1320 = vld [vmem:[#allocation8 + $0x40] sm:$0xff]
    %v1321 = vld [vmem:[#allocation8 + $0x48] sm:$0xff]
    %v1322 = vld [vmem:[#allocation8 + $0x50] sm:$0xff]
    %v1323 = vld [vmem:[#allocation8 + $0x58] sm:$0xff]
    %v1324 = vld [vmem:[#allocation8 + $0x60] sm:$0xff]
    %v1325 = vld [vmem:[#allocation8 + $0x68] sm:$0xff]
    %v1326 = vld [vmem:[#allocation8 + $0x70] sm:$0xff]
    %v1327 = vld [vmem:[#allocation8 + $0x78] sm:$0xff]
    %v1328 = vld [vmem:[#allocation8 + $0x80] sm:$0xff]
    %v1329 = vld [vmem:[#allocation8 + $0x88] sm:$0xff]
    %v1330 = vld [vmem:[#allocation8 + $0x90] sm:$0xff]
    %v1331 = vld [vmem:[#allocation8 + $0x98] sm:$0xff]
    %v1332 = vld [vmem:[#allocation8 + $0xa0] sm:$0xff]
    %v1333 = vld [vmem:[#allocation8 + $0xa8] sm:$0xff]
    %v1334 = vld [vmem:[#allocation8 + $0xb0] sm:$0xff]
    %v1335 = vld [vmem:[#allocation8 + $0xb8] sm:$0xff]
    %v1336 = vld [vmem:[#allocation8 + $0xc0] sm:$0xff]
    %v1337 = vld [vmem:[#allocation8 + $0xc8] sm:$0xff]
    %v1338 = vld [vmem:[#allocation8 + $0xd0] sm:$0xff]
    %v1339 = vld [vmem:[#allocation8 + $0xd8] sm:$0xff]
    %v1340 = vld [vmem:[#allocation8 + $0xe0] sm:$0xff]
    %v1341 = vld [vmem:[#allocation8 + $0xe8] sm:$0xff]
    %v1342 = vld [vmem:[#allocation8 + $0xf0] sm:$0xff]
    %v1343 = vld [vmem:[#allocation8 + $0xf8] sm:$0xff]
    %v1376 = vunpack.c.l.b16 %v1312
    %v1377 = vunpack.c.h.b16 %v1312
    %v1378 = vunpack.c.l.b16 %v1313
    %v1379 = vunpack.c.h.b16 %v1313
    %v1380 = vunpack.c.l.b16 %v1314
    %v1381 = vunpack.c.h.b16 %v1314
    %v1382 = vunpack.c.l.b16 %v1315
    %v1383 = vunpack.c.h.b16 %v1315
    %v1384 = vunpack.c.l.b16 %v1316
    %v1385 = vunpack.c.h.b16 %v1316
    %v1386 = vunpack.c.l.b16 %v1317
    %v1387 = vunpack.c.h.b16 %v1317
    %v1388 = vunpack.c.l.b16 %v1318
    %v1389 = vunpack.c.h.b16 %v1318
    %v1390 = vunpack.c.l.b16 %v1319
    %v1391 = vunpack.c.h.b16 %v1319
    %v1392 = vunpack.c.l.b16 %v1320
    %v1393 = vunpack.c.h.b16 %v1320
    %v1394 = vunpack.c.l.b16 %v1321
    %v1395 = vunpack.c.h.b16 %v1321
    %v1396 = vunpack.c.l.b16 %v1322
    %v1397 = vunpack.c.h.b16 %v1322
    %v1398 = vunpack.c.l.b16 %v1323
    %v1399 = vunpack.c.h.b16 %v1323
    %v1400 = vunpack.c.l.b16 %v1324
    %v1401 = vunpack.c.h.b16 %v1324
    %v1402 = vunpack.c.l.b16 %v1325
    %v1403 = vunpack.c.h.b16 %v1325
    %v1404 = vunpack.c.l.b16 %v1326
    %v1405 = vunpack.c.h.b16 %v1326
    %v1406 = vunpack.c.l.b16 %v1327
    %v1407 = vunpack.c.h.b16 %v1327
    %v1408 = vunpack.c.l.b16 %v1328
    %v1409 = vunpack.c.h.b16 %v1328
    %v1410 = vunpack.c.l.b16 %v1329
    %v1411 = vunpack.c.h.b16 %v1329
    %v1412 = vunpack.c.l.b16 %v1330
    %v1413 = vunpack.c.h.b16 %v1330
    %v1414 = vunpack.c.l.b16 %v1331
    %v1415 = vunpack.c.h.b16 %v1331
    %v1416 = vunpack.c.l.b16 %v1332
    %v1417 = vunpack.c.h.b16 %v1332
    %v1418 = vunpack.c.l.b16 %v1333
    %v1419 = vunpack.c.h.b16 %v1333
    %v1420 = vunpack.c.l.b16 %v1334
    %v1421 = vunpack.c.h.b16 %v1334
    %v1422 = vunpack.c.l.b16 %v1335
    %v1423 = vunpack.c.h.b16 %v1335
    %v1424 = vunpack.c.l.b16 %v1336
    %v1425 = vunpack.c.h.b16 %v1336
    %v1426 = vunpack.c.l.b16 %v1337
    %v1427 = vunpack.c.h.b16 %v1337
    %v1428 = vunpack.c.l.b16 %v1338
    %v1429 = vunpack.c.h.b16 %v1338
    %v1430 = vunpack.c.l.b16 %v1339
    %v1431 = vunpack.c.h.b16 %v1339
    %v1432 = vunpack.c.l.b16 %v1340
    %v1433 = vunpack.c.h.b16 %v1340
    %v1434 = vunpack.c.l.b16 %v1341
    %v1435 = vunpack.c.h.b16 %v1341
    %v1436 = vunpack.c.l.b16 %v1342
    %v1437 = vunpack.c.h.b16 %v1342
    %v1438 = vunpack.c.l.b16 %v1343
    %v1439 = vunpack.c.h.b16 %v1343
    %v1440 = vpack.c.b16 %v1380, %v1376
    %v1441 = vpack.c.b16 %v1381, %v1377
    %v1442 = vpack.c.b16 %v1382, %v1378
    %v1443 = vpack.c.b16 %v1383, %v1379
    %v1444 = vpack.c.b16 %v1388, %v1384
    %v1445 = vpack.c.b16 %v1389, %v1385
    %v1446 = vpack.c.b16 %v1390, %v1386
    %v1447 = vpack.c.b16 %v1391, %v1387
    %v1448 = vpack.c.b16 %v1396, %v1392
    %v1449 = vpack.c.b16 %v1397, %v1393
    %v1450 = vpack.c.b16 %v1398, %v1394
    %v1451 = vpack.c.b16 %v1399, %v1395
    %v1452 = vpack.c.b16 %v1404, %v1400
    %v1453 = vpack.c.b16 %v1405, %v1401
    %v1454 = vpack.c.b16 %v1406, %v1402
    %v1455 = vpack.c.b16 %v1407, %v1403
    %v1456 = vpack.c.b16 %v1412, %v1408
    %v1457 = vpack.c.b16 %v1413, %v1409
    %v1458 = vpack.c.b16 %v1414, %v1410
    %v1459 = vpack.c.b16 %v1415, %v1411
    %v1460 = vpack.c.b16 %v1420, %v1416
    %v1461 = vpack.c.b16 %v1421, %v1417
    %v1462 = vpack.c.b16 %v1422, %v1418
    %v1463 = vpack.c.b16 %v1423, %v1419
    %v1464 = vpack.c.b16 %v1428, %v1424
    %v1465 = vpack.c.b16 %v1429, %v1425
    %v1466 = vpack.c.b16 %v1430, %v1426
    %v1467 = vpack.c.b16 %v1431, %v1427
    %v1468 = vpack.c.b16 %v1436, %v1432
    %v1469 = vpack.c.b16 %v1437, %v1433
    %v1470 = vpack.c.b16 %v1438, %v1434
    %v1471 = vpack.c.b16 %v1439, %v1435
    %1504 = vmatprep.subr.bf16.mxu0 %v1441
    %1505 = vmatpush1.bf16.msra.mxu0 %v1440
    %1506 = vmatprep.subr.bf16.mxu0 %v1445
    %1507 = vmatpush1.bf16.msra.mxu0 %v1444
    %1508 = vmatprep.subr.bf16.mxu0 %v1449
    %1509 = vmatpush1.bf16.msra.mxu0 %v1448
    %1510 = vmatprep.subr.bf16.mxu0 %v1453
    %1511 = vmatpush1.bf16.msra.mxu0 %v1452
    %1512 = vmatprep.subr.bf16.mxu0 %v1457
    %1513 = vmatpush1.bf16.msra.mxu0 %v1456
    %1514 = vmatprep.subr.bf16.mxu0 %v1461
    %1515 = vmatpush1.bf16.msra.mxu0 %v1460
    %1516 = vmatprep.subr.bf16.mxu0 %v1465
    %1517 = vmatpush1.bf16.msra.mxu0 %v1464
    %1518 = vmatprep.subr.bf16.mxu0 %v1469
    %1519 = vmatpush1.bf16.msra.mxu0 %v1468
    %1520 = vmatprep.subr.bf16.mxu0 0
    %1521 = vmatpush1.bf16.msra.mxu0 0
    %1522 = vmatprep.subr.bf16.mxu0 0
    %1523 = vmatpush1.bf16.msra.mxu0 0
    %1524 = vmatprep.subr.bf16.mxu0 0
    %1525 = vmatpush1.bf16.msra.mxu0 0
    %1526 = vmatprep.subr.bf16.mxu0 0
    %1527 = vmatpush1.bf16.msra.mxu0 0
    %1528 = vmatprep.subr.bf16.mxu0 0
    %1529 = vmatpush1.bf16.msra.mxu0 0
    %1530 = vmatprep.subr.bf16.mxu0 0
    %1531 = vmatpush1.bf16.msra.mxu0 0
    %1532 = vmatprep.subr.bf16.mxu0 0
    %1533 = vmatpush1.bf16.msra.mxu0 0
    %1534 = vmatprep.subr.bf16.mxu0 0
    %1535 = vmatpush1.bf16.msra.mxu0 0
    %1536 = vmatprep.mubr.bf16.mxu0 0
    %1537 = vmatmul.mubr.bf16.gmra.mrb[0].mxu0 %v1311
    %v1538 = vpop.f32.mrb[0].mxu0
    %v1539 = vadd.f32 0.0, %v1538
    %v1540 = vpop.f32.mrb[0].mxu0
    %v1541 = vadd.f32 0.0, %v1540
    %v1542 = vpop.f32.mrb[0].mxu0
    %v1543 = vpop.f32.mrb[0].mxu0
    %1544 = vdwg.mxu0
    %1545 = vmatprep.subr.bf16.mxu0 %v1443
    %1546 = vmatpush1.bf16.msra.mxu0 %v1442
    %1547 = vmatprep.subr.bf16.mxu0 %v1447
    %1548 = vmatpush1.bf16.msra.mxu0 %v1446
    %1549 = vmatprep.subr.bf16.mxu0 %v1451
    %1550 = vmatpush1.bf16.msra.mxu0 %v1450
    %1551 = vmatprep.subr.bf16.mxu0 %v1455
    %1552 = vmatpush1.bf16.msra.mxu0 %v1454
    %1553 = vmatprep.subr.bf16.mxu0 %v1459
    %1554 = vmatpush1.bf16.msra.mxu0 %v1458
    %1555 = vmatprep.subr.bf16.mxu0 %v1463
    %1556 = vmatpush1.bf16.msra.mxu0 %v1462
    %1557 = vmatprep.subr.bf16.mxu0 %v1467
    %1558 = vmatpush1.bf16.msra.mxu0 %v1466
    %1559 = vmatprep.subr.bf16.mxu0 %v1471
    %1560 = vmatpush1.bf16.msra.mxu0 %v1470
    %1561 = vmatprep.subr.bf16.mxu0 0
    %1562 = vmatpush1.bf16.msra.mxu0 0
    %1563 = vmatprep.subr.bf16.mxu0 0
    %1564 = vmatpush1.bf16.msra.mxu0 0
    %1565 = vmatprep.subr.bf16.mxu0 0
    %1566 = vmatpush1.bf16.msra.mxu0 0
    %1567 = vmatprep.subr.bf16.mxu0 0
    %1568 = vmatpush1.bf16.msra.mxu0 0
    %1569 = vmatprep.subr.bf16.mxu0 0
    %1570 = vmatpush1.bf16.msra.mxu0 0
    %1571 = vmatprep.subr.bf16.mxu0 0
    %1572 = vmatpush1.bf16.msra.mxu0 0
    %1573 = vmatprep.subr.bf16.mxu0 0
    %1574 = vmatpush1.bf16.msra.mxu0 0
    %1575 = vmatprep.subr.bf16.mxu0 0
    %1576 = vmatpush1.bf16.msra.mxu0 0
    %1577 = vmatprep.mubr.bf16.mxu0 0
    %1578 = vmatmul.mubr.bf16.gmra.mrb[0].mxu0 %v1311
    %v1579 = vpop.f32.mrb[0].mxu0
    %v1580 = vadd.f32 0.0, %v1579
    %v1581 = vpop.f32.mrb[0].mxu0
    %v1582 = vadd.f32 0.0, %v1581
    %v1583 = vpop.f32.mrb[0].mxu0
    %v1584 = vpop.f32.mrb[0].mxu0
    %1585 = vdwg.mxu0
    %v1586 = vadd.f32 %v1306, %v1539
    %v1587 = vadd.f32 %v1307, %v1541
    %v1588 = vadd.f32 %v1308, %v1580
    %v1589 = vadd.f32 %v1309, %v1582
    %v1590 = vxor.u32 %v1586, 2147483648
    %v1591 = vmul.f32 %v1590, 1.442695
    %v1592 = vpow.pop %v1591
    %v1593 = vadd.f32 %v1592, 1.0
    %v1594 = vrcp.pop %v1593
    %v1595 = vmul.f32 1.0, %v1594
    %v1596 = vxor.u32 %v1587, 2147483648
    %v1597 = vmul.f32 %v1596, 1.442695
    %v1598 = vpow.pop %v1597
    %v1599 = vadd.f32 %v1598, 1.0
    %v1600 = vrcp.pop %v1599
    %v1601 = vmul.f32 1.0, %v1600
    %v1602 = vtanh.pop %v1588
    %v1603 = vxor.u32 %v1589, 2147483648
    %v1604 = vmul.f32 %v1603, 1.442695
    %v1605 = vpow.pop %v1604
    %v1606 = vadd.f32 %v1605, 1.0
    %v1607 = vrcp.pop %v1606
    %v1608 = vmul.f32 1.0, %v1607
    %v1609 = vld [vmem:[#allocation4] sm:$0xff]
    %v1610 = vmul.f32 %v1601, %v1609
    %v1611 = vmul.f32 %v1595, %v1602
    %v1612 = vadd.f32 %v1610, %v1611
    %v1613 = vtanh.pop %v1612
    %v1614 = vmul.f32 %v1608, %v1613
    %1615 = vst [vmem:[#allocation3] sm:$0xff] %v1614
    %1616 = vst [vmem:[#allocation4] sm:$0xff] %v1612
    %v1617 = vpack.c.bf16 %v1614, %v1614
    %s1618 = scalar_lea.vmem [#allocation10], 12
    %1619 = vst [vmem:[%s1618] sm:$0xf] %v1617
    %v1620 = vld [vmem:[#allocation2 + $0x80] sm:$0xff]
    %v1621 = vld [vmem:[#allocation2 + $0x88] sm:$0xff]
    %v1622 = vld [vmem:[#allocation2 + $0x90] sm:$0xff]
    %v1623 = vld [vmem:[#allocation2 + $0x98] sm:$0xff]
    %v1624 = vld [vmem:[#allocation3] sm:$0xff]
    %v1625 = vpack.c.bf16 %v1624, %v1624
    %v1626 = vld [vmem:[#allocation8] sm:$0xff]
    %v1627 = vld [vmem:[#allocation8 + $0x8] sm:$0xff]
    %v1628 = vld [vmem:[#allocation8 + $0x10] sm:$0xff]
    %v1629 = vld [vmem:[#allocation8 + $0x18] sm:$0xff]
    %v1630 = vld [vmem:[#allocation8 + $0x20] sm:$0xff]
    %v1631 = vld [vmem:[#allocation8 + $0x28] sm:$0xff]
    %v1632 = vld [vmem:[#allocation8 + $0x30] sm:$0xff]
    %v1633 = vld [vmem:[#allocation8 + $0x38] sm:$0xff]
    %v1634 = vld [vmem:[#allocation8 + $0x40] sm:$0xff]
    %v1635 = vld [vmem:[#allocation8 + $0x48] sm:$0xff]
    %v1636 = vld [vmem:[#allocation8 + $0x50] sm:$0xff]
    %v1637 = vld [vmem:[#allocation8 + $0x58] sm:$0xff]
    %v1638 = vld [vmem:[#allocation8 + $0x60] sm:$0xff]
    %v1639 = vld [vmem:[#allocation8 + $0x68] sm:$0xff]
    %v1640 = vld [vmem:[#allocation8 + $0x70] sm:$0xff]
    %v1641 = vld [vmem:[#allocation8 + $0x78] sm:$0xff]
    %v1642 = vld [vmem:[#allocation8 + $0x80] sm:$0xff]
    %v1643 = vld [vmem:[#allocation8 + $0x88] sm:$0xff]
    %v1644 = vld [vmem:[#allocation8 + $0x90] sm:$0xff]
    %v1645 = vld [vmem:[#allocation8 + $0x98] sm:$0xff]
    %v1646 = vld [vmem:[#allocation8 + $0xa0] sm:$0xff]
    %v1647 = vld [vmem:[#allocation8 + $0xa8] sm:$0xff]
    %v1648 = vld [vmem:[#allocation8 + $0xb0] sm:$0xff]
    %v1649 = vld [vmem:[#allocation8 + $0xb8] sm:$0xff]
    %v1650 = vld [vmem:[#allocation8 + $0xc0] sm:$0xff]
    %v1651 = vld [vmem:[#allocation8 + $0xc8] sm:$0xff]
    %v1652 = vld [vmem:[#allocation8 + $0xd0] sm:$0xff]
    %v1653 = vld [vmem:[#allocation8 + $0xd8] sm:$0xff]
    %v1654 = vld [vmem:[#allocation8 + $0xe0] sm:$0xff]
    %v1655 = vld [vmem:[#allocation8 + $0xe8] sm:$0xff]
    %v1656 = vld [vmem:[#allocation8 + $0xf0] sm:$0xff]
    %v1657 = vld [vmem:[#allocation8 + $0xf8] sm:$0xff]
    %v1690 = vunpack.c.l.b16 %v1626
    %v1691 = vunpack.c.h.b16 %v1626
    %v1692 = vunpack.c.l.b16 %v1627
    %v1693 = vunpack.c.h.b16 %v1627
    %v1694 = vunpack.c.l.b16 %v1628
    %v1695 = vunpack.c.h.b16 %v1628
    %v1696 = vunpack.c.l.b16 %v1629
    %v1697 = vunpack.c.h.b16 %v1629
    %v1698 = vunpack.c.l.b16 %v1630
    %v1699 = vunpack.c.h.b16 %v1630
    %v1700 = vunpack.c.l.b16 %v1631
    %v1701 = vunpack.c.h.b16 %v1631
    %v1702 = vunpack.c.l.b16 %v1632
    %v1703 = vunpack.c.h.b16 %v1632
    %v1704 = vunpack.c.l.b16 %v1633
    %v1705 = vunpack.c.h.b16 %v1633
    %v1706 = vunpack.c.l.b16 %v1634
    %v1707 = vunpack.c.h.b16 %v1634
    %v1708 = vunpack.c.l.b16 %v1635
    %v1709 = vunpack.c.h.b16 %v1635
    %v1710 = vunpack.c.l.b16 %v1636
    %v1711 = vunpack.c.h.b16 %v1636
    %v1712 = vunpack.c.l.b16 %v1637
    %v1713 = vunpack.c.h.b16 %v1637
    %v1714 = vunpack.c.l.b16 %v1638
    %v1715 = vunpack.c.h.b16 %v1638
    %v1716 = vunpack.c.l.b16 %v1639
    %v1717 = vunpack.c.h.b16 %v1639
    %v1718 = vunpack.c.l.b16 %v1640
    %v1719 = vunpack.c.h.b16 %v1640
    %v1720 = vunpack.c.l.b16 %v1641
    %v1721 = vunpack.c.h.b16 %v1641
    %v1722 = vunpack.c.l.b16 %v1642
    %v1723 = vunpack.c.h.b16 %v1642
    %v1724 = vunpack.c.l.b16 %v1643
    %v1725 = vunpack.c.h.b16 %v1643
    %v1726 = vunpack.c.l.b16 %v1644
    %v1727 = vunpack.c.h.b16 %v1644
    %v1728 = vunpack.c.l.b16 %v1645
    %v1729 = vunpack.c.h.b16 %v1645
    %v1730 = vunpack.c.l.b16 %v1646
    %v1731 = vunpack.c.h.b16 %v1646
    %v1732 = vunpack.c.l.b16 %v1647
    %v1733 = vunpack.c.h.b16 %v1647
    %v1734 = vunpack.c.l.b16 %v1648
    %v1735 = vunpack.c.h.b16 %v1648
    %v1736 = vunpack.c.l.b16 %v1649
    %v1737 = vunpack.c.h.b16 %v1649
    %v1738 = vunpack.c.l.b16 %v1650
    %v1739 = vunpack.c.h.b16 %v1650
    %v1740 = vunpack.c.l.b16 %v1651
    %v1741 = vunpack.c.h.b16 %v1651
    %v1742 = vunpack.c.l.b16 %v1652
    %v1743 = vunpack.c.h.b16 %v1652
    %v1744 = vunpack.c.l.b16 %v1653
    %v1745 = vunpack.c.h.b16 %v1653
    %v1746 = vunpack.c.l.b16 %v1654
    %v1747 = vunpack.c.h.b16 %v1654
    %v1748 = vunpack.c.l.b16 %v1655
    %v1749 = vunpack.c.h.b16 %v1655
    %v1750 = vunpack.c.l.b16 %v1656
    %v1751 = vunpack.c.h.b16 %v1656
    %v1752 = vunpack.c.l.b16 %v1657
    %v1753 = vunpack.c.h.b16 %v1657
    %v1754 = vpack.c.b16 %v1694, %v1690
    %v1755 = vpack.c.b16 %v1695, %v1691
    %v1756 = vpack.c.b16 %v1696, %v1692
    %v1757 = vpack.c.b16 %v1697, %v1693
    %v1758 = vpack.c.b16 %v1702, %v1698
    %v1759 = vpack.c.b16 %v1703, %v1699
    %v1760 = vpack.c.b16 %v1704, %v1700
    %v1761 = vpack.c.b16 %v1705, %v1701
    %v1762 = vpack.c.b16 %v1710, %v1706
    %v1763 = vpack.c.b16 %v1711, %v1707
    %v1764 = vpack.c.b16 %v1712, %v1708
    %v1765 = vpack.c.b16 %v1713, %v1709
    %v1766 = vpack.c.b16 %v1718, %v1714
    %v1767 = vpack.c.b16 %v1719, %v1715
    %v1768 = vpack.c.b16 %v1720, %v1716
    %v1769 = vpack.c.b16 %v1721, %v1717
    %v1770 = vpack.c.b16 %v1726, %v1722
    %v1771 = vpack.c.b16 %v1727, %v1723
    %v1772 = vpack.c.b16 %v1728, %v1724
    %v1773 = vpack.c.b16 %v1729, %v1725
    %v1774 = vpack.c.b16 %v1734, %v1730
    %v1775 = vpack.c.b16 %v1735, %v1731
    %v1776 = vpack.c.b16 %v1736, %v1732
    %v1777 = vpack.c.b16 %v1737, %v1733
    %v1778 = vpack.c.b16 %v1742, %v1738
    %v1779 = vpack.c.b16 %v1743, %v1739
    %v1780 = vpack.c.b16 %v1744, %v1740
    %v1781 = vpack.c.b16 %v1745, %v1741
    %v1782 = vpack.c.b16 %v1750, %v1746
    %v1783 = vpack.c.b16 %v1751, %v1747
    %v1784 = vpack.c.b16 %v1752, %v1748
    %v1785 = vpack.c.b16 %v1753, %v1749
    %1818 = vmatprep.subr.bf16.mxu0 %v1755
    %1819 = vmatpush1.bf16.msra.mxu0 %v1754
    %1820 = vmatprep.subr.bf16.mxu0 %v1759
    %1821 = vmatpush1.bf16.msra.mxu0 %v1758
    %1822 = vmatprep.subr.bf16.mxu0 %v1763
    %1823 = vmatpush1.bf16.msra.mxu0 %v1762
    %1824 = vmatprep.subr.bf16.mxu0 %v1767
    %1825 = vmatpush1.bf16.msra.mxu0 %v1766
    %1826 = vmatprep.subr.bf16.mxu0 %v1771
    %1827 = vmatpush1.bf16.msra.mxu0 %v1770
    %1828 = vmatprep.subr.bf16.mxu0 %v1775
    %1829 = vmatpush1.bf16.msra.mxu0 %v1774
    %1830 = vmatprep.subr.bf16.mxu0 %v1779
    %1831 = vmatpush1.bf16.msra.mxu0 %v1778
    %1832 = vmatprep.subr.bf16.mxu0 %v1783
    %1833 = vmatpush1.bf16.msra.mxu0 %v1782
    %1834 = vmatprep.subr.bf16.mxu0 0
    %1835 = vmatpush1.bf16.msra.mxu0 0
    %1836 = vmatprep.subr.bf16.mxu0 0
    %1837 = vmatpush1.bf16.msra.mxu0 0
    %1838 = vmatprep.subr.bf16.mxu0 0
    %1839 = vmatpush1.bf16.msra.mxu0 0
    %1840 = vmatprep.subr.bf16.mxu0 0
    %1841 = vmatpush1.bf16.msra.mxu0 0
    %1842 = vmatprep.subr.bf16.mxu0 0
    %1843 = vmatpush1.bf16.msra.mxu0 0
    %1844 = vmatprep.subr.bf16.mxu0 0
    %1845 = vmatpush1.bf16.msra.mxu0 0
    %1846 = vmatprep.subr.bf16.mxu0 0
    %1847 = vmatpush1.bf16.msra.mxu0 0
    %1848 = vmatprep.subr.bf16.mxu0 0
    %1849 = vmatpush1.bf16.msra.mxu0 0
    %1850 = vmatprep.mubr.bf16.mxu0 0
    %1851 = vmatmul.mubr.bf16.gmra.mrb[0].mxu0 %v1625
    %v1852 = vpop.f32.mrb[0].mxu0
    %v1853 = vadd.f32 0.0, %v1852
    %v1854 = vpop.f32.mrb[0].mxu0
    %v1855 = vadd.f32 0.0, %v1854
    %v1856 = vpop.f32.mrb[0].mxu0
    %v1857 = vpop.f32.mrb[0].mxu0
    %1858 = vdwg.mxu0
    %1859 = vmatprep.subr.bf16.mxu0 %v1757
    %1860 = vmatpush1.bf16.msra.mxu0 %v1756
    %1861 = vmatprep.subr.bf16.mxu0 %v1761
    %1862 = vmatpush1.bf16.msra.mxu0 %v1760
    %1863 = vmatprep.subr.bf16.mxu0 %v1765
    %1864 = vmatpush1.bf16.msra.mxu0 %v1764
    %1865 = vmatprep.subr.bf16.mxu0 %v1769
    %1866 = vmatpush1.bf16.msra.mxu0 %v1768
    %1867 = vmatprep.subr.bf16.mxu0 %v1773
    %1868 = vmatpush1.bf16.msra.mxu0 %v1772
    %1869 = vmatprep.subr.bf16.mxu0 %v1777
    %1870 = vmatpush1.bf16.msra.mxu0 %v1776
    %1871 = vmatprep.subr.bf16.mxu0 %v1781
    %1872 = vmatpush1.bf16.msra.mxu0 %v1780
    %1873 = vmatprep.subr.bf16.mxu0 %v1785
    %1874 = vmatpush1.bf16.msra.mxu0 %v1784
    %1875 = vmatprep.subr.bf16.mxu0 0
    %1876 = vmatpush1.bf16.msra.mxu0 0
    %1877 = vmatprep.subr.bf16.mxu0 0
    %1878 = vmatpush1.bf16.msra.mxu0 0
    %1879 = vmatprep.subr.bf16.mxu0 0
    %1880 = vmatpush1.bf16.msra.mxu0 0
    %1881 = vmatprep.subr.bf16.mxu0 0
    %1882 = vmatpush1.bf16.msra.mxu0 0
    %1883 = vmatprep.subr.bf16.mxu0 0
    %1884 = vmatpush1.bf16.msra.mxu0 0
    %1885 = vmatprep.subr.bf16.mxu0 0
    %1886 = vmatpush1.bf16.msra.mxu0 0
    %1887 = vmatprep.subr.bf16.mxu0 0
    %1888 = vmatpush1.bf16.msra.mxu0 0
    %1889 = vmatprep.subr.bf16.mxu0 0
    %1890 = vmatpush1.bf16.msra.mxu0 0
    %1891 = vmatprep.mubr.bf16.mxu0 0
    %1892 = vmatmul.mubr.bf16.gmra.mrb[0].mxu0 %v1625
    %v1893 = vpop.f32.mrb[0].mxu0
    %v1894 = vadd.f32 0.0, %v1893
    %v1895 = vpop.f32.mrb[0].mxu0
    %v1896 = vadd.f32 0.0, %v1895
    %v1897 = vpop.f32.mrb[0].mxu0
    %v1898 = vpop.f32.mrb[0].mxu0
    %1899 = vdwg.mxu0
    %v1900 = vadd.f32 %v1620, %v1853
    %v1901 = vadd.f32 %v1621, %v1855
    %v1902 = vadd.f32 %v1622, %v1894
    %v1903 = vadd.f32 %v1623, %v1896
    %v1904 = vxor.u32 %v1900, 2147483648
    %v1905 = vmul.f32 %v1904, 1.442695
    %v1906 = vpow.pop %v1905
    %v1907 = vadd.f32 %v1906, 1.0
    %v1908 = vrcp.pop %v1907
    %v1909 = vmul.f32 1.0, %v1908
    %v1910 = vxor.u32 %v1901, 2147483648
    %v1911 = vmul.f32 %v1910, 1.442695
    %v1912 = vpow.pop %v1911
    %v1913 = vadd.f32 %v1912, 1.0
    %v1914 = vrcp.pop %v1913
    %v1915 = vmul.f32 1.0, %v1914
    %v1916 = vtanh.pop %v1902
    %v1917 = vxor.u32 %v1903, 2147483648
    %v1918 = vmul.f32 %v1917, 1.442695
    %v1919 = vpow.pop %v1918
    %v1920 = vadd.f32 %v1919, 1.0
    %v1921 = vrcp.pop %v1920
    %v1922 = vmul.f32 1.0, %v1921
    %v1923 = vld [vmem:[#allocation4] sm:$0xff]
    %v1924 = vmul.f32 %v1915, %v1923
    %v1925 = vmul.f32 %v1909, %v1916
    %v1926 = vadd.f32 %v1924, %v1925
    %v1927 = vtanh.pop %v1926
    %v1928 = vmul.f32 %v1922, %v1927
    %1929 = vst [vmem:[#allocation3] sm:$0xff] %v1928
    %1930 = vst [vmem:[#allocation4] sm:$0xff] %v1926
    %v1931 = vpack.c.bf16 %v1928, %v1928
    %s1932 = scalar_lea.vmem [#allocation10], 16
    %1933 = vst [vmem:[%s1932] sm:$0xf] %v1931
    %v1934 = vld [vmem:[#allocation2 + $0xa0] sm:$0xff]
    %v1935 = vld [vmem:[#allocation2 + $0xa8] sm:$0xff]
    %v1936 = vld [vmem:[#allocation2 + $0xb0] sm:$0xff]
    %v1937 = vld [vmem:[#allocation2 + $0xb8] sm:$0xff]
    %v1938 = vld [vmem:[#allocation3] sm:$0xff]
    %v1939 = vpack.c.bf16 %v1938, %v1938
    %v1940 = vld [vmem:[#allocation8] sm:$0xff]
    %v1941 = vld [vmem:[#allocation8 + $0x8] sm:$0xff]
    %v1942 = vld [vmem:[#allocation8 + $0x10] sm:$0xff]
    %v1943 = vld [vmem:[#allocation8 + $0x18] sm:$0xff]
    %v1944 = vld [vmem:[#allocation8 + $0x20] sm:$0xff]
    %v1945 = vld [vmem:[#allocation8 + $0x28] sm:$0xff]
    %v1946 = vld [vmem:[#allocation8 + $0x30] sm:$0xff]
    %v1947 = vld [vmem:[#allocation8 + $0x38] sm:$0xff]
    %v1948 = vld [vmem:[#allocation8 + $0x40] sm:$0xff]
    %v1949 = vld [vmem:[#allocation8 + $0x48] sm:$0xff]
    %v1950 = vld [vmem:[#allocation8 + $0x50] sm:$0xff]
    %v1951 = vld [vmem:[#allocation8 + $0x58] sm:$0xff]
    %v1952 = vld [vmem:[#allocation8 + $0x60] sm:$0xff]
    %v1953 = vld [vmem:[#allocation8 + $0x68] sm:$0xff]
    %v1954 = vld [vmem:[#allocation8 + $0x70] sm:$0xff]
    %v1955 = vld [vmem:[#allocation8 + $0x78] sm:$0xff]
    %v1956 = vld [vmem:[#allocation8 + $0x80] sm:$0xff]
    %v1957 = vld [vmem:[#allocation8 + $0x88] sm:$0xff]
    %v1958 = vld [vmem:[#allocation8 + $0x90] sm:$0xff]
    %v1959 = vld [vmem:[#allocation8 + $0x98] sm:$0xff]
    %v1960 = vld [vmem:[#allocation8 + $0xa0] sm:$0xff]
    %v1961 = vld [vmem:[#allocation8 + $0xa8] sm:$0xff]
    %v1962 = vld [vmem:[#allocation8 + $0xb0] sm:$0xff]
    %v1963 = vld [vmem:[#allocation8 + $0xb8] sm:$0xff]
    %v1964 = vld [vmem:[#allocation8 + $0xc0] sm:$0xff]
    %v1965 = vld [vmem:[#allocation8 + $0xc8] sm:$0xff]
    %v1966 = vld [vmem:[#allocation8 + $0xd0] sm:$0xff]
    %v1967 = vld [vmem:[#allocation8 + $0xd8] sm:$0xff]
    %v1968 = vld [vmem:[#allocation8 + $0xe0] sm:$0xff]
    %v1969 = vld [vmem:[#allocation8 + $0xe8] sm:$0xff]
    %v1970 = vld [vmem:[#allocation8 + $0xf0] sm:$0xff]
    %v1971 = vld [vmem:[#allocation8 + $0xf8] sm:$0xff]
    %v2004 = vunpack.c.l.b16 %v1940
    %v2005 = vunpack.c.h.b16 %v1940
    %v2006 = vunpack.c.l.b16 %v1941
    %v2007 = vunpack.c.h.b16 %v1941
    %v2008 = vunpack.c.l.b16 %v1942
    %v2009 = vunpack.c.h.b16 %v1942
    %v2010 = vunpack.c.l.b16 %v1943
    %v2011 = vunpack.c.h.b16 %v1943
    %v2012 = vunpack.c.l.b16 %v1944
    %v2013 = vunpack.c.h.b16 %v1944
    %v2014 = vunpack.c.l.b16 %v1945
    %v2015 = vunpack.c.h.b16 %v1945
    %v2016 = vunpack.c.l.b16 %v1946
    %v2017 = vunpack.c.h.b16 %v1946
    %v2018 = vunpack.c.l.b16 %v1947
    %v2019 = vunpack.c.h.b16 %v1947
    %v2020 = vunpack.c.l.b16 %v1948
    %v2021 = vunpack.c.h.b16 %v1948
    %v2022 = vunpack.c.l.b16 %v1949
    %v2023 = vunpack.c.h.b16 %v1949
    %v2024 = vunpack.c.l.b16 %v1950
    %v2025 = vunpack.c.h.b16 %v1950
    %v2026 = vunpack.c.l.b16 %v1951
    %v2027 = vunpack.c.h.b16 %v1951
    %v2028 = vunpack.c.l.b16 %v1952
    %v2029 = vunpack.c.h.b16 %v1952
    %v2030 = vunpack.c.l.b16 %v1953
    %v2031 = vunpack.c.h.b16 %v1953
    %v2032 = vunpack.c.l.b16 %v1954
    %v2033 = vunpack.c.h.b16 %v1954
    %v2034 = vunpack.c.l.b16 %v1955
    %v2035 = vunpack.c.h.b16 %v1955
    %v2036 = vunpack.c.l.b16 %v1956
    %v2037 = vunpack.c.h.b16 %v1956
    %v2038 = vunpack.c.l.b16 %v1957
    %v2039 = vunpack.c.h.b16 %v1957
    %v2040 = vunpack.c.l.b16 %v1958
    %v2041 = vunpack.c.h.b16 %v1958
    %v2042 = vunpack.c.l.b16 %v1959
    %v2043 = vunpack.c.h.b16 %v1959
    %v2044 = vunpack.c.l.b16 %v1960
    %v2045 = vunpack.c.h.b16 %v1960
    %v2046 = vunpack.c.l.b16 %v1961
    %v2047 = vunpack.c.h.b16 %v1961
    %v2048 = vunpack.c.l.b16 %v1962
    %v2049 = vunpack.c.h.b16 %v1962
    %v2050 = vunpack.c.l.b16 %v1963
    %v2051 = vunpack.c.h.b16 %v1963
    %v2052 = vunpack.c.l.b16 %v1964
    %v2053 = vunpack.c.h.b16 %v1964
    %v2054 = vunpack.c.l.b16 %v1965
    %v2055 = vunpack.c.h.b16 %v1965
    %v2056 = vunpack.c.l.b16 %v1966
    %v2057 = vunpack.c.h.b16 %v1966
    %v2058 = vunpack.c.l.b16 %v1967
    %v2059 = vunpack.c.h.b16 %v1967
    %v2060 = vunpack.c.l.b16 %v1968
    %v2061 = vunpack.c.h.b16 %v1968
    %v2062 = vunpack.c.l.b16 %v1969
    %v2063 = vunpack.c.h.b16 %v1969
    %v2064 = vunpack.c.l.b16 %v1970
    %v2065 = vunpack.c.h.b16 %v1970
    %v2066 = vunpack.c.l.b16 %v1971
    %v2067 = vunpack.c.h.b16 %v1971
    %v2068 = vpack.c.b16 %v2008, %v2004
    %v2069 = vpack.c.b16 %v2009, %v2005
    %v2070 = vpack.c.b16 %v2010, %v2006
    %v2071 = vpack.c.b16 %v2011, %v2007
    %v2072 = vpack.c.b16 %v2016, %v2012
    %v2073 = vpack.c.b16 %v2017, %v2013
    %v2074 = vpack.c.b16 %v2018, %v2014
    %v2075 = vpack.c.b16 %v2019, %v2015
    %v2076 = vpack.c.b16 %v2024, %v2020
    %v2077 = vpack.c.b16 %v2025, %v2021
    %v2078 = vpack.c.b16 %v2026, %v2022
    %v2079 = vpack.c.b16 %v2027, %v2023
    %v2080 = vpack.c.b16 %v2032, %v2028
    %v2081 = vpack.c.b16 %v2033, %v2029
    %v2082 = vpack.c.b16 %v2034, %v2030
    %v2083 = vpack.c.b16 %v2035, %v2031
    %v2084 = vpack.c.b16 %v2040, %v2036
    %v2085 = vpack.c.b16 %v2041, %v2037
    %v2086 = vpack.c.b16 %v2042, %v2038
    %v2087 = vpack.c.b16 %v2043, %v2039
    %v2088 = vpack.c.b16 %v2048, %v2044
    %v2089 = vpack.c.b16 %v2049, %v2045
    %v2090 = vpack.c.b16 %v2050, %v2046
    %v2091 = vpack.c.b16 %v2051, %v2047
    %v2092 = vpack.c.b16 %v2056, %v2052
    %v2093 = vpack.c.b16 %v2057, %v2053
    %v2094 = vpack.c.b16 %v2058, %v2054
    %v2095 = vpack.c.b16 %v2059, %v2055
    %v2096 = vpack.c.b16 %v2064, %v2060
    %v2097 = vpack.c.b16 %v2065, %v2061
    %v2098 = vpack.c.b16 %v2066, %v2062
    %v2099 = vpack.c.b16 %v2067, %v2063
    %2132 = vmatprep.subr.bf16.mxu0 %v2069
    %2133 = vmatpush1.bf16.msra.mxu0 %v2068
    %2134 = vmatprep.subr.bf16.mxu0 %v2073
    %2135 = vmatpush1.bf16.msra.mxu0 %v2072
    %2136 = vmatprep.subr.bf16.mxu0 %v2077
    %2137 = vmatpush1.bf16.msra.mxu0 %v2076
    %2138 = vmatprep.subr.bf16.mxu0 %v2081
    %2139 = vmatpush1.bf16.msra.mxu0 %v2080
    %2140 = vmatprep.subr.bf16.mxu0 %v2085
    %2141 = vmatpush1.bf16.msra.mxu0 %v2084
    %2142 = vmatprep.subr.bf16.mxu0 %v2089
    %2143 = vmatpush1.bf16.msra.mxu0 %v2088
    %2144 = vmatprep.subr.bf16.mxu0 %v2093
    %2145 = vmatpush1.bf16.msra.mxu0 %v2092
    %2146 = vmatprep.subr.bf16.mxu0 %v2097
    %2147 = vmatpush1.bf16.msra.mxu0 %v2096
    %2148 = vmatprep.subr.bf16.mxu0 0
    %2149 = vmatpush1.bf16.msra.mxu0 0
    %2150 = vmatprep.subr.bf16.mxu0 0
    %2151 = vmatpush1.bf16.msra.mxu0 0
    %2152 = vmatprep.subr.bf16.mxu0 0
    %2153 = vmatpush1.bf16.msra.mxu0 0
    %2154 = vmatprep.subr.bf16.mxu0 0
    %2155 = vmatpush1.bf16.msra.mxu0 0
    %2156 = vmatprep.subr.bf16.mxu0 0
    %2157 = vmatpush1.bf16.msra.mxu0 0
    %2158 = vmatprep.subr.bf16.mxu0 0
    %2159 = vmatpush1.bf16.msra.mxu0 0
    %2160 = vmatprep.subr.bf16.mxu0 0
    %2161 = vmatpush1.bf16.msra.mxu0 0
    %2162 = vmatprep.subr.bf16.mxu0 0
    %2163 = vmatpush1.bf16.msra.mxu0 0
    %2164 = vmatprep.mubr.bf16.mxu0 0
    %2165 = vmatmul.mubr.bf16.gmra.mrb[0].mxu0 %v1939
    %v2166 = vpop.f32.mrb[0].mxu0
    %v2167 = vadd.f32 0.0, %v2166
    %v2168 = vpop.f32.mrb[0].mxu0
    %v2169 = vadd.f32 0.0, %v2168
    %v2170 = vpop.f32.mrb[0].mxu0
    %v2171 = vpop.f32.mrb[0].mxu0
    %2172 = vdwg.mxu0
    %2173 = vmatprep.subr.bf16.mxu0 %v2071
    %2174 = vmatpush1.bf16.msra.mxu0 %v2070
    %2175 = vmatprep.subr.bf16.mxu0 %v2075
    %2176 = vmatpush1.bf16.msra.mxu0 %v2074
    %2177 = vmatprep.subr.bf16.mxu0 %v2079
    %2178 = vmatpush1.bf16.msra.mxu0 %v2078
    %2179 = vmatprep.subr.bf16.mxu0 %v2083
    %2180 = vmatpush1.bf16.msra.mxu0 %v2082
    %2181 = vmatprep.subr.bf16.mxu0 %v2087
    %2182 = vmatpush1.bf16.msra.mxu0 %v2086
    %2183 = vmatprep.subr.bf16.mxu0 %v2091
    %2184 = vmatpush1.bf16.msra.mxu0 %v2090
    %2185 = vmatprep.subr.bf16.mxu0 %v2095
    %2186 = vmatpush1.bf16.msra.mxu0 %v2094
    %2187 = vmatprep.subr.bf16.mxu0 %v2099
    %2188 = vmatpush1.bf16.msra.mxu0 %v2098
    %2189 = vmatprep.subr.bf16.mxu0 0
    %2190 = vmatpush1.bf16.msra.mxu0 0
    %2191 = vmatprep.subr.bf16.mxu0 0
    %2192 = vmatpush1.bf16.msra.mxu0 0
    %2193 = vmatprep.subr.bf16.mxu0 0
    %2194 = vmatpush1.bf16.msra.mxu0 0
    %2195 = vmatprep.subr.bf16.mxu0 0
    %2196 = vmatpush1.bf16.msra.mxu0 0
    %2197 = vmatprep.subr.bf16.mxu0 0
    %2198 = vmatpush1.bf16.msra.mxu0 0
    %2199 = vmatprep.subr.bf16.mxu0 0
    %2200 = vmatpush1.bf16.msra.mxu0 0
    %2201 = vmatprep.subr.bf16.mxu0 0
    %2202 = vmatpush1.bf16.msra.mxu0 0
    %2203 = vmatprep.subr.bf16.mxu0 0
    %2204 = vmatpush1.bf16.msra.mxu0 0
    %2205 = vmatprep.mubr.bf16.mxu0 0
    %2206 = vmatmul.mubr.bf16.gmra.mrb[0].mxu0 %v1939
    %v2207 = vpop.f32.mrb[0].mxu0
    %v2208 = vadd.f32 0.0, %v2207
    %v2209 = vpop.f32.mrb[0].mxu0
    %v2210 = vadd.f32 0.0, %v2209
    %v2211 = vpop.f32.mrb[0].mxu0
    %v2212 = vpop.f32.mrb[0].mxu0
    %2213 = vdwg.mxu0
    %v2214 = vadd.f32 %v1934, %v2167
    %v2215 = vadd.f32 %v1935, %v2169
    %v2216 = vadd.f32 %v1936, %v2208
    %v2217 = vadd.f32 %v1937, %v2210
    %v2218 = vxor.u32 %v2214, 2147483648
    %v2219 = vmul.f32 %v2218, 1.442695
    %v2220 = vpow.pop %v2219
    %v2221 = vadd.f32 %v2220, 1.0
    %v2222 = vrcp.pop %v2221
    %v2223 = vmul.f32 1.0, %v2222
    %v2224 = vxor.u32 %v2215, 2147483648
    %v2225 = vmul.f32 %v2224, 1.442695
    %v2226 = vpow.pop %v2225
    %v2227 = vadd.f32 %v2226, 1.0
    %v2228 = vrcp.pop %v2227
    %v2229 = vmul.f32 1.0, %v2228
    %v2230 = vtanh.pop %v2216
    %v2231 = vxor.u32 %v2217, 2147483648
    %v2232 = vmul.f32 %v2231, 1.442695
    %v2233 = vpow.pop %v2232
    %v2234 = vadd.f32 %v2233, 1.0
    %v2235 = vrcp.pop %v2234
    %v2236 = vmul.f32 1.0, %v2235
    %v2237 = vld [vmem:[#allocation4] sm:$0xff]
    %v2238 = vmul.f32 %v2229, %v2237
    %v2239 = vmul.f32 %v2223, %v2230
    %v2240 = vadd.f32 %v2238, %v2239
    %v2241 = vtanh.pop %v2240
    %v2242 = vmul.f32 %v2236, %v2241
    %2243 = vst [vmem:[#allocation3] sm:$0xff] %v2242
    %2244 = vst [vmem:[#allocation4] sm:$0xff] %v2240
    %v2245 = vpack.c.bf16 %v2242, %v2242
    %s2246 = scalar_lea.vmem [#allocation10], 20
    %2247 = vst [vmem:[%s2246] sm:$0xf] %v2245
    %v2248 = vld [vmem:[#allocation2 + $0xc0] sm:$0xff]
    %v2249 = vld [vmem:[#allocation2 + $0xc8] sm:$0xff]
    %v2250 = vld [vmem:[#allocation2 + $0xd0] sm:$0xff]
    %v2251 = vld [vmem:[#allocation2 + $0xd8] sm:$0xff]
    %v2252 = vld [vmem:[#allocation3] sm:$0xff]
    %v2253 = vpack.c.bf16 %v2252, %v2252
    %v2254 = vld [vmem:[#allocation8] sm:$0xff]
    %v2255 = vld [vmem:[#allocation8 + $0x8] sm:$0xff]
    %v2256 = vld [vmem:[#allocation8 + $0x10] sm:$0xff]
    %v2257 = vld [vmem:[#allocation8 + $0x18] sm:$0xff]
    %v2258 = vld [vmem:[#allocation8 + $0x20] sm:$0xff]
    %v2259 = vld [vmem:[#allocation8 + $0x28] sm:$0xff]
    %v2260 = vld [vmem:[#allocation8 + $0x30] sm:$0xff]
    %v2261 = vld [vmem:[#allocation8 + $0x38] sm:$0xff]
    %v2262 = vld [vmem:[#allocation8 + $0x40] sm:$0xff]
    %v2263 = vld [vmem:[#allocation8 + $0x48] sm:$0xff]
    %v2264 = vld [vmem:[#allocation8 + $0x50] sm:$0xff]
    %v2265 = vld [vmem:[#allocation8 + $0x58] sm:$0xff]
    %v2266 = vld [vmem:[#allocation8 + $0x60] sm:$0xff]
    %v2267 = vld [vmem:[#allocation8 + $0x68] sm:$0xff]
    %v2268 = vld [vmem:[#allocation8 + $0x70] sm:$0xff]
    %v2269 = vld [vmem:[#allocation8 + $0x78] sm:$0xff]
    %v2270 = vld [vmem:[#allocation8 + $0x80] sm:$0xff]
    %v2271 = vld [vmem:[#allocation8 + $0x88] sm:$0xff]
    %v2272 = vld [vmem:[#allocation8 + $0x90] sm:$0xff]
    %v2273 = vld [vmem:[#allocation8 + $0x98] sm:$0xff]
    %v2274 = vld [vmem:[#allocation8 + $0xa0] sm:$0xff]
    %v2275 = vld [vmem:[#allocation8 + $0xa8] sm:$0xff]
    %v2276 = vld [vmem:[#allocation8 + $0xb0] sm:$0xff]
    %v2277 = vld [vmem:[#allocation8 + $0xb8] sm:$0xff]
    %v2278 = vld [vmem:[#allocation8 + $0xc0] sm:$0xff]
    %v2279 = vld [vmem:[#allocation8 + $0xc8] sm:$0xff]
    %v2280 = vld [vmem:[#allocation8 + $0xd0] sm:$0xff]
    %v2281 = vld [vmem:[#allocation8 + $0xd8] sm:$0xff]
    %v2282 = vld [vmem:[#allocation8 + $0xe0] sm:$0xff]
    %v2283 = vld [vmem:[#allocation8 + $0xe8] sm:$0xff]
    %v2284 = vld [vmem:[#allocation8 + $0xf0] sm:$0xff]
    %v2285 = vld [vmem:[#allocation8 + $0xf8] sm:$0xff]
    %v2318 = vunpack.c.l.b16 %v2254
    %v2319 = vunpack.c.h.b16 %v2254
    %v2320 = vunpack.c.l.b16 %v2255
    %v2321 = vunpack.c.h.b16 %v2255
    %v2322 = vunpack.c.l.b16 %v2256
    %v2323 = vunpack.c.h.b16 %v2256
    %v2324 = vunpack.c.l.b16 %v2257
    %v2325 = vunpack.c.h.b16 %v2257
    %v2326 = vunpack.c.l.b16 %v2258
    %v2327 = vunpack.c.h.b16 %v2258
    %v2328 = vunpack.c.l.b16 %v2259
    %v2329 = vunpack.c.h.b16 %v2259
    %v2330 = vunpack.c.l.b16 %v2260
    %v2331 = vunpack.c.h.b16 %v2260
    %v2332 = vunpack.c.l.b16 %v2261
    %v2333 = vunpack.c.h.b16 %v2261
    %v2334 = vunpack.c.l.b16 %v2262
    %v2335 = vunpack.c.h.b16 %v2262
    %v2336 = vunpack.c.l.b16 %v2263
    %v2337 = vunpack.c.h.b16 %v2263
    %v2338 = vunpack.c.l.b16 %v2264
    %v2339 = vunpack.c.h.b16 %v2264
    %v2340 = vunpack.c.l.b16 %v2265
    %v2341 = vunpack.c.h.b16 %v2265
    %v2342 = vunpack.c.l.b16 %v2266
    %v2343 = vunpack.c.h.b16 %v2266
    %v2344 = vunpack.c.l.b16 %v2267
    %v2345 = vunpack.c.h.b16 %v2267
    %v2346 = vunpack.c.l.b16 %v2268
    %v2347 = vunpack.c.h.b16 %v2268
    %v2348 = vunpack.c.l.b16 %v2269
    %v2349 = vunpack.c.h.b16 %v2269
    %v2350 = vunpack.c.l.b16 %v2270
    %v2351 = vunpack.c.h.b16 %v2270
    %v2352 = vunpack.c.l.b16 %v2271
    %v2353 = vunpack.c.h.b16 %v2271
    %v2354 = vunpack.c.l.b16 %v2272
    %v2355 = vunpack.c.h.b16 %v2272
    %v2356 = vunpack.c.l.b16 %v2273
    %v2357 = vunpack.c.h.b16 %v2273
    %v2358 = vunpack.c.l.b16 %v2274
    %v2359 = vunpack.c.h.b16 %v2274
    %v2360 = vunpack.c.l.b16 %v2275
    %v2361 = vunpack.c.h.b16 %v2275
    %v2362 = vunpack.c.l.b16 %v2276
    %v2363 = vunpack.c.h.b16 %v2276
    %v2364 = vunpack.c.l.b16 %v2277
    %v2365 = vunpack.c.h.b16 %v2277
    %v2366 = vunpack.c.l.b16 %v2278
    %v2367 = vunpack.c.h.b16 %v2278
    %v2368 = vunpack.c.l.b16 %v2279
    %v2369 = vunpack.c.h.b16 %v2279
    %v2370 = vunpack.c.l.b16 %v2280
    %v2371 = vunpack.c.h.b16 %v2280
    %v2372 = vunpack.c.l.b16 %v2281
    %v2373 = vunpack.c.h.b16 %v2281
    %v2374 = vunpack.c.l.b16 %v2282
    %v2375 = vunpack.c.h.b16 %v2282
    %v2376 = vunpack.c.l.b16 %v2283
    %v2377 = vunpack.c.h.b16 %v2283
    %v2378 = vunpack.c.l.b16 %v2284
    %v2379 = vunpack.c.h.b16 %v2284
    %v2380 = vunpack.c.l.b16 %v2285
    %v2381 = vunpack.c.h.b16 %v2285
    %v2382 = vpack.c.b16 %v2322, %v2318
    %v2383 = vpack.c.b16 %v2323, %v2319
    %v2384 = vpack.c.b16 %v2324, %v2320
    %v2385 = vpack.c.b16 %v2325, %v2321
    %v2386 = vpack.c.b16 %v2330, %v2326
    %v2387 = vpack.c.b16 %v2331, %v2327
    %v2388 = vpack.c.b16 %v2332, %v2328
    %v2389 = vpack.c.b16 %v2333, %v2329
    %v2390 = vpack.c.b16 %v2338, %v2334
    %v2391 = vpack.c.b16 %v2339, %v2335
    %v2392 = vpack.c.b16 %v2340, %v2336
    %v2393 = vpack.c.b16 %v2341, %v2337
    %v2394 = vpack.c.b16 %v2346, %v2342
    %v2395 = vpack.c.b16 %v2347, %v2343
    %v2396 = vpack.c.b16 %v2348, %v2344
    %v2397 = vpack.c.b16 %v2349, %v2345
    %v2398 = vpack.c.b16 %v2354, %v2350
    %v2399 = vpack.c.b16 %v2355, %v2351
    %v2400 = vpack.c.b16 %v2356, %v2352
    %v2401 = vpack.c.b16 %v2357, %v2353
    %v2402 = vpack.c.b16 %v2362, %v2358
    %v2403 = vpack.c.b16 %v2363, %v2359
    %v2404 = vpack.c.b16 %v2364, %v2360
    %v2405 = vpack.c.b16 %v2365, %v2361
    %v2406 = vpack.c.b16 %v2370, %v2366
    %v2407 = vpack.c.b16 %v2371, %v2367
    %v2408 = vpack.c.b16 %v2372, %v2368
    %v2409 = vpack.c.b16 %v2373, %v2369
    %v2410 = vpack.c.b16 %v2378, %v2374
    %v2411 = vpack.c.b16 %v2379, %v2375
    %v2412 = vpack.c.b16 %v2380, %v2376
    %v2413 = vpack.c.b16 %v2381, %v2377
    %2446 = vmatprep.subr.bf16.mxu0 %v2383
    %2447 = vmatpush1.bf16.msra.mxu0 %v2382
    %2448 = vmatprep.subr.bf16.mxu0 %v2387
    %2449 = vmatpush1.bf16.msra.mxu0 %v2386
    %2450 = vmatprep.subr.bf16.mxu0 %v2391
    %2451 = vmatpush1.bf16.msra.mxu0 %v2390
    %2452 = vmatprep.subr.bf16.mxu0 %v2395
    %2453 = vmatpush1.bf16.msra.mxu0 %v2394
    %2454 = vmatprep.subr.bf16.mxu0 %v2399
    %2455 = vmatpush1.bf16.msra.mxu0 %v2398
    %2456 = vmatprep.subr.bf16.mxu0 %v2403
    %2457 = vmatpush1.bf16.msra.mxu0 %v2402
    %2458 = vmatprep.subr.bf16.mxu0 %v2407
    %2459 = vmatpush1.bf16.msra.mxu0 %v2406
    %2460 = vmatprep.subr.bf16.mxu0 %v2411
    %2461 = vmatpush1.bf16.msra.mxu0 %v2410
    %2462 = vmatprep.subr.bf16.mxu0 0
    %2463 = vmatpush1.bf16.msra.mxu0 0
    %2464 = vmatprep.subr.bf16.mxu0 0
    %2465 = vmatpush1.bf16.msra.mxu0 0
    %2466 = vmatprep.subr.bf16.mxu0 0
    %2467 = vmatpush1.bf16.msra.mxu0 0
    %2468 = vmatprep.subr.bf16.mxu0 0
    %2469 = vmatpush1.bf16.msra.mxu0 0
    %2470 = vmatprep.subr.bf16.mxu0 0
    %2471 = vmatpush1.bf16.msra.mxu0 0
    %2472 = vmatprep.subr.bf16.mxu0 0
    %2473 = vmatpush1.bf16.msra.mxu0 0
    %2474 = vmatprep.subr.bf16.mxu0 0
    %2475 = vmatpush1.bf16.msra.mxu0 0
    %2476 = vmatprep.subr.bf16.mxu0 0
    %2477 = vmatpush1.bf16.msra.mxu0 0
    %2478 = vmatprep.mubr.bf16.mxu0 0
    %2479 = vmatmul.mubr.bf16.gmra.mrb[0].mxu0 %v2253
    %v2480 = vpop.f32.mrb[0].mxu0
    %v2481 = vadd.f32 0.0, %v2480
    %v2482 = vpop.f32.mrb[0].mxu0
    %v2483 = vadd.f32 0.0, %v2482
    %v2484 = vpop.f32.mrb[0].mxu0
    %v2485 = vpop.f32.mrb[0].mxu0
    %2486 = vdwg.mxu0
    %2487 = vmatprep.subr.bf16.mxu0 %v2385
    %2488 = vmatpush1.bf16.msra.mxu0 %v2384
    %2489 = vmatprep.subr.bf16.mxu0 %v2389
    %2490 = vmatpush1.bf16.msra.mxu0 %v2388
    %2491 = vmatprep.subr.bf16.mxu0 %v2393
    %2492 = vmatpush1.bf16.msra.mxu0 %v2392
    %2493 = vmatprep.subr.bf16.mxu0 %v2397
    %2494 = vmatpush1.bf16.msra.mxu0 %v2396
    %2495 = vmatprep.subr.bf16.mxu0 %v2401
    %2496 = vmatpush1.bf16.msra.mxu0 %v2400
    %2497 = vmatprep.subr.bf16.mxu0 %v2405
    %2498 = vmatpush1.bf16.msra.mxu0 %v2404
    %2499 = vmatprep.subr.bf16.mxu0 %v2409
    %2500 = vmatpush1.bf16.msra.mxu0 %v2408
    %2501 = vmatprep.subr.bf16.mxu0 %v2413
    %2502 = vmatpush1.bf16.msra.mxu0 %v2412
    %2503 = vmatprep.subr.bf16.mxu0 0
    %2504 = vmatpush1.bf16.msra.mxu0 0
    %2505 = vmatprep.subr.bf16.mxu0 0
    %2506 = vmatpush1.bf16.msra.mxu0 0
    %2507 = vmatprep.subr.bf16.mxu0 0
    %2508 = vmatpush1.bf16.msra.mxu0 0
    %2509 = vmatprep.subr.bf16.mxu0 0
    %2510 = vmatpush1.bf16.msra.mxu0 0
    %2511 = vmatprep.subr.bf16.mxu0 0
    %2512 = vmatpush1.bf16.msra.mxu0 0
    %2513 = vmatprep.subr.bf16.mxu0 0
    %2514 = vmatpush1.bf16.msra.mxu0 0
    %2515 = vmatprep.subr.bf16.mxu0 0
    %2516 = vmatpush1.bf16.msra.mxu0 0
    %2517 = vmatprep.subr.bf16.mxu0 0
    %2518 = vmatpush1.bf16.msra.mxu0 0
    %2519 = vmatprep.mubr.bf16.mxu0 0
    %2520 = vmatmul.mubr.bf16.gmra.mrb[0].mxu0 %v2253
    %v2521 = vpop.f32.mrb[0].mxu0
    %v2522 = vadd.f32 0.0, %v2521
    %v2523 = vpop.f32.mrb[0].mxu0
    %v2524 = vadd.f32 0.0, %v2523
    %v2525 = vpop.f32.mrb[0].mxu0
    %v2526 = vpop.f32.mrb[0].mxu0
    %2527 = vdwg.mxu0
    %v2528 = vadd.f32 %v2248, %v2481
    %v2529 = vadd.f32 %v2249, %v2483
    %v2530 = vadd.f32 %v2250, %v2522
    %v2531 = vadd.f32 %v2251, %v2524
    %v2532 = vxor.u32 %v2528, 2147483648
    %v2533 = vmul.f32 %v2532, 1.442695
    %v2534 = vpow.pop %v2533
    %v2535 = vadd.f32 %v2534, 1.0
    %v2536 = vrcp.pop %v2535
    %v2537 = vmul.f32 1.0, %v2536
    %v2538 = vxor.u32 %v2529, 2147483648
    %v2539 = vmul.f32 %v2538, 1.442695
    %v2540 = vpow.pop %v2539
    %v2541 = vadd.f32 %v2540, 1.0
    %v2542 = vrcp.pop %v2541
    %v2543 = vmul.f32 1.0, %v2542
    %v2544 = vtanh.pop %v2530
    %v2545 = vxor.u32 %v2531, 2147483648
    %v2546 = vmul.f32 %v2545, 1.442695
    %v2547 = vpow.pop %v2546
    %v2548 = vadd.f32 %v2547, 1.0
    %v2549 = vrcp.pop %v2548
    %v2550 = vmul.f32 1.0, %v2549
    %v2551 = vld [vmem:[#allocation4] sm:$0xff]
    %v2552 = vmul.f32 %v2543, %v2551
    %v2553 = vmul.f32 %v2537, %v2544
    %v2554 = vadd.f32 %v2552, %v2553
    %v2555 = vtanh.pop %v2554
    %v2556 = vmul.f32 %v2550, %v2555
    %2557 = vst [vmem:[#allocation3] sm:$0xff] %v2556
    %2558 = vst [vmem:[#allocation4] sm:$0xff] %v2554
    %v2559 = vpack.c.bf16 %v2556, %v2556
    %s2560 = scalar_lea.vmem [#allocation10], 24
    %2561 = vst [vmem:[%s2560] sm:$0xf] %v2559
    %v2562 = vld [vmem:[#allocation2 + $0xe0] sm:$0xff]
    %v2563 = vld [vmem:[#allocation2 + $0xe8] sm:$0xff]
    %v2564 = vld [vmem:[#allocation2 + $0xf0] sm:$0xff]
    %v2565 = vld [vmem:[#allocation2 + $0xf8] sm:$0xff]
    %v2566 = vld [vmem:[#allocation3] sm:$0xff]
    %v2567 = vpack.c.bf16 %v2566, %v2566
    %v2568 = vld [vmem:[#allocation8] sm:$0xff]
    %v2569 = vld [vmem:[#allocation8 + $0x8] sm:$0xff]
    %v2570 = vld [vmem:[#allocation8 + $0x10] sm:$0xff]
    %v2571 = vld [vmem:[#allocation8 + $0x18] sm:$0xff]
    %v2572 = vld [vmem:[#allocation8 + $0x20] sm:$0xff]
    %v2573 = vld [vmem:[#allocation8 + $0x28] sm:$0xff]
    %v2574 = vld [vmem:[#allocation8 + $0x30] sm:$0xff]
    %v2575 = vld [vmem:[#allocation8 + $0x38] sm:$0xff]
    %v2576 = vld [vmem:[#allocation8 + $0x40] sm:$0xff]
    %v2577 = vld [vmem:[#allocation8 + $0x48] sm:$0xff]
    %v2578 = vld [vmem:[#allocation8 + $0x50] sm:$0xff]
    %v2579 = vld [vmem:[#allocation8 + $0x58] sm:$0xff]
    %v2580 = vld [vmem:[#allocation8 + $0x60] sm:$0xff]
    %v2581 = vld [vmem:[#allocation8 + $0x68] sm:$0xff]
    %v2582 = vld [vmem:[#allocation8 + $0x70] sm:$0xff]
    %v2583 = vld [vmem:[#allocation8 + $0x78] sm:$0xff]
    %v2584 = vld [vmem:[#allocation8 + $0x80] sm:$0xff]
    %v2585 = vld [vmem:[#allocation8 + $0x88] sm:$0xff]
    %v2586 = vld [vmem:[#allocation8 + $0x90] sm:$0xff]
    %v2587 = vld [vmem:[#allocation8 + $0x98] sm:$0xff]
    %v2588 = vld [vmem:[#allocation8 + $0xa0] sm:$0xff]
    %v2589 = vld [vmem:[#allocation8 + $0xa8] sm:$0xff]
    %v2590 = vld [vmem:[#allocation8 + $0xb0] sm:$0xff]
    %v2591 = vld [vmem:[#allocation8 + $0xb8] sm:$0xff]
    %v2592 = vld [vmem:[#allocation8 + $0xc0] sm:$0xff]
    %v2593 = vld [vmem:[#allocation8 + $0xc8] sm:$0xff]
    %v2594 = vld [vmem:[#allocation8 + $0xd0] sm:$0xff]
    %v2595 = vld [vmem:[#allocation8 + $0xd8] sm:$0xff]
    %v2596 = vld [vmem:[#allocation8 + $0xe0] sm:$0xff]
    %v2597 = vld [vmem:[#allocation8 + $0xe8] sm:$0xff]
    %v2598 = vld [vmem:[#allocation8 + $0xf0] sm:$0xff]
    %v2599 = vld [vmem:[#allocation8 + $0xf8] sm:$0xff]
    %v2632 = vunpack.c.l.b16 %v2568
    %v2633 = vunpack.c.h.b16 %v2568
    %v2634 = vunpack.c.l.b16 %v2569
    %v2635 = vunpack.c.h.b16 %v2569
    %v2636 = vunpack.c.l.b16 %v2570
    %v2637 = vunpack.c.h.b16 %v2570
    %v2638 = vunpack.c.l.b16 %v2571
    %v2639 = vunpack.c.h.b16 %v2571
    %v2640 = vunpack.c.l.b16 %v2572
    %v2641 = vunpack.c.h.b16 %v2572
    %v2642 = vunpack.c.l.b16 %v2573
    %v2643 = vunpack.c.h.b16 %v2573
    %v2644 = vunpack.c.l.b16 %v2574
    %v2645 = vunpack.c.h.b16 %v2574
    %v2646 = vunpack.c.l.b16 %v2575
    %v2647 = vunpack.c.h.b16 %v2575
    %v2648 = vunpack.c.l.b16 %v2576
    %v2649 = vunpack.c.h.b16 %v2576
    %v2650 = vunpack.c.l.b16 %v2577
    %v2651 = vunpack.c.h.b16 %v2577
    %v2652 = vunpack.c.l.b16 %v2578
    %v2653 = vunpack.c.h.b16 %v2578
    %v2654 = vunpack.c.l.b16 %v2579
    %v2655 = vunpack.c.h.b16 %v2579
    %v2656 = vunpack.c.l.b16 %v2580
    %v2657 = vunpack.c.h.b16 %v2580
    %v2658 = vunpack.c.l.b16 %v2581
    %v2659 = vunpack.c.h.b16 %v2581
    %v2660 = vunpack.c.l.b16 %v2582
    %v2661 = vunpack.c.h.b16 %v2582
    %v2662 = vunpack.c.l.b16 %v2583
    %v2663 = vunpack.c.h.b16 %v2583
    %v2664 = vunpack.c.l.b16 %v2584
    %v2665 = vunpack.c.h.b16 %v2584
    %v2666 = vunpack.c.l.b16 %v2585
    %v2667 = vunpack.c.h.b16 %v2585
    %v2668 = vunpack.c.l.b16 %v2586
    %v2669 = vunpack.c.h.b16 %v2586
    %v2670 = vunpack.c.l.b16 %v2587
    %v2671 = vunpack.c.h.b16 %v2587
    %v2672 = vunpack.c.l.b16 %v2588
    %v2673 = vunpack.c.h.b16 %v2588
    %v2674 = vunpack.c.l.b16 %v2589
    %v2675 = vunpack.c.h.b16 %v2589
    %v2676 = vunpack.c.l.b16 %v2590
    %v2677 = vunpack.c.h.b16 %v2590
    %v2678 = vunpack.c.l.b16 %v2591
    %v2679 = vunpack.c.h.b16 %v2591
    %v2680 = vunpack.c.l.b16 %v2592
    %v2681 = vunpack.c.h.b16 %v2592
    %v2682 = vunpack.c.l.b16 %v2593
    %v2683 = vunpack.c.h.b16 %v2593
    %v2684 = vunpack.c.l.b16 %v2594
    %v2685 = vunpack.c.h.b16 %v2594
    %v2686 = vunpack.c.l.b16 %v2595
    %v2687 = vunpack.c.h.b16 %v2595
    %v2688 = vunpack.c.l.b16 %v2596
    %v2689 = vunpack.c.h.b16 %v2596
    %v2690 = vunpack.c.l.b16 %v2597
    %v2691 = vunpack.c.h.b16 %v2597
    %v2692 = vunpack.c.l.b16 %v2598
    %v2693 = vunpack.c.h.b16 %v2598
    %v2694 = vunpack.c.l.b16 %v2599
    %v2695 = vunpack.c.h.b16 %v2599
    %v2696 = vpack.c.b16 %v2636, %v2632
    %v2697 = vpack.c.b16 %v2637, %v2633
    %v2698 = vpack.c.b16 %v2638, %v2634
    %v2699 = vpack.c.b16 %v2639, %v2635
    %v2700 = vpack.c.b16 %v2644, %v2640
    %v2701 = vpack.c.b16 %v2645, %v2641
    %v2702 = vpack.c.b16 %v2646, %v2642
    %v2703 = vpack.c.b16 %v2647, %v2643
    %v2704 = vpack.c.b16 %v2652, %v2648
    %v2705 = vpack.c.b16 %v2653, %v2649
    %v2706 = vpack.c.b16 %v2654, %v2650
    %v2707 = vpack.c.b16 %v2655, %v2651
    %v2708 = vpack.c.b16 %v2660, %v2656
    %v2709 = vpack.c.b16 %v2661, %v2657
    %v2710 = vpack.c.b16 %v2662, %v2658
    %v2711 = vpack.c.b16 %v2663, %v2659
    %v2712 = vpack.c.b16 %v2668, %v2664
    %v2713 = vpack.c.b16 %v2669, %v2665
    %v2714 = vpack.c.b16 %v2670, %v2666
    %v2715 = vpack.c.b16 %v2671, %v2667
    %v2716 = vpack.c.b16 %v2676, %v2672
    %v2717 = vpack.c.b16 %v2677, %v2673
    %v2718 = vpack.c.b16 %v2678, %v2674
    %v2719 = vpack.c.b16 %v2679, %v2675
    %v2720 = vpack.c.b16 %v2684, %v2680
    %v2721 = vpack.c.b16 %v2685, %v2681
    %v2722 = vpack.c.b16 %v2686, %v2682
    %v2723 = vpack.c.b16 %v2687, %v2683
    %v2724 = vpack.c.b16 %v2692, %v2688
    %v2725 = vpack.c.b16 %v2693, %v2689
    %v2726 = vpack.c.b16 %v2694, %v2690
    %v2727 = vpack.c.b16 %v2695, %v2691
    %2760 = vmatprep.subr.bf16.mxu0 %v2697
    %2761 = vmatpush1.bf16.msra.mxu0 %v2696
    %2762 = vmatprep.subr.bf16.mxu0 %v2701
    %2763 = vmatpush1.bf16.msra.mxu0 %v2700
    %2764 = vmatprep.subr.bf16.mxu0 %v2705
    %2765 = vmatpush1.bf16.msra.mxu0 %v2704
    %2766 = vmatprep.subr.bf16.mxu0 %v2709
    %2767 = vmatpush1.bf16.msra.mxu0 %v2708
    %2768 = vmatprep.subr.bf16.mxu0 %v2713
    %2769 = vmatpush1.bf16.msra.mxu0 %v2712
    %2770 = vmatprep.subr.bf16.mxu0 %v2717
    %2771 = vmatpush1.bf16.msra.mxu0 %v2716
    %2772 = vmatprep.subr.bf16.mxu0 %v2721
    %2773 = vmatpush1.bf16.msra.mxu0 %v2720
    %2774 = vmatprep.subr.bf16.mxu0 %v2725
    %2775 = vmatpush1.bf16.msra.mxu0 %v2724
    %2776 = vmatprep.subr.bf16.mxu0 0
    %2777 = vmatpush1.bf16.msra.mxu0 0
    %2778 = vmatprep.subr.bf16.mxu0 0
    %2779 = vmatpush1.bf16.msra.mxu0 0
    %2780 = vmatprep.subr.bf16.mxu0 0
    %2781 = vmatpush1.bf16.msra.mxu0 0
    %2782 = vmatprep.subr.bf16.mxu0 0
    %2783 = vmatpush1.bf16.msra.mxu0 0
    %2784 = vmatprep.subr.bf16.mxu0 0
    %2785 = vmatpush1.bf16.msra.mxu0 0
    %2786 = vmatprep.subr.bf16.mxu0 0
    %2787 = vmatpush1.bf16.msra.mxu0 0
    %2788 = vmatprep.subr.bf16.mxu0 0
    %2789 = vmatpush1.bf16.msra.mxu0 0
    %2790 = vmatprep.subr.bf16.mxu0 0
    %2791 = vmatpush1.bf16.msra.mxu0 0
    %2792 = vmatprep.mubr.bf16.mxu0 0
    %2793 = vmatmul.mubr.bf16.gmra.mrb[0].mxu0 %v2567
    %v2794 = vpop.f32.mrb[0].mxu0
    %v2795 = vadd.f32 0.0, %v2794
    %v2796 = vpop.f32.mrb[0].mxu0
    %v2797 = vadd.f32 0.0, %v2796
    %v2798 = vpop.f32.mrb[0].mxu0
    %v2799 = vpop.f32.mrb[0].mxu0
    %2800 = vdwg.mxu0
    %2801 = vmatprep.subr.bf16.mxu0 %v2699
    %2802 = vmatpush1.bf16.msra.mxu0 %v2698
    %2803 = vmatprep.subr.bf16.mxu0 %v2703
    %2804 = vmatpush1.bf16.msra.mxu0 %v2702
    %2805 = vmatprep.subr.bf16.mxu0 %v2707
    %2806 = vmatpush1.bf16.msra.mxu0 %v2706
    %2807 = vmatprep.subr.bf16.mxu0 %v2711
    %2808 = vmatpush1.bf16.msra.mxu0 %v2710
    %2809 = vmatprep.subr.bf16.mxu0 %v2715
    %2810 = vmatpush1.bf16.msra.mxu0 %v2714
    %2811 = vmatprep.subr.bf16.mxu0 %v2719
    %2812 = vmatpush1.bf16.msra.mxu0 %v2718
    %2813 = vmatprep.subr.bf16.mxu0 %v2723
    %2814 = vmatpush1.bf16.msra.mxu0 %v2722
    %2815 = vmatprep.subr.bf16.mxu0 %v2727
    %2816 = vmatpush1.bf16.msra.mxu0 %v2726
    %2817 = vmatprep.subr.bf16.mxu0 0
    %2818 = vmatpush1.bf16.msra.mxu0 0
    %2819 = vmatprep.subr.bf16.mxu0 0
    %2820 = vmatpush1.bf16.msra.mxu0 0
    %2821 = vmatprep.subr.bf16.mxu0 0
    %2822 = vmatpush1.bf16.msra.mxu0 0
    %2823 = vmatprep.subr.bf16.mxu0 0
    %2824 = vmatpush1.bf16.msra.mxu0 0
    %2825 = vmatprep.subr.bf16.mxu0 0
    %2826 = vmatpush1.bf16.msra.mxu0 0
    %2827 = vmatprep.subr.bf16.mxu0 0
    %2828 = vmatpush1.bf16.msra.mxu0 0
    %2829 = vmatprep.subr.bf16.mxu0 0
    %2830 = vmatpush1.bf16.msra.mxu0 0
    %2831 = vmatprep.subr.bf16.mxu0 0
    %2832 = vmatpush1.bf16.msra.mxu0 0
    %2833 = vmatprep.mubr.bf16.mxu0 0
    %2834 = vmatmul.mubr.bf16.gmra.mrb[0].mxu0 %v2567
    %v2835 = vpop.f32.mrb[0].mxu0
    %v2836 = vadd.f32 0.0, %v2835
    %v2837 = vpop.f32.mrb[0].mxu0
    %v2838 = vadd.f32 0.0, %v2837
    %v2839 = vpop.f32.mrb[0].mxu0
    %v2840 = vpop.f32.mrb[0].mxu0
    %2841 = vdwg.mxu0
    %v2842 = vadd.f32 %v2562, %v2795
    %v2843 = vadd.f32 %v2563, %v2797
    %v2844 = vadd.f32 %v2564, %v2836
    %v2845 = vadd.f32 %v2565, %v2838
    %v2846 = vxor.u32 %v2842, 2147483648
    %v2847 = vmul.f32 %v2846, 1.442695
    %v2848 = vpow.pop %v2847
    %v2849 = vadd.f32 %v2848, 1.0
    %v2850 = vrcp.pop %v2849
    %v2851 = vmul.f32 1.0, %v2850
    %v2852 = vxor.u32 %v2843, 2147483648
    %v2853 = vmul.f32 %v2852, 1.442695
    %v2854 = vpow.pop %v2853
    %v2855 = vadd.f32 %v2854, 1.0
    %v2856 = vrcp.pop %v2855
    %v2857 = vmul.f32 1.0, %v2856
    %v2858 = vtanh.pop %v2844
    %v2859 = vxor.u32 %v2845, 2147483648
    %v2860 = vmul.f32 %v2859, 1.442695
    %v2861 = vpow.pop %v2860
    %v2862 = vadd.f32 %v2861, 1.0
    %v2863 = vrcp.pop %v2862
    %v2864 = vmul.f32 1.0, %v2863
    %v2865 = vld [vmem:[#allocation4] sm:$0xff]
    %v2866 = vmul.f32 %v2857, %v2865
    %v2867 = vmul.f32 %v2851, %v2858
    %v2868 = vadd.f32 %v2866, %v2867
    %v2869 = vtanh.pop %v2868
    %v2870 = vmul.f32 %v2864, %v2869
    %2871 = vst [vmem:[#allocation3] sm:$0xff] %v2870
    %2872 = vst [vmem:[#allocation4] sm:$0xff] %v2868
    %v2873 = vpack.c.bf16 %v2870, %v2870
    %s2874 = scalar_lea.vmem [#allocation10], 28
    %2875 = vst [vmem:[%s2874] sm:$0xf] %v2873
    %v2876 = vld [vmem:[#allocation2 + $0x100] sm:$0xff]
    %v2877 = vld [vmem:[#allocation2 + $0x108] sm:$0xff]
    %v2878 = vld [vmem:[#allocation2 + $0x110] sm:$0xff]
    %v2879 = vld [vmem:[#allocation2 + $0x118] sm:$0xff]
    %v2880 = vld [vmem:[#allocation3] sm:$0xff]
    %v2881 = vpack.c.bf16 %v2880, %v2880
    %v2882 = vld [vmem:[#allocation8] sm:$0xff]
    %v2883 = vld [vmem:[#allocation8 + $0x8] sm:$0xff]
    %v2884 = vld [vmem:[#allocation8 + $0x10] sm:$0xff]
    %v2885 = vld [vmem:[#allocation8 + $0x18] sm:$0xff]
    %v2886 = vld [vmem:[#allocation8 + $0x20] sm:$0xff]
    %v2887 = vld [vmem:[#allocation8 + $0x28] sm:$0xff]
    %v2888 = vld [vmem:[#allocation8 + $0x30] sm:$0xff]
    %v2889 = vld [vmem:[#allocation8 + $0x38] sm:$0xff]
    %v2890 = vld [vmem:[#allocation8 + $0x40] sm:$0xff]
    %v2891 = vld [vmem:[#allocation8 + $0x48] sm:$0xff]
    %v2892 = vld [vmem:[#allocation8 + $0x50] sm:$0xff]
    %v2893 = vld [vmem:[#allocation8 + $0x58] sm:$0xff]
    %v2894 = vld [vmem:[#allocation8 + $0x60] sm:$0xff]
    %v2895 = vld [vmem:[#allocation8 + $0x68] sm:$0xff]
    %v2896 = vld [vmem:[#allocation8 + $0x70] sm:$0xff]
    %v2897 = vld [vmem:[#allocation8 + $0x78] sm:$0xff]
    %v2898 = vld [vmem:[#allocation8 + $0x80] sm:$0xff]
    %v2899 = vld [vmem:[#allocation8 + $0x88] sm:$0xff]
    %v2900 = vld [vmem:[#allocation8 + $0x90] sm:$0xff]
    %v2901 = vld [vmem:[#allocation8 + $0x98] sm:$0xff]
    %v2902 = vld [vmem:[#allocation8 + $0xa0] sm:$0xff]
    %v2903 = vld [vmem:[#allocation8 + $0xa8] sm:$0xff]
    %v2904 = vld [vmem:[#allocation8 + $0xb0] sm:$0xff]
    %v2905 = vld [vmem:[#allocation8 + $0xb8] sm:$0xff]
    %v2906 = vld [vmem:[#allocation8 + $0xc0] sm:$0xff]
    %v2907 = vld [vmem:[#allocation8 + $0xc8] sm:$0xff]
    %v2908 = vld [vmem:[#allocation8 + $0xd0] sm:$0xff]
    %v2909 = vld [vmem:[#allocation8 + $0xd8] sm:$0xff]
    %v2910 = vld [vmem:[#allocation8 + $0xe0] sm:$0xff]
    %v2911 = vld [vmem:[#allocation8 + $0xe8] sm:$0xff]
    %v2912 = vld [vmem:[#allocation8 + $0xf0] sm:$0xff]
    %v2913 = vld [vmem:[#allocation8 + $0xf8] sm:$0xff]
    %v2946 = vunpack.c.l.b16 %v2882
    %v2947 = vunpack.c.h.b16 %v2882
    %v2948 = vunpack.c.l.b16 %v2883
    %v2949 = vunpack.c.h.b16 %v2883
    %v2950 = vunpack.c.l.b16 %v2884
    %v2951 = vunpack.c.h.b16 %v2884
    %v2952 = vunpack.c.l.b16 %v2885
    %v2953 = vunpack.c.h.b16 %v2885
    %v2954 = vunpack.c.l.b16 %v2886
    %v2955 = vunpack.c.h.b16 %v2886
    %v2956 = vunpack.c.l.b16 %v2887
    %v2957 = vunpack.c.h.b16 %v2887
    %v2958 = vunpack.c.l.b16 %v2888
    %v2959 = vunpack.c.h.b16 %v2888
    %v2960 = vunpack.c.l.b16 %v2889
    %v2961 = vunpack.c.h.b16 %v2889
    %v2962 = vunpack.c.l.b16 %v2890
    %v2963 = vunpack.c.h.b16 %v2890
    %v2964 = vunpack.c.l.b16 %v2891
    %v2965 = vunpack.c.h.b16 %v2891
    %v2966 = vunpack.c.l.b16 %v2892
    %v2967 = vunpack.c.h.b16 %v2892
    %v2968 = vunpack.c.l.b16 %v2893
    %v2969 = vunpack.c.h.b16 %v2893
    %v2970 = vunpack.c.l.b16 %v2894
    %v2971 = vunpack.c.h.b16 %v2894
    %v2972 = vunpack.c.l.b16 %v2895
    %v2973 = vunpack.c.h.b16 %v2895
    %v2974 = vunpack.c.l.b16 %v2896
    %v2975 = vunpack.c.h.b16 %v2896
    %v2976 = vunpack.c.l.b16 %v2897
    %v2977 = vunpack.c.h.b16 %v2897
    %v2978 = vunpack.c.l.b16 %v2898
    %v2979 = vunpack.c.h.b16 %v2898
    %v2980 = vunpack.c.l.b16 %v2899
    %v2981 = vunpack.c.h.b16 %v2899
    %v2982 = vunpack.c.l.b16 %v2900
    %v2983 = vunpack.c.h.b16 %v2900
    %v2984 = vunpack.c.l.b16 %v2901
    %v2985 = vunpack.c.h.b16 %v2901
    %v2986 = vunpack.c.l.b16 %v2902
    %v2987 = vunpack.c.h.b16 %v2902
    %v2988 = vunpack.c.l.b16 %v2903
    %v2989 = vunpack.c.h.b16 %v2903
    %v2990 = vunpack.c.l.b16 %v2904
    %v2991 = vunpack.c.h.b16 %v2904
    %v2992 = vunpack.c.l.b16 %v2905
    %v2993 = vunpack.c.h.b16 %v2905
    %v2994 = vunpack.c.l.b16 %v2906
    %v2995 = vunpack.c.h.b16 %v2906
    %v2996 = vunpack.c.l.b16 %v2907
    %v2997 = vunpack.c.h.b16 %v2907
    %v2998 = vunpack.c.l.b16 %v2908
    %v2999 = vunpack.c.h.b16 %v2908
    %v3000 = vunpack.c.l.b16 %v2909
    %v3001 = vunpack.c.h.b16 %v2909
    %v3002 = vunpack.c.l.b16 %v2910
    %v3003 = vunpack.c.h.b16 %v2910
    %v3004 = vunpack.c.l.b16 %v2911
    %v3005 = vunpack.c.h.b16 %v2911
    %v3006 = vunpack.c.l.b16 %v2912
    %v3007 = vunpack.c.h.b16 %v2912
    %v3008 = vunpack.c.l.b16 %v2913
    %v3009 = vunpack.c.h.b16 %v2913
    %v3010 = vpack.c.b16 %v2950, %v2946
    %v3011 = vpack.c.b16 %v2951, %v2947
    %v3012 = vpack.c.b16 %v2952, %v2948
    %v3013 = vpack.c.b16 %v2953, %v2949
    %v3014 = vpack.c.b16 %v2958, %v2954
    %v3015 = vpack.c.b16 %v2959, %v2955
    %v3016 = vpack.c.b16 %v2960, %v2956
    %v3017 = vpack.c.b16 %v2961, %v2957
    %v3018 = vpack.c.b16 %v2966, %v2962
    %v3019 = vpack.c.b16 %v2967, %v2963
    %v3020 = vpack.c.b16 %v2968, %v2964
    %v3021 = vpack.c.b16 %v2969, %v2965
    %v3022 = vpack.c.b16 %v2974, %v2970
    %v3023 = vpack.c.b16 %v2975, %v2971
    %v3024 = vpack.c.b16 %v2976, %v2972
    %v3025 = vpack.c.b16 %v2977, %v2973
    %v3026 = vpack.c.b16 %v2982, %v2978
    %v3027 = vpack.c.b16 %v2983, %v2979
    %v3028 = vpack.c.b16 %v2984, %v2980
    %v3029 = vpack.c.b16 %v2985, %v2981
    %v3030 = vpack.c.b16 %v2990, %v2986
    %v3031 = vpack.c.b16 %v2991, %v2987
    %v3032 = vpack.c.b16 %v2992, %v2988
    %v3033 = vpack.c.b16 %v2993, %v2989
    %v3034 = vpack.c.b16 %v2998, %v2994
    %v3035 = vpack.c.b16 %v2999, %v2995
    %v3036 = vpack.c.b16 %v3000, %v2996
    %v3037 = vpack.c.b16 %v3001, %v2997
    %v3038 = vpack.c.b16 %v3006, %v3002
    %v3039 = vpack.c.b16 %v3007, %v3003
    %v3040 = vpack.c.b16 %v3008, %v3004
    %v3041 = vpack.c.b16 %v3009, %v3005
    %3074 = vmatprep.subr.bf16.mxu0 %v3011
    %3075 = vmatpush1.bf16.msra.mxu0 %v3010
    %3076 = vmatprep.subr.bf16.mxu0 %v3015
    %3077 = vmatpush1.bf16.msra.mxu0 %v3014
    %3078 = vmatprep.subr.bf16.mxu0 %v3019
    %3079 = vmatpush1.bf16.msra.mxu0 %v3018
    %3080 = vmatprep.subr.bf16.mxu0 %v3023
    %3081 = vmatpush1.bf16.msra.mxu0 %v3022
    %3082 = vmatprep.subr.bf16.mxu0 %v3027
    %3083 = vmatpush1.bf16.msra.mxu0 %v3026
    %3084 = vmatprep.subr.bf16.mxu0 %v3031
    %3085 = vmatpush1.bf16.msra.mxu0 %v3030
    %3086 = vmatprep.subr.bf16.mxu0 %v3035
    %3087 = vmatpush1.bf16.msra.mxu0 %v3034
    %3088 = vmatprep.subr.bf16.mxu0 %v3039
    %3089 = vmatpush1.bf16.msra.mxu0 %v3038
    %3090 = vmatprep.subr.bf16.mxu0 0
    %3091 = vmatpush1.bf16.msra.mxu0 0
    %3092 = vmatprep.subr.bf16.mxu0 0
    %3093 = vmatpush1.bf16.msra.mxu0 0
    %3094 = vmatprep.subr.bf16.mxu0 0
    %3095 = vmatpush1.bf16.msra.mxu0 0
    %3096 = vmatprep.subr.bf16.mxu0 0
    %3097 = vmatpush1.bf16.msra.mxu0 0
    %3098 = vmatprep.subr.bf16.mxu0 0
    %3099 = vmatpush1.bf16.msra.mxu0 0
    %3100 = vmatprep.subr.bf16.mxu0 0
    %3101 = vmatpush1.bf16.msra.mxu0 0
    %3102 = vmatprep.subr.bf16.mxu0 0
    %3103 = vmatpush1.bf16.msra.mxu0 0
    %3104 = vmatprep.subr.bf16.mxu0 0
    %3105 = vmatpush1.bf16.msra.mxu0 0
    %3106 = vmatprep.mubr.bf16.mxu0 0
    %3107 = vmatmul.mubr.bf16.gmra.mrb[0].mxu0 %v2881
    %v3108 = vpop.f32.mrb[0].mxu0
    %v3109 = vadd.f32 0.0, %v3108
    %v3110 = vpop.f32.mrb[0].mxu0
    %v3111 = vadd.f32 0.0, %v3110
    %v3112 = vpop.f32.mrb[0].mxu0
    %v3113 = vpop.f32.mrb[0].mxu0
    %3114 = vdwg.mxu0
    %3115 = vmatprep.subr.bf16.mxu0 %v3013
    %3116 = vmatpush1.bf16.msra.mxu0 %v3012
    %3117 = vmatprep.subr.bf16.mxu0 %v3017
    %3118 = vmatpush1.bf16.msra.mxu0 %v3016
    %3119 = vmatprep.subr.bf16.mxu0 %v3021
    %3120 = vmatpush1.bf16.msra.mxu0 %v3020
    %3121 = vmatprep.subr.bf16.mxu0 %v3025
    %3122 = vmatpush1.bf16.msra.mxu0 %v3024
    %3123 = vmatprep.subr.bf16.mxu0 %v3029
    %3124 = vmatpush1.bf16.msra.mxu0 %v3028
    %3125 = vmatprep.subr.bf16.mxu0 %v3033
    %3126 = vmatpush1.bf16.msra.mxu0 %v3032
    %3127 = vmatprep.subr.bf16.mxu0 %v3037
    %3128 = vmatpush1.bf16.msra.mxu0 %v3036
    %3129 = vmatprep.subr.bf16.mxu0 %v3041
    %3130 = vmatpush1.bf16.msra.mxu0 %v3040
    %3131 = vmatprep.subr.bf16.mxu0 0
    %3132 = vmatpush1.bf16.msra.mxu0 0
    %3133 = vmatprep.subr.bf16.mxu0 0
    %3134 = vmatpush1.bf16.msra.mxu0 0
    %3135 = vmatprep.subr.bf16.mxu0 0
    %3136 = vmatpush1.bf16.msra.mxu0 0
    %3137 = vmatprep.subr.bf16.mxu0 0
    %3138 = vmatpush1.bf16.msra.mxu0 0
    %3139 = vmatprep.subr.bf16.mxu0 0
    %3140 = vmatpush1.bf16.msra.mxu0 0
    %3141 = vmatprep.subr.bf16.mxu0 0
    %3142 = vmatpush1.bf16.msra.mxu0 0
    %3143 = vmatprep.subr.bf16.mxu0 0
    %3144 = vmatpush1.bf16.msra.mxu0 0
    %3145 = vmatprep.subr.bf16.mxu0 0
    %3146 = vmatpush1.bf16.msra.mxu0 0
    %3147 = vmatprep.mubr.bf16.mxu0 0
    %3148 = vmatmul.mubr.bf16.gmra.mrb[0].mxu0 %v2881
    %v3149 = vpop.f32.mrb[0].mxu0
    %v3150 = vadd.f32 0.0, %v3149
    %v3151 = vpop.f32.mrb[0].mxu0
    %v3152 = vadd.f32 0.0, %v3151
    %v3153 = vpop.f32.mrb[0].mxu0
    %v3154 = vpop.f32.mrb[0].mxu0
    %3155 = vdwg.mxu0
    %v3156 = vadd.f32 %v2876, %v3109
    %v3157 = vadd.f32 %v2877, %v3111
    %v3158 = vadd.f32 %v2878, %v3150
    %v3159 = vadd.f32 %v2879, %v3152
    %v3160 = vxor.u32 %v3156, 2147483648
    %v3161 = vmul.f32 %v3160, 1.442695
    %v3162 = vpow.pop %v3161
    %v3163 = vadd.f32 %v3162, 1.0
    %v3164 = vrcp.pop %v3163
    %v3165 = vmul.f32 1.0, %v3164
    %v3166 = vxor.u32 %v3157, 2147483648
    %v3167 = vmul.f32 %v3166, 1.442695
    %v3168 = vpow.pop %v3167
    %v3169 = vadd.f32 %v3168, 1.0
    %v3170 = vrcp.pop %v3169
    %v3171 = vmul.f32 1.0, %v3170
    %v3172 = vtanh.pop %v3158
    %v3173 = vxor.u32 %v3159, 2147483648
    %v3174 = vmul.f32 %v3173, 1.442695
    %v3175 = vpow.pop %v3174
    %v3176 = vadd.f32 %v3175, 1.0
    %v3177 = vrcp.pop %v3176
    %v3178 = vmul.f32 1.0, %v3177
    %v3179 = vld [vmem:[#allocation4] sm:$0xff]
    %v3180 = vmul.f32 %v3171, %v3179
    %v3181 = vmul.f32 %v3165, %v3172
    %v3182 = vadd.f32 %v3180, %v3181
    %v3183 = vtanh.pop %v3182
    %v3184 = vmul.f32 %v3178, %v3183
    %3185 = vst [vmem:[#allocation3] sm:$0xff] %v3184
    %3186 = vst [vmem:[#allocation4] sm:$0xff] %v3182
    %v3187 = vpack.c.bf16 %v3184, %v3184
    %s3188 = scalar_lea.vmem [#allocation10], 32
    %3189 = vst [vmem:[%s3188] sm:$0xf] %v3187
    // Predicated region
    $region26: #{tpu_custom_call.1} parent=1 // pred_check
      _
    $region27: #{tpu_custom_call.1} parent=1 // pred_check_branch
      %3191 = sbr.rel (0) target = $region29
    $region28: #{tpu_custom_call.1} parent=1 // pred_region
      %s3193 = ssub.s32 576, 576
      %3194 = vsyncadd [#allocation7], %s3193
      %s3195 = sshll.u32 [#allocation10], 4
      %s3196 = int_to_ptr.vmem [resolvable:$true] %s3195
      %3201 = dma.vmem_to_hbm [thread:$0]  %s3196, 576, %s4, [#allocation7], 64, 64, 4
    $region29: #{tpu_custom_call.1} parent=1 // pred_fallthru
      _
    // Predicated region
    $region30: #{tpu_custom_call.1} parent=1 // pred_check
      _
    $region31: #{tpu_custom_call.1} parent=1 // pred_check_branch
      %3203 = sbr.rel (0) target = $region33
    $region32: #{tpu_custom_call.1} parent=1 // pred_region
      %3204 = dma.done [#allocation7], 576
    $region33: #{tpu_custom_call.1} parent=1 // pred_fallthru
      _
    %3205 = vsyncpa [#allocation6], 1
    %3206 = vsyncpa [#allocation9], 1
    %3207 = vsyncpa [#allocation7], 1

</llo_original>
